<compile_context>
chip_gen: v6e
topology: v6e:2x2x1
jax: 0.10.0
libtpu: 0.0.40
codegen_flags: <defaults>
</compile_context>

<pallas_src>
import math

import jax
import jax.numpy as jnp
import numpy as np
from jax.experimental import pallas as pl
from jax.experimental.pallas import tpu as pltpu

HIDDEN = 32
NUM_HEADS = 4
HEAD_DIM = HIDDEN // NUM_HEADS             # 8
NUM_PAIRS = NUM_HEADS * NUM_HEADS          # 16 (query-head, key-head) pairs
PAIR_W = NUM_PAIRS * HEAD_DIM              # 128: per-token head-pair expansion width
TOK_PER_ROW = 4                            # tokens packed per 128-lane row
PACK_H = TOK_PER_ROW * HIDDEN              # 128
PACK_PAIR = TOK_PER_ROW * PAIR_W           # 512
FUSED_W = 3 * PACK_PAIR + 2 * PACK_H       # 1792: [Qexp | Kexp*scale | Vexp | h1p | h1o]
MAX_BLOCK_ROWS = 256                       # <= 1024 tokens per grid step
SEQ = 512
LN_EPS = 1e-5                              # nn.LayerNorm default
LEAKY_SLOPE = 0.01                         # nn.LeakyReLU default
ATTN_SCALE = 1.0 / math.sqrt(HEAD_DIM)


# ------------------------ constant expand/reduce matrices -------------------
def _attention_constants():
    """0/1 matrices mapping head-major (32) layouts <-> head-pair (128) layouts."""
    eq = np.zeros((HIDDEN, PAIR_W), np.float32)        # q head i -> pair block (i,j) for all j
    ek = np.zeros((HIDDEN, PAIR_W), np.float32)        # x head j -> pair block (i,j) for all i
    sred = np.zeros((PAIR_W, NUM_PAIRS), np.float32)   # sum over d within each pair block
    gb = np.zeros((NUM_PAIRS, HIDDEN), np.float32)     # sum over j -> broadcast on head-i lanes
    ab = np.zeros((NUM_PAIRS, PAIR_W), np.float32)     # weight (i,j) -> broadcast on its block
    rfold = np.zeros((PAIR_W, HIDDEN), np.float32)     # sum over j -> back into head-i lanes
    for i in range(NUM_HEADS):
        for j in range(NUM_HEADS):
            p = i * NUM_HEADS + j
            for d in range(HEAD_DIM):
                eq[i * HEAD_DIM + d, p * HEAD_DIM + d] = 1.0
                ek[j * HEAD_DIM + d, p * HEAD_DIM + d] = 1.0
                sred[p * HEAD_DIM + d, p] = 1.0
                ab[p, p * HEAD_DIM + d] = 1.0
                rfold[p * HEAD_DIM + d, i * HEAD_DIM + d] = 1.0
                gb[p, i * HEAD_DIM + d] = 1.0
    return eq, ek, sred, gb, ab, rfold


# ------------------------------ packing helpers -----------------------------
def _kron4(w):
    """Per-token weight -> 4-token block-diagonal weight."""
    return np.kron(np.eye(TOK_PER_ROW, dtype=np.float32),
                   np.asarray(w, np.float32)).astype(np.float32)


def _tile4(b):
    """Per-token row bias -> 4-token packed bias."""
    return np.tile(np.asarray(b, np.float32).reshape(1, -1), (1, TOK_PER_ROW))


def _concat_cols(parts):
    """Concatenate named arrays along columns; return array + {name: (lo, hi)}."""
    offs, arrs, cur = {}, [], 0
    for name, a in parts:
        a = np.asarray(a, np.float32)
        offs[name] = (cur, cur + a.shape[1])
        cur += a.shape[1]
        arrs.append(a)
    return np.concatenate(arrs, axis=1).astype(np.float32), offs


def _pack_weights(params):
    """Fold / expand all module weights into 3 weight slabs + 1 bias slab (128-aligned cols)."""
    p = {k: np.asarray(v, np.float32) for k, v in params.items()}
    eq, ek, sred, gb, ab, rfold = _attention_constants()

    # Fused first projection of the concatenated [emb_packed(128) | obs_packed(128)] input.
    wq_e = p["wq"] @ eq
    wk_e = (p["wk"] * ATTN_SCALE) @ ek
    wv_e = p["wv"] @ ek
    top = np.concatenate([_kron4(wq_e), _kron4(wk_e), _kron4(wv_e),
                          _kron4(p["w1p"]), np.zeros((PACK_H, PACK_H), np.float32)], axis=1)
    bot = np.concatenate([np.zeros((PACK_H, FUSED_W - PACK_H), np.float32),
                          _kron4(p["w1o"])], axis=1)
    w_fused = np.concatenate([top, bot], axis=0)                        # (256, 1792)
    b_fused = np.concatenate([_tile4(p["bq"] @ eq), _tile4((p["bk"] * ATTN_SCALE) @ ek),
                              _tile4(p["bv"] @ ek), _tile4(p["b1p"]), _tile4(p["b1o"])],
                             axis=1)                                    # (1, 1792)

    # Residual branch folded: [relu(h1p)|relu(h1o)] @ w_r1 -> relu -> @ (w2r@ek).
    w_r1 = np.concatenate([_kron4(p["w2p"] @ p["w1r"]),
                           _kron4(-(p["w2o"] @ p["w1r"]))], axis=0)     # (256, 128)
    b_r1 = _tile4((p["b2p"] - p["b2o"]) @ p["w1r"] + p["b1r"])
    w_r2ek = _kron4(p["w2r"] @ ek)                                      # (128, 512)
    b_r2ek = _tile4(p["b2r"] @ ek)

    # Attention reducers/broadcasters, padded so the score row is 128 lanes wide.
    pad = PACK_H - TOK_PER_ROW * NUM_PAIRS                              # 64 padded score lanes
    sred_p = np.concatenate([_kron4(sred), np.zeros((PACK_PAIR, pad), np.float32)], axis=1)
    gb_p = np.concatenate([_kron4(gb), np.zeros((pad, PACK_H), np.float32)], axis=0)
    ab_p = np.concatenate([_kron4(ab), np.zeros((pad, PACK_PAIR), np.float32)], axis=0)
    rfold_p = _kron4(rfold)                                             # (512, 128)
    sbias = np.concatenate([np.zeros((1, TOK_PER_ROW * NUM_PAIRS), np.float32),
                            np.full((1, pad), -1e9, np.float32)], axis=1)

    # Per-token LayerNorm mean matrix (mean broadcast within each 32-lane token group).
    lnm = _kron4(np.full((HIDDEN, HIDDEN), 1.0 / HIDDEN, np.float32))   # (128, 128)

    w256, o256 = _concat_cols([("fused", w_fused), ("r1", w_r1)])
    w128, o128 = _concat_cols([("r2ek", w_r2ek), ("wo", _kron4(p["wo"])),
                               ("wf1", _kron4(p["wf1"])), ("lnm", lnm),
                               ("gb", gb_p), ("ab", ab_p)])
    w512, o512 = _concat_cols([("sred", sred_p), ("rfold", rfold_p),
                               ("wf2", _kron4(p["wf2"]))])
    bias, ob = _concat_cols([("fused", b_fused), ("r1", b_r1), ("r2ek", b_r2ek),
                             ("sbias", sbias), ("bo", _tile4(p["bo"])),
                             ("bf1", _tile4(p["bf1"])), ("bf2", _tile4(p["bf2"])),
                             ("g1", _tile4(p["g1"])), ("be1", _tile4(p["be1"])),
                             ("g2", _tile4(p["g2"])), ("be2", _tile4(p["be2"]))])
    return (w256, o256), (w128, o128), (w512, o512), (bias, ob)


# --------------------------------- kernel ----------------------------------
def _make_kernel(o256, o128, o512, ob):
    def w(ref, offs, name):
        lo, hi = offs[name]
        return ref[:, lo:hi]              # static 128-aligned slice -> clean tile load

    def kernel(x_ref, w256_ref, w128_ref, w512_ref, b_ref, out_ref):
        f32 = jnp.float32
        x = x_ref[...]                                         # (br, 256) = [emb_p | obs_p]
        emb = x[:, :PACK_H]

        # ---- fused first-stage projection of [emb | obs] ----
        fused = jnp.dot(x, w(w256_ref, o256, "fused"),
                        preferred_element_type=f32) + w(b_ref, ob, "fused")
        q_exp = fused[:, 0:PACK_PAIR]                          # Q head i in pair block (i,j)
        ks_exp = fused[:, PACK_PAIR:2 * PACK_PAIR]             # K head j, pre-scaled 1/sqrt(hd)
        v_exp = fused[:, 2 * PACK_PAIR:3 * PACK_PAIR]          # V head j
        h_po = jnp.maximum(fused[:, 3 * PACK_PAIR:FUSED_W], 0.0)   # [relu(h1p) | relu(h1o)]

        # ---- folded compute_residual -> residual expanded onto key-head lanes ----
        hr = jnp.maximum(jnp.dot(h_po, w(w256_ref, o256, "r1"),
                                 preferred_element_type=f32) + w(b_ref, ob, "r1"), 0.0)
        r_ek = jnp.dot(hr, w(w128_ref, o128, "r2ek"),
                       preferred_element_type=f32) + w(b_ref, ob, "r2ek")

        # ---- per-token attention over heads, fully lane-dense ----
        scores = jnp.dot(q_exp * (ks_exp - r_ek), w(w512_ref, o512, "sred"),
                         preferred_element_type=f32) + w(b_ref, ob, "sbias")
        es = jnp.exp(scores - jnp.max(scores, axis=-1, keepdims=True))   # exact softmax shift
        denom = jnp.dot(es, w(w128_ref, o128, "gb"), preferred_element_type=f32)
        a_exp = jnp.dot(es, w(w128_ref, o128, "ab"), preferred_element_type=f32)
        out_un = jnp.dot(a_exp * v_exp, w(w512_ref, o512, "rfold"),
                         preferred_element_type=f32)
        attn_out = out_un * pl.reciprocal(denom, approx=True)
        # TODO(synk): nn.Dropout on attention weights / residual branches is identity (eval mode).
        attended = jnp.dot(attn_out, w(w128_ref, o128, "wo"),
                           preferred_element_type=f32) + w(b_ref, ob, "bo")

        lnm = w(w128_ref, o128, "lnm")

        def layernorm(v, g_name, b_name):
            mu = jnp.dot(v, lnm, preferred_element_type=f32)             # per-token mean bcast
            c = v - mu
            var = jnp.dot(c * c, lnm, preferred_element_type=f32)        # per-token var bcast
            return c * jax.lax.rsqrt(var + LN_EPS) * w(b_ref, ob, g_name) + w(b_ref, ob, b_name)

        # ---- residual add + LN1, feed-forward, residual add + LN2 ----
        a1 = layernorm(emb + attended, "g1", "be1")
        h = jnp.dot(a1, w(w128_ref, o128, "wf1"), preferred_element_type=f32) + w(b_ref, ob, "bf1")
        h = jnp.where(h > 0, h, LEAKY_SLOPE * h)
        ff = jnp.dot(h, w(w512_ref, o512, "wf2"), preferred_element_type=f32) + w(b_ref, ob, "bf2")
        out_ref[...] = layernorm(a1 + ff, "g2", "be2").astype(out_ref.dtype)

    return kernel


# ------------------------------ wrapper / glue ------------------------------
def causal_transformer_forward(embeddings, observations, params):
    n, h = embeddings.shape
    assert h == HIDDEN

    (w256, o256), (w128, o128), (w512, o512), (bias, ob) = _pack_weights(params)

    # Pack 4 tokens per 128-lane row; pad N so the packed rows divide evenly into blocks.
    n4 = -(-n // TOK_PER_ROW)
    br = max(8, min(MAX_BLOCK_ROWS, (n4 // 4) // 8 * 8))   # ~>=4 grid steps, <=1024 tok/step
    n4_pad = -(-n4 // br) * br
    n_pad = n4_pad * TOK_PER_ROW

    def pack(a):
        a = jnp.pad(a.astype(jnp.float32), ((0, n_pad - n), (0, 0)))
        return a.reshape(n4_pad, PACK_H)

    x = jnp.concatenate([pack(embeddings), pack(observations)], axis=1)  # (n4_pad, 256)
    grid = (n4_pad // br,)

    def const_spec(shape):
        nd = len(shape)
        # Constant index_map -> weight block fetched once, resident across grid steps.
        return pl.BlockSpec(shape, lambda i, nd=nd: (0,) * nd)

    out_packed = pl.pallas_call(
        _make_kernel(o256, o128, o512, ob),
        out_shape=jax.ShapeDtypeStruct((n4_pad, PACK_H), jnp.float32),
        grid_spec=pltpu.PrefetchScalarGridSpec(
            num_scalar_prefetch=0,
            grid=grid,
            in_specs=[pl.BlockSpec((br, 2 * PACK_H), lambda i: (i, 0)),
                      const_spec(w256.shape), const_spec(w128.shape),
                      const_spec(w512.shape), const_spec(bias.shape)],
            out_specs=pl.BlockSpec((br, PACK_H), lambda i: (i, 0)),
        ),
        compiler_params=pltpu.CompilerParams(
            dimension_semantics=("parallel",),
            vmem_limit_bytes=32 * 1024 * 1024),
    )(x, jnp.asarray(w256), jnp.asarray(w128), jnp.asarray(w512), jnp.asarray(bias))

    return out_packed.reshape(n_pad, HIDDEN)[:n]


# ------------------------------ param init ----------------------------------
def init_params(key):
    """Deterministic torch-Linear-style init (uniform(-1/sqrt(fan_in), 1/sqrt(fan_in)))."""
    params = {}

    def linear(k, fan_in, fan_out):
        k1, k2 = jax.random.split(k)
        bound = 1.0 / math.sqrt(fan_in)
        w = jax.random.uniform(k1, (fan_in, fan_out), jnp.float32, -bound, bound)
        b = jax.random.uniform(k2, (1, fan_out), jnp.float32, -bound, bound)
        return w, b

    specs = [
        ("w1p", "b1p", HIDDEN, HIDDEN), ("w2p", "b2p", HIDDEN, HIDDEN),
        ("w1o", "b1o", HIDDEN, HIDDEN), ("w2o", "b2o", HIDDEN, HIDDEN),
        ("w1r", "b1r", HIDDEN, HIDDEN), ("w2r", "b2r", HIDDEN, HIDDEN),
        ("wq", "bq", HIDDEN, HIDDEN), ("wk", "bk", HIDDEN, HIDDEN),
        ("wv", "bv", HIDDEN, HIDDEN), ("wo", "bo", HIDDEN, HIDDEN),
        ("wf1", "bf1", HIDDEN, 4 * HIDDEN), ("wf2", "bf2", 4 * HIDDEN, HIDDEN),
    ]
    keys = jax.random.split(key, len(specs))
    for (wn, bn, fi, fo), k in zip(specs, keys):
        w, b = linear(k, fi, fo)
        params[wn] = w
        params[bn] = b
    params["g1"] = jnp.ones((1, HIDDEN), jnp.float32)
    params["be1"] = jnp.zeros((1, HIDDEN), jnp.float32)
    params["g2"] = jnp.ones((1, HIDDEN), jnp.float32)
    params["be2"] = jnp.zeros((1, HIDDEN), jnp.float32)
    return params


# ----------------------------- pure-JAX reference ----------------------------
def reference_forward(emb, obs, p):
    def mlp(x, w1, b1, w2, b2):
        return jnp.maximum(x @ w1 + b1, 0.0) @ w2 + b2

    predicted = mlp(emb, p["w1p"], p["b1p"], p["w2p"], p["b2p"])
    observed = mlp(obs, p["w1o"], p["b1o"], p["w2o"], p["b2o"])
    residual = mlp(predicted - observed, p["w1r"], p["b1r"], p["w2r"], p["b2r"])

    n = emb.shape[0]
    Q = (emb @ p["wq"] + p["bq"]).reshape(n, NUM_HEADS, HEAD_DIM)
    K = (emb @ p["wk"] + p["bk"]).reshape(n, NUM_HEADS, HEAD_DIM)
    V = (emb @ p["wv"] + p["bv"]).reshape(n, NUM_HEADS, HEAD_DIM)
    R = residual.reshape(n, NUM_HEADS, HEAD_DIM)
    scores = jnp.einsum("nid,njd->nij", Q, K) / math.sqrt(HEAD_DIM)
    scores = scores - jnp.einsum("nid,njd->nij", Q, R)
    attn = jax.nn.softmax(scores, axis=-1)
    out = jnp.einsum("nij,njd->nid", attn, V).reshape(n, HIDDEN)
    attended = out @ p["wo"] + p["bo"]

    def ln(x, g, b):
        mu = x.mean(-1, keepdims=True)
        var = ((x - mu) ** 2).mean(-1, keepdims=True)
        return (x - mu) / jnp.sqrt(var + LN_EPS) * g + b

    attended = ln(emb + attended, p["g1"], p["be1"])
    h = attended @ p["wf1"] + p["bf1"]
    h = jnp.where(h > 0, h, LEAKY_SLOPE * h)
    ffo = h @ p["wf2"] + p["bf2"]
    return ln(attended + ffo, p["g2"], p["be2"])


if __name__ == "__main__":
    key = jax.random.PRNGKey(0)
    kp, ke, ko = jax.random.split(key, 3)
    params = init_params(kp)
    embeddings = jax.random.normal(ke, (SEQ, HIDDEN), jnp.float32)
    observations = jax.random.normal(ko, (SEQ, HIDDEN), jnp.float32)

    out = causal_transformer_forward(embeddings, observations, params)
    out = jax.block_until_ready(out)

    ref = reference_forward(embeddings, observations, params)
    np.testing.assert_allclose(np.asarray(out), np.asarray(ref), rtol=2e-3, atol=2e-3)
    print("KERNEL_OK")
</pallas_src>

<mosaic_0001>
module attributes {stable_mosaic.version = 11 : i64} {
  func.func @kernel(%arg0: i32, %arg1: memref<32x256xf32, #tpu.memory_space<vmem>>, %arg2: memref<256x1920xf32, #tpu.memory_space<vmem>>, %arg3: memref<128x1920xf32, #tpu.memory_space<vmem>>, %arg4: memref<512x384xf32, #tpu.memory_space<vmem>>, %arg5: memref<1x3840xf32, #tpu.memory_space<vmem>>, %arg6: memref<32x128xf32, #tpu.memory_space<vmem>>) attributes {dimension_semantics = [#tpu.dimension_semantics<parallel>], iteration_bounds = array<i64: 4>, scalar_prefetch = 0 : i64, scratch_operands = 0 : i64, tpu.core_type = #tpu.core_type<tc>, window_params = [{transform_indices = @transform_0, window_bounds = array<i64: 32, 256>}, {pipeline_mode = #tpu.pipeline_mode<synchronous>, transform_indices = @transform_1, window_bounds = array<i64: 256, 1920>}, {pipeline_mode = #tpu.pipeline_mode<synchronous>, transform_indices = @transform_2, window_bounds = array<i64: 128, 1920>}, {pipeline_mode = #tpu.pipeline_mode<synchronous>, transform_indices = @transform_3, window_bounds = array<i64: 512, 384>}, {pipeline_mode = #tpu.pipeline_mode<synchronous>, transform_indices = @transform_4, window_bounds = array<i64: 1, 3840>}, {transform_indices = @transform_5, window_bounds = array<i64: 32, 128>}]} {
    %c0 = arith.constant 0 : index
    %c0_0 = arith.constant 0 : index
    %0 = vector.load %arg1[%c0, %c0_0] : memref<32x256xf32, #tpu.memory_space<vmem>>, vector<32x256xf32>
    %1 = vector.extract_strided_slice %0 {offsets = [0, 0], sizes = [32, 128], strides = [1, 1]} : vector<32x256xf32> to vector<32x128xf32>
    %c0_1 = arith.constant 0 : index
    %c0_2 = arith.constant 0 : index
    %2 = vector.load %arg2[%c0_1, %c0_2] : memref<256x1920xf32, #tpu.memory_space<vmem>>, vector<256x1792xf32>
    %cst = arith.constant dense<0.000000e+00> : vector<32x1792xf32>
    %3 = tpu.matmul %0, %2, %cst {dimension_numbers = #tpu.dot_dimension_numbers<[1], [0], [0], [1], [0, 0, 1, 1], [], []>} : vector<32x256xf32>, vector<256x1792xf32>, vector<32x1792xf32> -> vector<32x1792xf32>
    %c0_3 = arith.constant 0 : index
    %c0_4 = arith.constant 0 : index
    %4 = vector.load %arg5[%c0_3, %c0_4] : memref<1x3840xf32, #tpu.memory_space<vmem>>, vector<1x1792xf32>
    %5 = vector.broadcast %4 : vector<1x1792xf32> to vector<32x1792xf32>
    %6 = arith.addf %3, %5 : vector<32x1792xf32>
    %7 = vector.extract_strided_slice %6 {offsets = [0, 0], sizes = [32, 512], strides = [1, 1]} : vector<32x1792xf32> to vector<32x512xf32>
    %8 = vector.extract_strided_slice %6 {offsets = [0, 512], sizes = [32, 512], strides = [1, 1]} : vector<32x1792xf32> to vector<32x512xf32>
    %9 = vector.extract_strided_slice %6 {offsets = [0, 1024], sizes = [32, 512], strides = [1, 1]} : vector<32x1792xf32> to vector<32x512xf32>
    %10 = vector.extract_strided_slice %6 {offsets = [0, 1536], sizes = [32, 256], strides = [1, 1]} : vector<32x1792xf32> to vector<32x256xf32>
    %cst_5 = arith.constant 0.000000e+00 : f32
    %11 = vector.broadcast %cst_5 : f32 to vector<32x256xf32>
    %12 = arith.maximumf %10, %11 : vector<32x256xf32>
    %c0_6 = arith.constant 0 : index
    %c1792 = arith.constant 1792 : index
    %13 = vector.load %arg2[%c0_6, %c1792] : memref<256x1920xf32, #tpu.memory_space<vmem>>, vector<256x128xf32>
    %cst_7 = arith.constant dense<0.000000e+00> : vector<32x128xf32>
    %14 = tpu.matmul %12, %13, %cst_7 {dimension_numbers = #tpu.dot_dimension_numbers<[1], [0], [0], [1], [0, 0, 1, 1], [], []>} : vector<32x256xf32>, vector<256x128xf32>, vector<32x128xf32> -> vector<32x128xf32>
    %c0_8 = arith.constant 0 : index
    %c1792_9 = arith.constant 1792 : index
    %15 = vector.load %arg5[%c0_8, %c1792_9] : memref<1x3840xf32, #tpu.memory_space<vmem>>, vector<1x128xf32>
    %16 = vector.broadcast %15 : vector<1x128xf32> to vector<32x128xf32>
    %17 = arith.addf %14, %16 : vector<32x128xf32>
    %cst_10 = arith.constant 0.000000e+00 : f32
    %18 = vector.broadcast %cst_10 : f32 to vector<32x128xf32>
    %19 = arith.maximumf %17, %18 : vector<32x128xf32>
    %c0_11 = arith.constant 0 : index
    %c0_12 = arith.constant 0 : index
    %20 = vector.load %arg3[%c0_11, %c0_12] : memref<128x1920xf32, #tpu.memory_space<vmem>>, vector<128x512xf32>
    %cst_13 = arith.constant dense<0.000000e+00> : vector<32x512xf32>
    %21 = tpu.matmul %19, %20, %cst_13 {dimension_numbers = #tpu.dot_dimension_numbers<[1], [0], [0], [1], [0, 0, 1, 1], [], []>} : vector<32x128xf32>, vector<128x512xf32>, vector<32x512xf32> -> vector<32x512xf32>
    %c0_14 = arith.constant 0 : index
    %c1920 = arith.constant 1920 : index
    %22 = vector.load %arg5[%c0_14, %c1920] : memref<1x3840xf32, #tpu.memory_space<vmem>>, vector<1x512xf32>
    %23 = vector.broadcast %22 : vector<1x512xf32> to vector<32x512xf32>
    %24 = arith.addf %21, %23 : vector<32x512xf32>
    %25 = arith.subf %8, %24 : vector<32x512xf32>
    %26 = arith.mulf %7, %25 : vector<32x512xf32>
    %c0_15 = arith.constant 0 : index
    %c0_16 = arith.constant 0 : index
    %27 = vector.load %arg4[%c0_15, %c0_16] : memref<512x384xf32, #tpu.memory_space<vmem>>, vector<512x128xf32>
    %cst_17 = arith.constant dense<0.000000e+00> : vector<32x128xf32>
    %28 = tpu.matmul %26, %27, %cst_17 {dimension_numbers = #tpu.dot_dimension_numbers<[1], [0], [0], [1], [0, 0, 1, 1], [], []>} : vector<32x512xf32>, vector<512x128xf32>, vector<32x128xf32> -> vector<32x128xf32>
    %c0_18 = arith.constant 0 : index
    %c2432 = arith.constant 2432 : index
    %29 = vector.load %arg5[%c0_18, %c2432] : memref<1x3840xf32, #tpu.memory_space<vmem>>, vector<1x128xf32>
    %30 = vector.broadcast %29 : vector<1x128xf32> to vector<32x128xf32>
    %31 = arith.addf %28, %30 : vector<32x128xf32>
    %cst_19 = arith.constant dense<0xFF800000> : vector<32xf32>
    %32 = vector.multi_reduction <maximumf>, %31, %cst_19 [1] : vector<32x128xf32> to vector<32xf32>
    %33 = vector.shape_cast %32 : vector<32xf32> to vector<32x1xf32>
    %34 = vector.broadcast %33 : vector<32x1xf32> to vector<32x128xf32>
    %35 = arith.subf %31, %34 : vector<32x128xf32>
    %36 = math.exp %35 : vector<32x128xf32>
    %c0_20 = arith.constant 0 : index
    %c1280 = arith.constant 1280 : index
    %37 = vector.load %arg3[%c0_20, %c1280] : memref<128x1920xf32, #tpu.memory_space<vmem>>, vector<128x128xf32>
    %cst_21 = arith.constant dense<0.000000e+00> : vector<32x128xf32>
    %38 = tpu.matmul %36, %37, %cst_21 {dimension_numbers = #tpu.dot_dimension_numbers<[1], [0], [0], [1], [0, 0, 1, 1], [], []>} : vector<32x128xf32>, vector<128x128xf32>, vector<32x128xf32> -> vector<32x128xf32>
    %c0_22 = arith.constant 0 : index
    %c1408 = arith.constant 1408 : index
    %39 = vector.load %arg3[%c0_22, %c1408] : memref<128x1920xf32, #tpu.memory_space<vmem>>, vector<128x512xf32>
    %cst_23 = arith.constant dense<0.000000e+00> : vector<32x512xf32>
    %40 = tpu.matmul %36, %39, %cst_23 {dimension_numbers = #tpu.dot_dimension_numbers<[1], [0], [0], [1], [0, 0, 1, 1], [], []>} : vector<32x128xf32>, vector<128x512xf32>, vector<32x512xf32> -> vector<32x512xf32>
    %41 = arith.mulf %40, %9 : vector<32x512xf32>
    %c0_24 = arith.constant 0 : index
    %c128 = arith.constant 128 : index
    %42 = vector.load %arg4[%c0_24, %c128] : memref<512x384xf32, #tpu.memory_space<vmem>>, vector<512x128xf32>
    %cst_25 = arith.constant dense<0.000000e+00> : vector<32x128xf32>
    %43 = tpu.matmul %41, %42, %cst_25 {dimension_numbers = #tpu.dot_dimension_numbers<[1], [0], [0], [1], [0, 0, 1, 1], [], []>} : vector<32x512xf32>, vector<512x128xf32>, vector<32x128xf32> -> vector<32x128xf32>
    %44 = tpu.reciprocal %38 {approx = true} : vector<32x128xf32> -> vector<32x128xf32>
    %45 = arith.mulf %43, %44 : vector<32x128xf32>
    %c0_26 = arith.constant 0 : index
    %c512 = arith.constant 512 : index
    %46 = vector.load %arg3[%c0_26, %c512] : memref<128x1920xf32, #tpu.memory_space<vmem>>, vector<128x128xf32>
    %cst_27 = arith.constant dense<0.000000e+00> : vector<32x128xf32>
    %47 = tpu.matmul %45, %46, %cst_27 {dimension_numbers = #tpu.dot_dimension_numbers<[1], [0], [0], [1], [0, 0, 1, 1], [], []>} : vector<32x128xf32>, vector<128x128xf32>, vector<32x128xf32> -> vector<32x128xf32>
    %c0_28 = arith.constant 0 : index
    %c2560 = arith.constant 2560 : index
    %48 = vector.load %arg5[%c0_28, %c2560] : memref<1x3840xf32, #tpu.memory_space<vmem>>, vector<1x128xf32>
    %49 = vector.broadcast %48 : vector<1x128xf32> to vector<32x128xf32>
    %50 = arith.addf %47, %49 : vector<32x128xf32>
    %c0_29 = arith.constant 0 : index
    %c1152 = arith.constant 1152 : index
    %51 = vector.load %arg3[%c0_29, %c1152] : memref<128x1920xf32, #tpu.memory_space<vmem>>, vector<128x128xf32>
    %52 = arith.addf %1, %50 : vector<32x128xf32>
    %cst_30 = arith.constant dense<0.000000e+00> : vector<32x128xf32>
    %53 = tpu.matmul %52, %51, %cst_30 {dimension_numbers = #tpu.dot_dimension_numbers<[1], [0], [0], [1], [0, 0, 1, 1], [], []>} : vector<32x128xf32>, vector<128x128xf32>, vector<32x128xf32> -> vector<32x128xf32>
    %54 = arith.subf %52, %53 : vector<32x128xf32>
    %55 = arith.mulf %54, %54 : vector<32x128xf32>
    %cst_31 = arith.constant dense<0.000000e+00> : vector<32x128xf32>
    %56 = tpu.matmul %55, %51, %cst_31 {dimension_numbers = #tpu.dot_dimension_numbers<[1], [0], [0], [1], [0, 0, 1, 1], [], []>} : vector<32x128xf32>, vector<128x128xf32>, vector<32x128xf32> -> vector<32x128xf32>
    %cst_32 = arith.constant 9.99999974E-6 : f32
    %57 = vector.broadcast %cst_32 : f32 to vector<32x128xf32>
    %58 = arith.addf %56, %57 : vector<32x128xf32>
    %59 = math.rsqrt %58 : vector<32x128xf32>
    %60 = arith.mulf %54, %59 : vector<32x128xf32>
    %c0_33 = arith.constant 0 : index
    %c3328 = arith.constant 3328 : index
    %61 = vector.load %arg5[%c0_33, %c3328] : memref<1x3840xf32, #tpu.memory_space<vmem>>, vector<1x128xf32>
    %62 = vector.broadcast %61 : vector<1x128xf32> to vector<32x128xf32>
    %63 = arith.mulf %60, %62 : vector<32x128xf32>
    %c0_34 = arith.constant 0 : index
    %c3456 = arith.constant 3456 : index
    %64 = vector.load %arg5[%c0_34, %c3456] : memref<1x3840xf32, #tpu.memory_space<vmem>>, vector<1x128xf32>
    %65 = vector.broadcast %64 : vector<1x128xf32> to vector<32x128xf32>
    %66 = arith.addf %63, %65 : vector<32x128xf32>
    %c0_35 = arith.constant 0 : index
    %c640 = arith.constant 640 : index
    %67 = vector.load %arg3[%c0_35, %c640] : memref<128x1920xf32, #tpu.memory_space<vmem>>, vector<128x512xf32>
    %cst_36 = arith.constant dense<0.000000e+00> : vector<32x512xf32>
    %68 = tpu.matmul %66, %67, %cst_36 {dimension_numbers = #tpu.dot_dimension_numbers<[1], [0], [0], [1], [0, 0, 1, 1], [], []>} : vector<32x128xf32>, vector<128x512xf32>, vector<32x512xf32> -> vector<32x512xf32>
    %c0_37 = arith.constant 0 : index
    %c2688 = arith.constant 2688 : index
    %69 = vector.load %arg5[%c0_37, %c2688] : memref<1x3840xf32, #tpu.memory_space<vmem>>, vector<1x512xf32>
    %70 = vector.broadcast %69 : vector<1x512xf32> to vector<32x512xf32>
    %71 = arith.addf %68, %70 : vector<32x512xf32>
    %cst_38 = arith.constant 0.000000e+00 : f32
    %72 = vector.broadcast %cst_38 : f32 to vector<32x512xf32>
    %73 = arith.cmpf ogt, %71, %72 : vector<32x512xf32>
    %cst_39 = arith.constant 0.00999999977 : f32
    %74 = vector.broadcast %cst_39 : f32 to vector<32x512xf32>
    %75 = arith.mulf %74, %71 : vector<32x512xf32>
    %76 = arith.select %73, %71, %75 : vector<32x512xi1>, vector<32x512xf32>
    %c0_40 = arith.constant 0 : index
    %c256 = arith.constant 256 : index
    %77 = vector.load %arg4[%c0_40, %c256] : memref<512x384xf32, #tpu.memory_space<vmem>>, vector<512x128xf32>
    %cst_41 = arith.constant dense<0.000000e+00> : vector<32x128xf32>
    %78 = tpu.matmul %76, %77, %cst_41 {dimension_numbers = #tpu.dot_dimension_numbers<[1], [0], [0], [1], [0, 0, 1, 1], [], []>} : vector<32x512xf32>, vector<512x128xf32>, vector<32x128xf32> -> vector<32x128xf32>
    %c0_42 = arith.constant 0 : index
    %c3200 = arith.constant 3200 : index
    %79 = vector.load %arg5[%c0_42, %c3200] : memref<1x3840xf32, #tpu.memory_space<vmem>>, vector<1x128xf32>
    %80 = vector.broadcast %79 : vector<1x128xf32> to vector<32x128xf32>
    %81 = arith.addf %78, %80 : vector<32x128xf32>
    %82 = arith.addf %66, %81 : vector<32x128xf32>
    %cst_43 = arith.constant dense<0.000000e+00> : vector<32x128xf32>
    %83 = tpu.matmul %82, %51, %cst_43 {dimension_numbers = #tpu.dot_dimension_numbers<[1], [0], [0], [1], [0, 0, 1, 1], [], []>} : vector<32x128xf32>, vector<128x128xf32>, vector<32x128xf32> -> vector<32x128xf32>
    %84 = arith.subf %82, %83 : vector<32x128xf32>
    %85 = arith.mulf %84, %84 : vector<32x128xf32>
    %cst_44 = arith.constant dense<0.000000e+00> : vector<32x128xf32>
    %86 = tpu.matmul %85, %51, %cst_44 {dimension_numbers = #tpu.dot_dimension_numbers<[1], [0], [0], [1], [0, 0, 1, 1], [], []>} : vector<32x128xf32>, vector<128x128xf32>, vector<32x128xf32> -> vector<32x128xf32>
    %cst_45 = arith.constant 9.99999974E-6 : f32
    %87 = vector.broadcast %cst_45 : f32 to vector<32x128xf32>
    %88 = arith.addf %86, %87 : vector<32x128xf32>
    %89 = math.rsqrt %88 : vector<32x128xf32>
    %90 = arith.mulf %84, %89 : vector<32x128xf32>
    %c0_46 = arith.constant 0 : index
    %c3584 = arith.constant 3584 : index
    %91 = vector.load %arg5[%c0_46, %c3584] : memref<1x3840xf32, #tpu.memory_space<vmem>>, vector<1x128xf32>
    %92 = vector.broadcast %91 : vector<1x128xf32> to vector<32x128xf32>
    %93 = arith.mulf %90, %92 : vector<32x128xf32>
    %c0_47 = arith.constant 0 : index
    %c3712 = arith.constant 3712 : index
    %94 = vector.load %arg5[%c0_47, %c3712] : memref<1x3840xf32, #tpu.memory_space<vmem>>, vector<1x128xf32>
    %95 = vector.broadcast %94 : vector<1x128xf32> to vector<32x128xf32>
    %96 = arith.addf %93, %95 : vector<32x128xf32>
    %c0_48 = arith.constant 0 : index
    %c0_49 = arith.constant 0 : index
    %97 = vector.load %arg6[%c0_48, %c0_49] : memref<32x128xf32, #tpu.memory_space<vmem>>, vector<32x128xf32>
    tpu.vector_store %arg6[%c0_48, %c0_49], %96 {strides = array<i32>} : memref<32x128xf32, #tpu.memory_space<vmem>>, vector<32x128xf32>,
    return
  }
  func.func @transform_0(%arg0: i32) -> (i32, i32) {
    %c0_i32 = arith.constant 0 : i32
    %c0_i32_0 = arith.constant 0 : i32
    return %arg0, %c0_i32 : i32, i32
  }
  func.func @transform_1(%arg0: i32) -> (i32, i32) {
    %c0_i32 = arith.constant 0 : i32
    %c0_i32_0 = arith.constant 0 : i32
    %c0_i32_1 = arith.constant 0 : i32
    return %c0_i32, %c0_i32_0 : i32, i32
  }
  func.func @transform_2(%arg0: i32) -> (i32, i32) {
    %c0_i32 = arith.constant 0 : i32
    %c0_i32_0 = arith.constant 0 : i32
    %c0_i32_1 = arith.constant 0 : i32
    return %c0_i32, %c0_i32_0 : i32, i32
  }
  func.func @transform_3(%arg0: i32) -> (i32, i32) {
    %c0_i32 = arith.constant 0 : i32
    %c0_i32_0 = arith.constant 0 : i32
    %c0_i32_1 = arith.constant 0 : i32
    return %c0_i32, %c0_i32_0 : i32, i32
  }
  func.func @transform_4(%arg0: i32) -> (i32, i32) {
    %c0_i32 = arith.constant 0 : i32
    %c0_i32_0 = arith.constant 0 : i32
    %c0_i32_1 = arith.constant 0 : i32
    return %c0_i32, %c0_i32_0 : i32, i32
  }
  func.func @transform_5(%arg0: i32) -> (i32, i32) {
    %c0_i32 = arith.constant 0 : i32
    %c0_i32_0 = arith.constant 0 : i32
    return %arg0, %c0_i32 : i32, i32
  }
}

</mosaic_0001>

<llo_original>
// kernel: tpu_custom_call.1
$region0: #{tpu_custom_call.1}
  #allocation0 [shape = 'u32[]', space=smem, size = 0x4, offset = 0x4, fixed_abs, tag = 'smem constant byte address 0x4 - core index']
  #allocation1 [shape = 'u32[144,128]{1,0:T(1,128)}', space=vmem, size = 0x12000, scoped, tag = 'internal scratch']
  %s0 = inlined_call_operand.hbm [shape: f32[128,256], index: 0, kind: input, shape index: {}]
  %s1 = inlined_call_operand.hbm [shape: f32[256,1920], index: 1, kind: input, shape index: {}]
  %s2 = inlined_call_operand.hbm [shape: f32[128,1920], index: 2, kind: input, shape index: {}]
  %s3 = inlined_call_operand.hbm [shape: f32[512,384], index: 3, kind: input, shape index: {}]
  %s4 = inlined_call_operand.hbm [shape: f32[1,3840], index: 4, kind: input, shape index: {}]
  %s5 = inlined_call_operand.hbm [shape: f32[128,128], index: 5, kind: output, shape index: {}]
  %s6 = sld [smem:[#allocation0]]
  $region73: #{tpu_custom_call.1} parent=0
    _
  %s8 = ssub.s32 1, %s6
  %s9 = scalar_select 0, %s8, %s6
  $region1: #{tpu_custom_call.1} parent=0
    #allocation2 [shape = 'u8[65536]{0}', space=vmem, size = 0x10000, scoped, tag = 'input window, operand 0']
    #allocation3 [shape = 's32[2]{0}', space=sflag, size = 0x8, scoped, tag = 'scoped memory for tpu_custom_call.1']
    #allocation4 [shape = 's32[2]{0}', space=sflag, size = 0x8, scoped, tag = 'scoped memory for tpu_custom_call.1']
    #allocation5 [shape = 'u8[1966080]{0}', space=vmem, size = 0x1e0000, scoped, tag = 'input window, operand 1, single buffered']
    #allocation6 [shape = 's32[1]{0}', space=sflag, size = 0x4, scoped, tag = 'scoped memory for tpu_custom_call.1']
    #allocation7 [shape = 'u8[983040]{0}', space=vmem, size = 0xf0000, scoped, tag = 'input window, operand 2, single buffered']
    #allocation8 [shape = 'u8[786432]{0}', space=vmem, size = 0xc0000, scoped, tag = 'input window, operand 3, single buffered']
    #allocation9 [shape = 's32[1]{0}', space=sflag, size = 0x4, scoped, tag = 'scoped memory for tpu_custom_call.1']
    #allocation10 [shape = 'u8[15360]{0}', space=vmem, size = 0x3c00, scoped, tag = 'input window, operand 4, single buffered']
    #allocation11 [shape = 'u8[32768]{0}', space=vmem, size = 0x8000, scoped, tag = 'output window, operand 0']
    %10 = vsyncpa [#allocation3], 0
    %s11 = scalar_lea.sflag [#allocation3], 1
    %12 = vsyncpa %s11, 0
    %13 = vsyncpa [#allocation6], 0
    %14 = vsyncpa [#allocation9], 0
    %15 = vsyncpa [#allocation4], 0
    %s16 = scalar_lea.sflag [#allocation4], 1
    %17 = vsyncpa %s16, 0
    loop: start=0, step=1, limit=6
    $region2: #{tpu_custom_call.1} parent=1 // loop_pre_header
      _
    $region3: #{tpu_custom_call.1} parent=1 // loop_header
      %s19 = sphi 0, %s23
      %p20 = scmp.ge.s32.totalorder %s19, 6
      %s29 = sphi 0, %s31
      %s32 = sphi 0, %s29
      %s33 = sphi 0, %s32
      %s49 = sphi 0, %s33
      %s53 = sphi 0, %s53
      %s55 = sphi 0, %s53
      %s56 = sphi 0, %s55
      %s70 = sphi 0, %s56
      %s74 = sphi 0, %s74
      %s76 = sphi 0, %s74
      %s77 = sphi 0, %s76
      %s91 = sphi 0, %s77
      %s95 = sphi 0, %s95
      %s97 = sphi 0, %s95
      %s98 = sphi 0, %s97
      %s112 = sphi 0, %s98
      %s116 = sphi 0, %s116
      %s118 = sphi 0, %s116
      %s119 = sphi 0, %s118
      %s133 = sphi 0, %s119
      %s139 = sphi 0, %s141
      %s142 = sphi 0, %s139
      %s143 = sphi 0, %s142
      %s159 = sphi 0, %s143
    $region4: #{tpu_custom_call.1} parent=1 // loop_header_branch
      %22 = sbr.rel (%p20) target = $region8
    $region5: #{tpu_custom_call.1} parent=1 // loop_body
      %s24 = ssub.s32 %s19, 1
      %s25 = ssub.s32 %s19, 2
      %s26 = sadd.s32 %s19, 1
      %s27 = ssub.s32 %s19, %s26
      %p28 = scmp.eq.s32.totalorder %s27, 0
      %s30 = sadd.s32 %s29, 1
      %s31 = scalar_select %p28, %s29, %s30
      %p34 = pneg %p28
      %p35 = scmp.eq.s32.totalorder %s19, 3
      %p36 = por %p34, %p35
      %p37 = scmp.ne.s32.totalorder %s29, %s32
      %p38 = scmp.eq.s32.totalorder %s19, 0
      %p39 = por %p37, %p38
      %p40 = scmp.ne.s32.totalorder %s29, %s32
      %p41 = scmp.eq.s32.totalorder %s24, 3
      %p42 = por %p40, %p41
      %p43 = scmp.ne.s32.totalorder %s32, %s33
      %p44 = scmp.eq.s32.totalorder %s24, 0
      %p45 = por %p43, %p44
      %p46 = scmp.ne.s32.totalorder %s32, %s33
      %p47 = scmp.eq.s32.totalorder %s25, 3
      %p48 = por %p46, %p47
      %p50 = scmp.ne.s32.totalorder %s33, %s49
      %p51 = scmp.eq.s32.totalorder %s25, 0
      %p52 = por %p50, %p51
      %s54 = sadd.s32 %s53, 1
      %p57 = scmp.eq.s32.totalorder %s19, 3
      %p58 = scmp.ne.s32.totalorder %s53, %s55
      %p59 = scmp.eq.s32.totalorder %s19, 0
      %p60 = por %p58, %p59
      %p61 = scmp.ne.s32.totalorder %s53, %s55
      %p62 = scmp.eq.s32.totalorder %s24, 3
      %p63 = por %p61, %p62
      %p64 = scmp.ne.s32.totalorder %s55, %s56
      %p65 = scmp.eq.s32.totalorder %s24, 0
      %p66 = por %p64, %p65
      %p67 = scmp.ne.s32.totalorder %s55, %s56
      %p68 = scmp.eq.s32.totalorder %s25, 3
      %p69 = por %p67, %p68
      %p71 = scmp.ne.s32.totalorder %s56, %s70
      %p72 = scmp.eq.s32.totalorder %s25, 0
      %p73 = por %p71, %p72
      %s75 = sadd.s32 %s74, 1
      %p78 = scmp.eq.s32.totalorder %s19, 3
      %p79 = scmp.ne.s32.totalorder %s74, %s76
      %p80 = scmp.eq.s32.totalorder %s19, 0
      %p81 = por %p79, %p80
      %p82 = scmp.ne.s32.totalorder %s74, %s76
      %p83 = scmp.eq.s32.totalorder %s24, 3
      %p84 = por %p82, %p83
      %p85 = scmp.ne.s32.totalorder %s76, %s77
      %p86 = scmp.eq.s32.totalorder %s24, 0
      %p87 = por %p85, %p86
      %p88 = scmp.ne.s32.totalorder %s76, %s77
      %p89 = scmp.eq.s32.totalorder %s25, 3
      %p90 = por %p88, %p89
      %p92 = scmp.ne.s32.totalorder %s77, %s91
      %p93 = scmp.eq.s32.totalorder %s25, 0
      %p94 = por %p92, %p93
      %s96 = sadd.s32 %s95, 1
      %p99 = scmp.eq.s32.totalorder %s19, 3
      %p100 = scmp.ne.s32.totalorder %s95, %s97
      %p101 = scmp.eq.s32.totalorder %s19, 0
      %p102 = por %p100, %p101
      %p103 = scmp.ne.s32.totalorder %s95, %s97
      %p104 = scmp.eq.s32.totalorder %s24, 3
      %p105 = por %p103, %p104
      %p106 = scmp.ne.s32.totalorder %s97, %s98
      %p107 = scmp.eq.s32.totalorder %s24, 0
      %p108 = por %p106, %p107
      %p109 = scmp.ne.s32.totalorder %s97, %s98
      %p110 = scmp.eq.s32.totalorder %s25, 3
      %p111 = por %p109, %p110
      %p113 = scmp.ne.s32.totalorder %s98, %s112
      %p114 = scmp.eq.s32.totalorder %s25, 0
      %p115 = por %p113, %p114
      %s117 = sadd.s32 %s116, 1
      %p120 = scmp.eq.s32.totalorder %s19, 3
      %p121 = scmp.ne.s32.totalorder %s116, %s118
      %p122 = scmp.eq.s32.totalorder %s19, 0
      %p123 = por %p121, %p122
      %p124 = scmp.ne.s32.totalorder %s116, %s118
      %p125 = scmp.eq.s32.totalorder %s24, 3
      %p126 = por %p124, %p125
      %p127 = scmp.ne.s32.totalorder %s118, %s119
      %p128 = scmp.eq.s32.totalorder %s24, 0
      %p129 = por %p127, %p128
      %p130 = scmp.ne.s32.totalorder %s118, %s119
      %p131 = scmp.eq.s32.totalorder %s25, 3
      %p132 = por %p130, %p131
      %p134 = scmp.ne.s32.totalorder %s119, %s133
      %p135 = scmp.eq.s32.totalorder %s25, 0
      %p136 = por %p134, %p135
      %s137 = ssub.s32 %s19, %s26
      %p138 = scmp.eq.s32.totalorder %s137, 0
      %s140 = sadd.s32 %s139, 1
      %s141 = scalar_select %p138, %s139, %s140
      %p144 = pneg %p138
      %p145 = scmp.eq.s32.totalorder %s19, 3
      %p146 = por %p144, %p145
      %p147 = scmp.ne.s32.totalorder %s139, %s142
      %p148 = scmp.eq.s32.totalorder %s19, 0
      %p149 = por %p147, %p148
      %p150 = scmp.ne.s32.totalorder %s139, %s142
      %p151 = scmp.eq.s32.totalorder %s24, 3
      %p152 = por %p150, %p151
      %p153 = scmp.ne.s32.totalorder %s142, %s143
      %p154 = scmp.eq.s32.totalorder %s24, 0
      %p155 = por %p153, %p154
      %p156 = scmp.ne.s32.totalorder %s142, %s143
      %p157 = scmp.eq.s32.totalorder %s25, 3
      %p158 = por %p156, %p157
      %p160 = scmp.ne.s32.totalorder %s143, %s159
      %p161 = scmp.eq.s32.totalorder %s25, 0
      %p162 = por %p160, %p161
      %p163 = scmp.le.s32.totalorder 1, %s19
      %p164 = scmp.lt.s32.totalorder %s19, 5
      %p165 = pnand %p163, %p164
      %p166 = pneg %p165
      // Predicated region
      $region9: #{tpu_custom_call.1} parent=5 // pred_check
        _
      $region10: #{tpu_custom_call.1} parent=5 // pred_check_branch
        %168 = sbr.rel (%p165) target = $region12
      $region11: #{tpu_custom_call.1} parent=5 // pred_region
        %s169 = ssub.s32 %s19, 1
        // Predicated region
        $region13: #{tpu_custom_call.1} parent=11 // pred_check
          %p170 = pneg %p66
        $region14: #{tpu_custom_call.1} parent=11 // pred_check_branch
          %172 = sbr.rel (%p170) target = $region16
        $region15: #{tpu_custom_call.1} parent=11 // pred_region
          %s174 = ssub.s32 61440, 61440
          %175 = vsyncadd [#allocation6], %s174
          %s176 = sshll.u32 [#allocation5], 4
          %s177 = int_to_ptr.vmem [resolvable:$true] %s176
          %182 = dma.hbm_to_vmem [thread:$0]  %s1, 61440, %s177, [#allocation6], 1920, 1920, 120
        $region16: #{tpu_custom_call.1} parent=11 // pred_fallthru
          _
        // Predicated region
        $region17: #{tpu_custom_call.1} parent=11 // pred_check
          %p183 = pneg %p87
        $region18: #{tpu_custom_call.1} parent=11 // pred_check_branch
          %185 = sbr.rel (%p183) target = $region20
        $region19: #{tpu_custom_call.1} parent=11 // pred_region
          %s187 = ssub.s32 30720, 30720
          %188 = vsyncadd [#allocation6], %s187
          %s189 = sshll.u32 [#allocation7], 4
          %s190 = int_to_ptr.vmem [resolvable:$true] %s189
          %195 = dma.hbm_to_vmem [thread:$0]  %s2, 30720, %s190, [#allocation6], 1920, 1920, 120
        $region20: #{tpu_custom_call.1} parent=11 // pred_fallthru
          _
        // Predicated region
        $region21: #{tpu_custom_call.1} parent=11 // pred_check
          %p196 = pneg %p108
        $region22: #{tpu_custom_call.1} parent=11 // pred_check_branch
          %198 = sbr.rel (%p196) target = $region24
        $region23: #{tpu_custom_call.1} parent=11 // pred_region
          %s200 = ssub.s32 24576, 24576
          %201 = vsyncadd [#allocation9], %s200
          %s202 = sshll.u32 [#allocation8], 4
          %s203 = int_to_ptr.vmem [resolvable:$true] %s202
          %208 = dma.hbm_to_vmem [thread:$0]  %s3, 24576, %s203, [#allocation9], 384, 384, 24
        $region24: #{tpu_custom_call.1} parent=11 // pred_fallthru
          _
        // Predicated region
        $region25: #{tpu_custom_call.1} parent=11 // pred_check
          %p209 = pneg %p129
        $region26: #{tpu_custom_call.1} parent=11 // pred_check_branch
          %211 = sbr.rel (%p209) target = $region28
        $region27: #{tpu_custom_call.1} parent=11 // pred_region
          %s213 = ssub.s32 480, 480
          %214 = vsyncadd [#allocation9], %s213
          %s216 = sshll.u32 [#allocation10], 4
          %s217 = int_to_ptr.vmem [resolvable:$true] %s216
          %219 = dma.hbm_to_vmem [thread:$0]  %s4, 480, %s217, [#allocation9]
        $region28: #{tpu_custom_call.1} parent=11 // pred_fallthru
          _
      $region12: #{tpu_custom_call.1} parent=5 // pred_fallthru
        _
      %p220 = scmp.lt.s32.totalorder %s19, 4
      // Predicated region
      $region29: #{tpu_custom_call.1} parent=5 // pred_check
        %p221 = pneg %p220
      $region30: #{tpu_custom_call.1} parent=5 // pred_check_branch
        %223 = sbr.rel (%p221) target = $region32
      $region31: #{tpu_custom_call.1} parent=5 // pred_region
        // Predicated region
        $region33: #{tpu_custom_call.1} parent=31 // pred_check
          %p224 = pneg %p39
        $region34: #{tpu_custom_call.1} parent=31 // pred_check_branch
          %226 = sbr.rel (%p224) target = $region36
        $region35: #{tpu_custom_call.1} parent=31 // pred_region
          %s227 = sand.u32 %s29, 1
          %s228 = scalar_lea.sflag [#allocation3], %s227
          %s229 = sand.u32 %s29, 1
          %s230 = smul.addr %s229, 64
          %s231 = scalar_lea.vmem [#allocation2], %s230
          %s232 = smul.u32 4, %s19
          %s234 = ssub.s32 1024, 1024
          %235 = vsyncadd %s228, %s234
          %s236 = smul.addr %s232, 2
          %s237 = smul.addr %s236, 128
          %s238 = scalar_lea.hbm %s0, %s237
          %s239 = sshll.u32 %s231, 4
          %s240 = int_to_ptr.vmem [resolvable:$true] %s239
          %245 = dma.hbm_to_vmem [thread:$0]  %s238, 1024, %s240, %s228, 256, 256, 16
        $region36: #{tpu_custom_call.1} parent=31 // pred_fallthru
          _
      $region32: #{tpu_custom_call.1} parent=5 // pred_fallthru
        _
      %p246 = scmp.le.s32.totalorder 1, %s19
      %p247 = scmp.lt.s32.totalorder %s19, 5
      %p248 = pnand %p246, %p247
      %p249 = pneg %p248
      // Predicated region
      $region37: #{tpu_custom_call.1} parent=5 // pred_check
        _
      $region38: #{tpu_custom_call.1} parent=5 // pred_check_branch
        %251 = sbr.rel (%p248) target = $region40
      $region39: #{tpu_custom_call.1} parent=5 // pred_region
        %s252 = ssub.s32 %s19, 1
        %s253 = sand.u32 %s32, 1
        %s254 = scalar_lea.sflag [#allocation3], %s253
        %s255 = sand.u32 %s32, 1
        %s256 = smul.addr %s255, 64
        %s257 = scalar_lea.vmem [#allocation2], %s256
        // Predicated region
        $region41: #{tpu_custom_call.1} parent=39 // pred_check
          %p258 = pneg %p45
        $region42: #{tpu_custom_call.1} parent=39 // pred_check_branch
          %260 = sbr.rel (%p258) target = $region44
        $region43: #{tpu_custom_call.1} parent=39 // pred_region
          %261 = dma.done %s254, 1024
        $region44: #{tpu_custom_call.1} parent=39 // pred_fallthru
          _
        // Predicated region
        $region45: #{tpu_custom_call.1} parent=39 // pred_check
          %p262 = pneg %p66
        $region46: #{tpu_custom_call.1} parent=39 // pred_check_branch
          %264 = sbr.rel (%p262) target = $region48
        $region47: #{tpu_custom_call.1} parent=39 // pred_region
          %265 = dma.done [#allocation6], 61440
        $region48: #{tpu_custom_call.1} parent=39 // pred_fallthru
          _
        // Predicated region
        $region49: #{tpu_custom_call.1} parent=39 // pred_check
          %p266 = pneg %p87
        $region50: #{tpu_custom_call.1} parent=39 // pred_check_branch
          %268 = sbr.rel (%p266) target = $region52
        $region51: #{tpu_custom_call.1} parent=39 // pred_region
          %269 = dma.done [#allocation6], 30720
        $region52: #{tpu_custom_call.1} parent=39 // pred_fallthru
          _
        // Predicated region
        $region53: #{tpu_custom_call.1} parent=39 // pred_check
          %p270 = pneg %p108
        $region54: #{tpu_custom_call.1} parent=39 // pred_check_branch
          %272 = sbr.rel (%p270) target = $region56
        $region55: #{tpu_custom_call.1} parent=39 // pred_region
          %273 = dma.done [#allocation9], 24576
        $region56: #{tpu_custom_call.1} parent=39 // pred_fallthru
          _
        // Predicated region
        $region57: #{tpu_custom_call.1} parent=39 // pred_check
          %p274 = pneg %p129
        $region58: #{tpu_custom_call.1} parent=39 // pred_check_branch
          %276 = sbr.rel (%p274) target = $region60
        $region59: #{tpu_custom_call.1} parent=39 // pred_region
          %277 = dma.done [#allocation9], 480
        $region60: #{tpu_custom_call.1} parent=39 // pred_fallthru
          _
        %s278 = sand.u32 %s32, 1
        %s279 = scalar_lea.sflag [#allocation3], %s278
        %s280 = sand.u32 %s32, 1
        %s281 = smul.addr %s280, 64
        %s282 = scalar_lea.vmem [#allocation2], %s281
        %p283 = pneg %p45
        %p284 = pneg %p42
        %p285 = pneg %p66
        %p286 = pneg %p63
        %p287 = pneg %p87
        %p288 = pneg %p84
        %p289 = pneg %p108
        %p290 = pneg %p105
        %p291 = pneg %p129
        %p292 = pneg %p126
        %p293 = pneg %p155
        %p294 = pneg %p152
        %s295 = sand.u32 %s142, 1
        %s296 = scalar_lea.sflag [#allocation4], %s295
        %s297 = sand.u32 %s142, 1
        %s298 = smul.addr %s297, 32
        %s299 = scalar_lea.vmem [#allocation11], %s298
        %s300 = smul.u32 4, %s24
        %s301 = smul.u32 4, %s24
        %v302 = vld [vmem:[%s257] sm:$0xff]
        %v303 = vld [vmem:[%s257 + $0x8] sm:$0xff]
        %v304 = vld [vmem:[%s257 + $0x10] sm:$0xff]
        %v305 = vld [vmem:[%s257 + $0x18] sm:$0xff]
        %v306 = vld [vmem:[%s257 + $0x20] sm:$0xff]
        %v307 = vld [vmem:[%s257 + $0x28] sm:$0xff]
        %v308 = vld [vmem:[%s257 + $0x30] sm:$0xff]
        %v309 = vld [vmem:[%s257 + $0x38] sm:$0xff]
        %v310 = vld [vmem:[#allocation5] sm:$0xff]
        %v311 = vld [vmem:[#allocation5 + $0x8] sm:$0xff]
        %v312 = vld [vmem:[#allocation5 + $0x10] sm:$0xff]
        %v313 = vld [vmem:[#allocation5 + $0x18] sm:$0xff]
        %v314 = vld [vmem:[#allocation5 + $0x20] sm:$0xff]
        %v315 = vld [vmem:[#allocation5 + $0x28] sm:$0xff]
        %v316 = vld [vmem:[#allocation5 + $0x30] sm:$0xff]
        %v317 = vld [vmem:[#allocation5 + $0x38] sm:$0xff]
        %v318 = vld [vmem:[#allocation5 + $0x40] sm:$0xff]
        %v319 = vld [vmem:[#allocation5 + $0x48] sm:$0xff]
        %v320 = vld [vmem:[#allocation5 + $0x50] sm:$0xff]
        %v321 = vld [vmem:[#allocation5 + $0x58] sm:$0xff]
        %v322 = vld [vmem:[#allocation5 + $0x60] sm:$0xff]
        %v323 = vld [vmem:[#allocation5 + $0x68] sm:$0xff]
        %v324 = vld [vmem:[#allocation5 + $0x78] sm:$0xff]
        %v325 = vld [vmem:[#allocation5 + $0x80] sm:$0xff]
        %v326 = vld [vmem:[#allocation5 + $0x88] sm:$0xff]
        %v327 = vld [vmem:[#allocation5 + $0x90] sm:$0xff]
        %v328 = vld [vmem:[#allocation5 + $0x98] sm:$0xff]
        %v329 = vld [vmem:[#allocation5 + $0xa0] sm:$0xff]
        %v330 = vld [vmem:[#allocation5 + $0xa8] sm:$0xff]
        %v331 = vld [vmem:[#allocation5 + $0xb0] sm:$0xff]
        %v332 = vld [vmem:[#allocation5 + $0xb8] sm:$0xff]
        %v333 = vld [vmem:[#allocation5 + $0xc0] sm:$0xff]
        %v334 = vld [vmem:[#allocation5 + $0xc8] sm:$0xff]
        %v335 = vld [vmem:[#allocation5 + $0xd0] sm:$0xff]
        %v336 = vld [vmem:[#allocation5 + $0xd8] sm:$0xff]
        %v337 = vld [vmem:[#allocation5 + $0xe0] sm:$0xff]
        %v338 = vld [vmem:[#allocation5 + $0xf0] sm:$0xff]
        %v339 = vld [vmem:[#allocation5 + $0xf8] sm:$0xff]
        %v340 = vld [vmem:[#allocation5 + $0x100] sm:$0xff]
        %v341 = vld [vmem:[#allocation5 + $0x108] sm:$0xff]
        %v342 = vld [vmem:[#allocation5 + $0x110] sm:$0xff]
        %v343 = vld [vmem:[#allocation5 + $0x118] sm:$0xff]
        %v344 = vld [vmem:[#allocation5 + $0x120] sm:$0xff]
        %v345 = vld [vmem:[#allocation5 + $0x128] sm:$0xff]
        %v346 = vld [vmem:[#allocation5 + $0x130] sm:$0xff]
        %v347 = vld [vmem:[#allocation5 + $0x138] sm:$0xff]
        %v348 = vld [vmem:[#allocation5 + $0x140] sm:$0xff]
        %v349 = vld [vmem:[#allocation5 + $0x148] sm:$0xff]
        %v350 = vld [vmem:[#allocation5 + $0x150] sm:$0xff]
        %v351 = vld [vmem:[#allocation5 + $0x158] sm:$0xff]
        %v352 = vld [vmem:[#allocation5 + $0x168] sm:$0xff]
        %v353 = vld [vmem:[#allocation5 + $0x170] sm:$0xff]
        %v354 = vld [vmem:[#allocation5 + $0x178] sm:$0xff]
        %v355 = vld [vmem:[#allocation5 + $0x180] sm:$0xff]
        %v356 = vld [vmem:[#allocation5 + $0x188] sm:$0xff]
        %v357 = vld [vmem:[#allocation5 + $0x190] sm:$0xff]
        %v358 = vld [vmem:[#allocation5 + $0x198] sm:$0xff]
        %v359 = vld [vmem:[#allocation5 + $0x1a0] sm:$0xff]
        %v360 = vld [vmem:[#allocation5 + $0x1a8] sm:$0xff]
        %v361 = vld [vmem:[#allocation5 + $0x1b0] sm:$0xff]
        %v362 = vld [vmem:[#allocation5 + $0x1b8] sm:$0xff]
        %v363 = vld [vmem:[#allocation5 + $0x1c0] sm:$0xff]
        %v364 = vld [vmem:[#allocation5 + $0x1c8] sm:$0xff]
        %v365 = vld [vmem:[#allocation5 + $0x1d0] sm:$0xff]
        %v366 = vld [vmem:[#allocation5 + $0x1e0] sm:$0xff]
        %v367 = vld [vmem:[#allocation5 + $0x1e8] sm:$0xff]
        %v368 = vld [vmem:[#allocation5 + $0x1f0] sm:$0xff]
        %v369 = vld [vmem:[#allocation5 + $0x1f8] sm:$0xff]
        %v370 = vld [vmem:[#allocation5 + $0x200] sm:$0xff]
        %v371 = vld [vmem:[#allocation5 + $0x208] sm:$0xff]
        %v372 = vld [vmem:[#allocation5 + $0x210] sm:$0xff]
        %v373 = vld [vmem:[#allocation5 + $0x218] sm:$0xff]
        %v374 = vld [vmem:[#allocation5 + $0x220] sm:$0xff]
        %v375 = vld [vmem:[#allocation5 + $0x228] sm:$0xff]
        %v376 = vld [vmem:[#allocation5 + $0x230] sm:$0xff]
        %v377 = vld [vmem:[#allocation5 + $0x238] sm:$0xff]
        %v378 = vld [vmem:[#allocation5 + $0x240] sm:$0xff]
        %v379 = vld [vmem:[#allocation5 + $0x248] sm:$0xff]
        %v380 = vld [vmem:[#allocation5 + $0x258] sm:$0xff]
        %v381 = vld [vmem:[#allocation5 + $0x260] sm:$0xff]
        %v382 = vld [vmem:[#allocation5 + $0x268] sm:$0xff]
        %v383 = vld [vmem:[#allocation5 + $0x270] sm:$0xff]
        %v384 = vld [vmem:[#allocation5 + $0x278] sm:$0xff]
        %v385 = vld [vmem:[#allocation5 + $0x280] sm:$0xff]
        %v386 = vld [vmem:[#allocation5 + $0x288] sm:$0xff]
        %v387 = vld [vmem:[#allocation5 + $0x290] sm:$0xff]
        %v388 = vld [vmem:[#allocation5 + $0x298] sm:$0xff]
        %v389 = vld [vmem:[#allocation5 + $0x2a0] sm:$0xff]
        %v390 = vld [vmem:[#allocation5 + $0x2a8] sm:$0xff]
        %v391 = vld [vmem:[#allocation5 + $0x2b0] sm:$0xff]
        %v392 = vld [vmem:[#allocation5 + $0x2b8] sm:$0xff]
        %v393 = vld [vmem:[#allocation5 + $0x2c0] sm:$0xff]
        %v394 = vld [vmem:[#allocation5 + $0x2d0] sm:$0xff]
        %v395 = vld [vmem:[#allocation5 + $0x2d8] sm:$0xff]
        %v396 = vld [vmem:[#allocation5 + $0x2e0] sm:$0xff]
        %v397 = vld [vmem:[#allocation5 + $0x2e8] sm:$0xff]
        %v398 = vld [vmem:[#allocation5 + $0x2f0] sm:$0xff]
        %v399 = vld [vmem:[#allocation5 + $0x2f8] sm:$0xff]
        %v400 = vld [vmem:[#allocation5 + $0x300] sm:$0xff]
        %v401 = vld [vmem:[#allocation5 + $0x308] sm:$0xff]
        %v402 = vld [vmem:[#allocation5 + $0x310] sm:$0xff]
        %v403 = vld [vmem:[#allocation5 + $0x318] sm:$0xff]
        %v404 = vld [vmem:[#allocation5 + $0x320] sm:$0xff]
        %v405 = vld [vmem:[#allocation5 + $0x328] sm:$0xff]
        %v406 = vld [vmem:[#allocation5 + $0x330] sm:$0xff]
        %v407 = vld [vmem:[#allocation5 + $0x338] sm:$0xff]
        %v408 = vld [vmem:[#allocation5 + $0x348] sm:$0xff]
        %v409 = vld [vmem:[#allocation5 + $0x350] sm:$0xff]
        %v410 = vld [vmem:[#allocation5 + $0x358] sm:$0xff]
        %v411 = vld [vmem:[#allocation5 + $0x360] sm:$0xff]
        %v412 = vld [vmem:[#allocation5 + $0x368] sm:$0xff]
        %v413 = vld [vmem:[#allocation5 + $0x370] sm:$0xff]
        %v414 = vld [vmem:[#allocation5 + $0x378] sm:$0xff]
        %v415 = vld [vmem:[#allocation5 + $0x380] sm:$0xff]
        %v416 = vld [vmem:[#allocation5 + $0x388] sm:$0xff]
        %v417 = vld [vmem:[#allocation5 + $0x390] sm:$0xff]
        %v418 = vld [vmem:[#allocation5 + $0x398] sm:$0xff]
        %v419 = vld [vmem:[#allocation5 + $0x3a0] sm:$0xff]
        %v420 = vld [vmem:[#allocation5 + $0x3a8] sm:$0xff]
        %v421 = vld [vmem:[#allocation5 + $0x3b0] sm:$0xff]
        %v422 = vld [vmem:[#allocation5 + $0x3c0] sm:$0xff]
        %v423 = vld [vmem:[#allocation5 + $0x3c8] sm:$0xff]
        %v424 = vld [vmem:[#allocation5 + $0x3d0] sm:$0xff]
        %v425 = vld [vmem:[#allocation5 + $0x3d8] sm:$0xff]
        %v426 = vld [vmem:[#allocation5 + $0x3e0] sm:$0xff]
        %v427 = vld [vmem:[#allocation5 + $0x3e8] sm:$0xff]
        %v428 = vld [vmem:[#allocation5 + $0x3f0] sm:$0xff]
        %v429 = vld [vmem:[#allocation5 + $0x3f8] sm:$0xff]
        %v430 = vld [vmem:[#allocation5 + $0x400] sm:$0xff]
        %v431 = vld [vmem:[#allocation5 + $0x408] sm:$0xff]
        %v432 = vld [vmem:[#allocation5 + $0x410] sm:$0xff]
        %v433 = vld [vmem:[#allocation5 + $0x418] sm:$0xff]
        %v434 = vld [vmem:[#allocation5 + $0x420] sm:$0xff]
        %v435 = vld [vmem:[#allocation5 + $0x428] sm:$0xff]
        %v436 = vld [vmem:[#allocation5 + $0x438] sm:$0xff]
        %v437 = vld [vmem:[#allocation5 + $0x440] sm:$0xff]
        %v438 = vld [vmem:[#allocation5 + $0x448] sm:$0xff]
        %v439 = vld [vmem:[#allocation5 + $0x450] sm:$0xff]
        %v440 = vld [vmem:[#allocation5 + $0x458] sm:$0xff]
        %v441 = vld [vmem:[#allocation5 + $0x460] sm:$0xff]
        %v442 = vld [vmem:[#allocation5 + $0x468] sm:$0xff]
        %v443 = vld [vmem:[#allocation5 + $0x470] sm:$0xff]
        %v444 = vld [vmem:[#allocation5 + $0x478] sm:$0xff]
        %v445 = vld [vmem:[#allocation5 + $0x480] sm:$0xff]
        %v446 = vld [vmem:[#allocation5 + $0x488] sm:$0xff]
        %v447 = vld [vmem:[#allocation5 + $0x490] sm:$0xff]
        %v448 = vld [vmem:[#allocation5 + $0x498] sm:$0xff]
        %v449 = vld [vmem:[#allocation5 + $0x4a0] sm:$0xff]
        %v450 = vld [vmem:[#allocation5 + $0x4b0] sm:$0xff]
        %v451 = vld [vmem:[#allocation5 + $0x4b8] sm:$0xff]
        %v452 = vld [vmem:[#allocation5 + $0x4c0] sm:$0xff]
        %v453 = vld [vmem:[#allocation5 + $0x4c8] sm:$0xff]
        %v454 = vld [vmem:[#allocation5 + $0x4d0] sm:$0xff]
        %v455 = vld [vmem:[#allocation5 + $0x4d8] sm:$0xff]
        %v456 = vld [vmem:[#allocation5 + $0x4e0] sm:$0xff]
        %v457 = vld [vmem:[#allocation5 + $0x4e8] sm:$0xff]
        %v458 = vld [vmem:[#allocation5 + $0x4f0] sm:$0xff]
        %v459 = vld [vmem:[#allocation5 + $0x4f8] sm:$0xff]
        %v460 = vld [vmem:[#allocation5 + $0x500] sm:$0xff]
        %v461 = vld [vmem:[#allocation5 + $0x508] sm:$0xff]
        %v462 = vld [vmem:[#allocation5 + $0x510] sm:$0xff]
        %v463 = vld [vmem:[#allocation5 + $0x518] sm:$0xff]
        %v464 = vld [vmem:[#allocation5 + $0x528] sm:$0xff]
        %v465 = vld [vmem:[#allocation5 + $0x530] sm:$0xff]
        %v466 = vld [vmem:[#allocation5 + $0x538] sm:$0xff]
        %v467 = vld [vmem:[#allocation5 + $0x540] sm:$0xff]
        %v468 = vld [vmem:[#allocation5 + $0x548] sm:$0xff]
        %v469 = vld [vmem:[#allocation5 + $0x550] sm:$0xff]
        %v470 = vld [vmem:[#allocation5 + $0x558] sm:$0xff]
        %v471 = vld [vmem:[#allocation5 + $0x560] sm:$0xff]
        %v472 = vld [vmem:[#allocation5 + $0x568] sm:$0xff]
        %v473 = vld [vmem:[#allocation5 + $0x570] sm:$0xff]
        %v474 = vld [vmem:[#allocation5 + $0x578] sm:$0xff]
        %v475 = vld [vmem:[#allocation5 + $0x580] sm:$0xff]
        %v476 = vld [vmem:[#allocation5 + $0x588] sm:$0xff]
        %v477 = vld [vmem:[#allocation5 + $0x590] sm:$0xff]
        %v478 = vld [vmem:[#allocation5 + $0x5a0] sm:$0xff]
        %v479 = vld [vmem:[#allocation5 + $0x5a8] sm:$0xff]
        %v480 = vld [vmem:[#allocation5 + $0x5b0] sm:$0xff]
        %v481 = vld [vmem:[#allocation5 + $0x5b8] sm:$0xff]
        %v482 = vld [vmem:[#allocation5 + $0x5c0] sm:$0xff]
        %v483 = vld [vmem:[#allocation5 + $0x5c8] sm:$0xff]
        %v484 = vld [vmem:[#allocation5 + $0x5d0] sm:$0xff]
        %v485 = vld [vmem:[#allocation5 + $0x5d8] sm:$0xff]
        %v486 = vld [vmem:[#allocation5 + $0x5e0] sm:$0xff]
        %v487 = vld [vmem:[#allocation5 + $0x5e8] sm:$0xff]
        %v488 = vld [vmem:[#allocation5 + $0x5f0] sm:$0xff]
        %v489 = vld [vmem:[#allocation5 + $0x5f8] sm:$0xff]
        %v490 = vld [vmem:[#allocation5 + $0x600] sm:$0xff]
        %v491 = vld [vmem:[#allocation5 + $0x608] sm:$0xff]
        %v492 = vld [vmem:[#allocation5 + $0x618] sm:$0xff]
        %v493 = vld [vmem:[#allocation5 + $0x620] sm:$0xff]
        %v494 = vld [vmem:[#allocation5 + $0x628] sm:$0xff]
        %v495 = vld [vmem:[#allocation5 + $0x630] sm:$0xff]
        %v496 = vld [vmem:[#allocation5 + $0x638] sm:$0xff]
        %v497 = vld [vmem:[#allocation5 + $0x640] sm:$0xff]
        %v498 = vld [vmem:[#allocation5 + $0x648] sm:$0xff]
        %v499 = vld [vmem:[#allocation5 + $0x650] sm:$0xff]
        %v500 = vld [vmem:[#allocation5 + $0x658] sm:$0xff]
        %v501 = vld [vmem:[#allocation5 + $0x660] sm:$0xff]
        %v502 = vld [vmem:[#allocation5 + $0x668] sm:$0xff]
        %v503 = vld [vmem:[#allocation5 + $0x670] sm:$0xff]
        %v504 = vld [vmem:[#allocation5 + $0x678] sm:$0xff]
        %v505 = vld [vmem:[#allocation5 + $0x680] sm:$0xff]
        %v506 = vld [vmem:[#allocation5 + $0x690] sm:$0xff]
        %v507 = vld [vmem:[#allocation5 + $0x698] sm:$0xff]
        %v508 = vld [vmem:[#allocation5 + $0x6a0] sm:$0xff]
        %v509 = vld [vmem:[#allocation5 + $0x6a8] sm:$0xff]
        %v510 = vld [vmem:[#allocation5 + $0x6b0] sm:$0xff]
        %v511 = vld [vmem:[#allocation5 + $0x6b8] sm:$0xff]
        %v512 = vld [vmem:[#allocation5 + $0x6c0] sm:$0xff]
        %v513 = vld [vmem:[#allocation5 + $0x6c8] sm:$0xff]
        %v514 = vld [vmem:[#allocation5 + $0x6d0] sm:$0xff]
        %v515 = vld [vmem:[#allocation5 + $0x6d8] sm:$0xff]
        %v516 = vld [vmem:[#allocation5 + $0x6e0] sm:$0xff]
        %v517 = vld [vmem:[#allocation5 + $0x6e8] sm:$0xff]
        %v518 = vld [vmem:[#allocation5 + $0x6f0] sm:$0xff]
        %v519 = vld [vmem:[#allocation5 + $0x6f8] sm:$0xff]
        %v520 = vld [vmem:[#allocation5 + $0x708] sm:$0xff]
        %v521 = vld [vmem:[#allocation5 + $0x710] sm:$0xff]
        %v522 = vld [vmem:[#allocation5 + $0x718] sm:$0xff]
        %v523 = vld [vmem:[#allocation5 + $0x720] sm:$0xff]
        %v524 = vld [vmem:[#allocation5 + $0x728] sm:$0xff]
        %v525 = vld [vmem:[#allocation5 + $0x730] sm:$0xff]
        %v526 = vld [vmem:[#allocation5 + $0x738] sm:$0xff]
        %v527 = vld [vmem:[#allocation5 + $0x740] sm:$0xff]
        %v528 = vld [vmem:[#allocation5 + $0x748] sm:$0xff]
        %v529 = vld [vmem:[#allocation5 + $0x750] sm:$0xff]
        %v530 = vld [vmem:[#allocation5 + $0x758] sm:$0xff]
        %v531 = vld [vmem:[#allocation5 + $0x760] sm:$0xff]
        %v532 = vld [vmem:[#allocation5 + $0x768] sm:$0xff]
        %v533 = vld [vmem:[#allocation5 + $0x770] sm:$0xff]
        %v534 = vld [vmem:[#allocation5 + $0x780] sm:$0xff]
        %v535 = vld [vmem:[#allocation5 + $0x788] sm:$0xff]
        %v536 = vld [vmem:[#allocation5 + $0x790] sm:$0xff]
        %v537 = vld [vmem:[#allocation5 + $0x798] sm:$0xff]
        %v538 = vld [vmem:[#allocation5 + $0x7a0] sm:$0xff]
        %v539 = vld [vmem:[#allocation5 + $0x7a8] sm:$0xff]
        %v540 = vld [vmem:[#allocation5 + $0x7b0] sm:$0xff]
        %v541 = vld [vmem:[#allocation5 + $0x7b8] sm:$0xff]
        %v542 = vld [vmem:[#allocation5 + $0x7c0] sm:$0xff]
        %v543 = vld [vmem:[#allocation5 + $0x7c8] sm:$0xff]
        %v544 = vld [vmem:[#allocation5 + $0x7d0] sm:$0xff]
        %v545 = vld [vmem:[#allocation5 + $0x7d8] sm:$0xff]
        %v546 = vld [vmem:[#allocation5 + $0x7e0] sm:$0xff]
        %v547 = vld [vmem:[#allocation5 + $0x7e8] sm:$0xff]
        %v548 = vld [vmem:[#allocation5 + $0x7f8] sm:$0xff]
        %v549 = vld [vmem:[#allocation5 + $0x800] sm:$0xff]
        %v550 = vld [vmem:[#allocation5 + $0x808] sm:$0xff]
        %v551 = vld [vmem:[#allocation5 + $0x810] sm:$0xff]
        %v552 = vld [vmem:[#allocation5 + $0x818] sm:$0xff]
        %v553 = vld [vmem:[#allocation5 + $0x820] sm:$0xff]
        %v554 = vld [vmem:[#allocation5 + $0x828] sm:$0xff]
        %v555 = vld [vmem:[#allocation5 + $0x830] sm:$0xff]
        %v556 = vld [vmem:[#allocation5 + $0x838] sm:$0xff]
        %v557 = vld [vmem:[#allocation5 + $0x840] sm:$0xff]
        %v558 = vld [vmem:[#allocation5 + $0x848] sm:$0xff]
        %v559 = vld [vmem:[#allocation5 + $0x850] sm:$0xff]
        %v560 = vld [vmem:[#allocation5 + $0x858] sm:$0xff]
        %v561 = vld [vmem:[#allocation5 + $0x860] sm:$0xff]
        %v562 = vld [vmem:[#allocation5 + $0x870] sm:$0xff]
        %v563 = vld [vmem:[#allocation5 + $0x878] sm:$0xff]
        %v564 = vld [vmem:[#allocation5 + $0x880] sm:$0xff]
        %v565 = vld [vmem:[#allocation5 + $0x888] sm:$0xff]
        %v566 = vld [vmem:[#allocation5 + $0x890] sm:$0xff]
        %v567 = vld [vmem:[#allocation5 + $0x898] sm:$0xff]
        %v568 = vld [vmem:[#allocation5 + $0x8a0] sm:$0xff]
        %v569 = vld [vmem:[#allocation5 + $0x8a8] sm:$0xff]
        %v570 = vld [vmem:[#allocation5 + $0x8b0] sm:$0xff]
        %v571 = vld [vmem:[#allocation5 + $0x8b8] sm:$0xff]
        %v572 = vld [vmem:[#allocation5 + $0x8c0] sm:$0xff]
        %v573 = vld [vmem:[#allocation5 + $0x8c8] sm:$0xff]
        %v574 = vld [vmem:[#allocation5 + $0x8d0] sm:$0xff]
        %v575 = vld [vmem:[#allocation5 + $0x8d8] sm:$0xff]
        %v576 = vld [vmem:[#allocation5 + $0x8e8] sm:$0xff]
        %v577 = vld [vmem:[#allocation5 + $0x8f0] sm:$0xff]
        %v578 = vld [vmem:[#allocation5 + $0x8f8] sm:$0xff]
        %v579 = vld [vmem:[#allocation5 + $0x900] sm:$0xff]
        %v580 = vld [vmem:[#allocation5 + $0x908] sm:$0xff]
        %v581 = vld [vmem:[#allocation5 + $0x910] sm:$0xff]
        %v582 = vld [vmem:[#allocation5 + $0x918] sm:$0xff]
        %v583 = vld [vmem:[#allocation5 + $0x920] sm:$0xff]
        %v584 = vld [vmem:[#allocation5 + $0x928] sm:$0xff]
        %v585 = vld [vmem:[#allocation5 + $0x930] sm:$0xff]
        %v586 = vld [vmem:[#allocation5 + $0x938] sm:$0xff]
        %v587 = vld [vmem:[#allocation5 + $0x940] sm:$0xff]
        %v588 = vld [vmem:[#allocation5 + $0x948] sm:$0xff]
        %v589 = vld [vmem:[#allocation5 + $0x950] sm:$0xff]
        %v590 = vld [vmem:[#allocation5 + $0x960] sm:$0xff]
        %v591 = vld [vmem:[#allocation5 + $0x968] sm:$0xff]
        %v592 = vld [vmem:[#allocation5 + $0x970] sm:$0xff]
        %v593 = vld [vmem:[#allocation5 + $0x978] sm:$0xff]
        %v594 = vld [vmem:[#allocation5 + $0x980] sm:$0xff]
        %v595 = vld [vmem:[#allocation5 + $0x988] sm:$0xff]
        %v596 = vld [vmem:[#allocation5 + $0x990] sm:$0xff]
        %v597 = vld [vmem:[#allocation5 + $0x998] sm:$0xff]
        %v598 = vld [vmem:[#allocation5 + $0x9a0] sm:$0xff]
        %v599 = vld [vmem:[#allocation5 + $0x9a8] sm:$0xff]
        %v600 = vld [vmem:[#allocation5 + $0x9b0] sm:$0xff]
        %v601 = vld [vmem:[#allocation5 + $0x9b8] sm:$0xff]
        %v602 = vld [vmem:[#allocation5 + $0x9c0] sm:$0xff]
        %v603 = vld [vmem:[#allocation5 + $0x9c8] sm:$0xff]
        %v604 = vld [vmem:[#allocation5 + $0x9d8] sm:$0xff]
        %v605 = vld [vmem:[#allocation5 + $0x9e0] sm:$0xff]
        %v606 = vld [vmem:[#allocation5 + $0x9e8] sm:$0xff]
        %v607 = vld [vmem:[#allocation5 + $0x9f0] sm:$0xff]
        %v608 = vld [vmem:[#allocation5 + $0x9f8] sm:$0xff]
        %v609 = vld [vmem:[#allocation5 + $0xa00] sm:$0xff]
        %v610 = vld [vmem:[#allocation5 + $0xa08] sm:$0xff]
        %v611 = vld [vmem:[#allocation5 + $0xa10] sm:$0xff]
        %v612 = vld [vmem:[#allocation5 + $0xa18] sm:$0xff]
        %v613 = vld [vmem:[#allocation5 + $0xa20] sm:$0xff]
        %v614 = vld [vmem:[#allocation5 + $0xa28] sm:$0xff]
        %v615 = vld [vmem:[#allocation5 + $0xa30] sm:$0xff]
        %v616 = vld [vmem:[#allocation5 + $0xa38] sm:$0xff]
        %v617 = vld [vmem:[#allocation5 + $0xa40] sm:$0xff]
        %v618 = vld [vmem:[#allocation5 + $0xa50] sm:$0xff]
        %v619 = vld [vmem:[#allocation5 + $0xa58] sm:$0xff]
        %v620 = vld [vmem:[#allocation5 + $0xa60] sm:$0xff]
        %v621 = vld [vmem:[#allocation5 + $0xa68] sm:$0xff]
        %v622 = vld [vmem:[#allocation5 + $0xa70] sm:$0xff]
        %v623 = vld [vmem:[#allocation5 + $0xa78] sm:$0xff]
        %v624 = vld [vmem:[#allocation5 + $0xa80] sm:$0xff]
        %v625 = vld [vmem:[#allocation5 + $0xa88] sm:$0xff]
        %v626 = vld [vmem:[#allocation5 + $0xa90] sm:$0xff]
        %v627 = vld [vmem:[#allocation5 + $0xa98] sm:$0xff]
        %v628 = vld [vmem:[#allocation5 + $0xaa0] sm:$0xff]
        %v629 = vld [vmem:[#allocation5 + $0xaa8] sm:$0xff]
        %v630 = vld [vmem:[#allocation5 + $0xab0] sm:$0xff]
        %v631 = vld [vmem:[#allocation5 + $0xab8] sm:$0xff]
        %v632 = vld [vmem:[#allocation5 + $0xac8] sm:$0xff]
        %v633 = vld [vmem:[#allocation5 + $0xad0] sm:$0xff]
        %v634 = vld [vmem:[#allocation5 + $0xad8] sm:$0xff]
        %v635 = vld [vmem:[#allocation5 + $0xae0] sm:$0xff]
        %v636 = vld [vmem:[#allocation5 + $0xae8] sm:$0xff]
        %v637 = vld [vmem:[#allocation5 + $0xaf0] sm:$0xff]
        %v638 = vld [vmem:[#allocation5 + $0xaf8] sm:$0xff]
        %v639 = vld [vmem:[#allocation5 + $0xb00] sm:$0xff]
        %v640 = vld [vmem:[#allocation5 + $0xb08] sm:$0xff]
        %v641 = vld [vmem:[#allocation5 + $0xb10] sm:$0xff]
        %v642 = vld [vmem:[#allocation5 + $0xb18] sm:$0xff]
        %v643 = vld [vmem:[#allocation5 + $0xb20] sm:$0xff]
        %v644 = vld [vmem:[#allocation5 + $0xb28] sm:$0xff]
        %v645 = vld [vmem:[#allocation5 + $0xb30] sm:$0xff]
        %v646 = vld [vmem:[#allocation5 + $0xb40] sm:$0xff]
        %v647 = vld [vmem:[#allocation5 + $0xb48] sm:$0xff]
        %v648 = vld [vmem:[#allocation5 + $0xb50] sm:$0xff]
        %v649 = vld [vmem:[#allocation5 + $0xb58] sm:$0xff]
        %v650 = vld [vmem:[#allocation5 + $0xb60] sm:$0xff]
        %v651 = vld [vmem:[#allocation5 + $0xb68] sm:$0xff]
        %v652 = vld [vmem:[#allocation5 + $0xb70] sm:$0xff]
        %v653 = vld [vmem:[#allocation5 + $0xb78] sm:$0xff]
        %v654 = vld [vmem:[#allocation5 + $0xb80] sm:$0xff]
        %v655 = vld [vmem:[#allocation5 + $0xb88] sm:$0xff]
        %v656 = vld [vmem:[#allocation5 + $0xb90] sm:$0xff]
        %v657 = vld [vmem:[#allocation5 + $0xb98] sm:$0xff]
        %v658 = vld [vmem:[#allocation5 + $0xba0] sm:$0xff]
        %v659 = vld [vmem:[#allocation5 + $0xba8] sm:$0xff]
        %v660 = vld [vmem:[#allocation5 + $0xbb8] sm:$0xff]
        %v661 = vld [vmem:[#allocation5 + $0xbc0] sm:$0xff]
        %v662 = vld [vmem:[#allocation5 + $0xbc8] sm:$0xff]
        %v663 = vld [vmem:[#allocation5 + $0xbd0] sm:$0xff]
        %v664 = vld [vmem:[#allocation5 + $0xbd8] sm:$0xff]
        %v665 = vld [vmem:[#allocation5 + $0xbe0] sm:$0xff]
        %v666 = vld [vmem:[#allocation5 + $0xbe8] sm:$0xff]
        %v667 = vld [vmem:[#allocation5 + $0xbf0] sm:$0xff]
        %v668 = vld [vmem:[#allocation5 + $0xbf8] sm:$0xff]
        %v669 = vld [vmem:[#allocation5 + $0xc00] sm:$0xff]
        %v670 = vld [vmem:[#allocation5 + $0xc08] sm:$0xff]
        %v671 = vld [vmem:[#allocation5 + $0xc10] sm:$0xff]
        %v672 = vld [vmem:[#allocation5 + $0xc18] sm:$0xff]
        %v673 = vld [vmem:[#allocation5 + $0xc20] sm:$0xff]
        %v674 = vld [vmem:[#allocation5 + $0xc30] sm:$0xff]
        %v675 = vld [vmem:[#allocation5 + $0xc38] sm:$0xff]
        %v676 = vld [vmem:[#allocation5 + $0xc40] sm:$0xff]
        %v677 = vld [vmem:[#allocation5 + $0xc48] sm:$0xff]
        %v678 = vld [vmem:[#allocation5 + $0xc50] sm:$0xff]
        %v679 = vld [vmem:[#allocation5 + $0xc58] sm:$0xff]
        %v680 = vld [vmem:[#allocation5 + $0xc60] sm:$0xff]
        %v681 = vld [vmem:[#allocation5 + $0xc68] sm:$0xff]
        %v682 = vld [vmem:[#allocation5 + $0xc70] sm:$0xff]
        %v683 = vld [vmem:[#allocation5 + $0xc78] sm:$0xff]
        %v684 = vld [vmem:[#allocation5 + $0xc80] sm:$0xff]
        %v685 = vld [vmem:[#allocation5 + $0xc88] sm:$0xff]
        %v686 = vld [vmem:[#allocation5 + $0xc90] sm:$0xff]
        %v687 = vld [vmem:[#allocation5 + $0xc98] sm:$0xff]
        %v688 = vld [vmem:[#allocation5 + $0xca8] sm:$0xff]
        %v689 = vld [vmem:[#allocation5 + $0xcb0] sm:$0xff]
        %v690 = vld [vmem:[#allocation5 + $0xcb8] sm:$0xff]
        %v691 = vld [vmem:[#allocation5 + $0xcc0] sm:$0xff]
        %v692 = vld [vmem:[#allocation5 + $0xcc8] sm:$0xff]
        %v693 = vld [vmem:[#allocation5 + $0xcd0] sm:$0xff]
        %v694 = vld [vmem:[#allocation5 + $0xcd8] sm:$0xff]
        %v695 = vld [vmem:[#allocation5 + $0xce0] sm:$0xff]
        %v696 = vld [vmem:[#allocation5 + $0xce8] sm:$0xff]
        %v697 = vld [vmem:[#allocation5 + $0xcf0] sm:$0xff]
        %v698 = vld [vmem:[#allocation5 + $0xcf8] sm:$0xff]
        %v699 = vld [vmem:[#allocation5 + $0xd00] sm:$0xff]
        %v700 = vld [vmem:[#allocation5 + $0xd08] sm:$0xff]
        %v701 = vld [vmem:[#allocation5 + $0xd10] sm:$0xff]
        %v702 = vld [vmem:[#allocation5 + $0xd20] sm:$0xff]
        %v703 = vld [vmem:[#allocation5 + $0xd28] sm:$0xff]
        %v704 = vld [vmem:[#allocation5 + $0xd30] sm:$0xff]
        %v705 = vld [vmem:[#allocation5 + $0xd38] sm:$0xff]
        %v706 = vld [vmem:[#allocation5 + $0xd40] sm:$0xff]
        %v707 = vld [vmem:[#allocation5 + $0xd48] sm:$0xff]
        %v708 = vld [vmem:[#allocation5 + $0xd50] sm:$0xff]
        %v709 = vld [vmem:[#allocation5 + $0xd58] sm:$0xff]
        %v710 = vld [vmem:[#allocation5 + $0xd60] sm:$0xff]
        %v711 = vld [vmem:[#allocation5 + $0xd68] sm:$0xff]
        %v712 = vld [vmem:[#allocation5 + $0xd70] sm:$0xff]
        %v713 = vld [vmem:[#allocation5 + $0xd78] sm:$0xff]
        %v714 = vld [vmem:[#allocation5 + $0xd80] sm:$0xff]
        %v715 = vld [vmem:[#allocation5 + $0xd88] sm:$0xff]
        %v716 = vld [vmem:[#allocation5 + $0xd98] sm:$0xff]
        %v717 = vld [vmem:[#allocation5 + $0xda0] sm:$0xff]
        %v718 = vld [vmem:[#allocation5 + $0xda8] sm:$0xff]
        %v719 = vld [vmem:[#allocation5 + $0xdb0] sm:$0xff]
        %v720 = vld [vmem:[#allocation5 + $0xdb8] sm:$0xff]
        %v721 = vld [vmem:[#allocation5 + $0xdc0] sm:$0xff]
        %v722 = vld [vmem:[#allocation5 + $0xdc8] sm:$0xff]
        %v723 = vld [vmem:[#allocation5 + $0xdd0] sm:$0xff]
        %v724 = vld [vmem:[#allocation5 + $0xdd8] sm:$0xff]
        %v725 = vld [vmem:[#allocation5 + $0xde0] sm:$0xff]
        %v726 = vld [vmem:[#allocation5 + $0xde8] sm:$0xff]
        %v727 = vld [vmem:[#allocation5 + $0xdf0] sm:$0xff]
        %v728 = vld [vmem:[#allocation5 + $0xdf8] sm:$0xff]
        %v729 = vld [vmem:[#allocation5 + $0xe00] sm:$0xff]
        %v730 = vld [vmem:[#allocation5 + $0xe10] sm:$0xff]
        %v731 = vld [vmem:[#allocation5 + $0xe18] sm:$0xff]
        %v732 = vld [vmem:[#allocation5 + $0xe20] sm:$0xff]
        %v733 = vld [vmem:[#allocation5 + $0xe28] sm:$0xff]
        %v734 = vld [vmem:[#allocation5 + $0xe30] sm:$0xff]
        %v735 = vld [vmem:[#allocation5 + $0xe38] sm:$0xff]
        %v736 = vld [vmem:[#allocation5 + $0xe40] sm:$0xff]
        %v737 = vld [vmem:[#allocation5 + $0xe48] sm:$0xff]
        %v738 = vld [vmem:[#allocation5 + $0xe50] sm:$0xff]
        %v739 = vld [vmem:[#allocation5 + $0xe58] sm:$0xff]
        %v740 = vld [vmem:[#allocation5 + $0xe60] sm:$0xff]
        %v741 = vld [vmem:[#allocation5 + $0xe68] sm:$0xff]
        %v742 = vld [vmem:[#allocation5 + $0xe70] sm:$0xff]
        %v743 = vld [vmem:[#allocation5 + $0xe78] sm:$0xff]
        %v744 = vld [vmem:[#allocation5 + $0xe88] sm:$0xff]
        %v745 = vld [vmem:[#allocation5 + $0xe90] sm:$0xff]
        %v746 = vld [vmem:[#allocation5 + $0xe98] sm:$0xff]
        %v747 = vld [vmem:[#allocation5 + $0xea0] sm:$0xff]
        %v748 = vld [vmem:[#allocation5 + $0xea8] sm:$0xff]
        %v749 = vld [vmem:[#allocation5 + $0xeb0] sm:$0xff]
        %v750 = vld [vmem:[#allocation5 + $0xeb8] sm:$0xff]
        %v751 = vld [vmem:[#allocation5 + $0xec0] sm:$0xff]
        %v752 = vld [vmem:[#allocation5 + $0xec8] sm:$0xff]
        %v753 = vld [vmem:[#allocation5 + $0xed0] sm:$0xff]
        %v754 = vld [vmem:[#allocation5 + $0xed8] sm:$0xff]
        %v755 = vld [vmem:[#allocation5 + $0xee0] sm:$0xff]
        %v756 = vld [vmem:[#allocation5 + $0xee8] sm:$0xff]
        %v757 = vld [vmem:[#allocation5 + $0xef0] sm:$0xff]
        %v758 = vld [vmem:[#allocation10] sm:$0xff]
        %v759 = vld [vmem:[#allocation10 + $0x8] sm:$0x3f]
        %v762 = vlaneseq
        %v763 = vshrl.u32 %v762, 7
        %v764 = vsub.s32 0, %v763
        %v765 = vrot.slane %v758, %v764
        %v766 = vlaneseq
        %v767 = vshrl.u32 %v766, 7
        %v768 = vsub.s32 1, %v767
        %v769 = vrot.slane %v758, %v768
        %v770 = vlaneseq
        %v771 = vshrl.u32 %v770, 7
        %v772 = vsub.s32 2, %v771
        %v773 = vrot.slane %v758, %v772
        %v774 = vlaneseq
        %v775 = vshrl.u32 %v774, 7
        %v776 = vsub.s32 3, %v775
        %v777 = vrot.slane %v758, %v776
        %v778 = vlaneseq
        %v779 = vshrl.u32 %v778, 7
        %v780 = vsub.s32 4, %v779
        %v781 = vrot.slane %v758, %v780
        %v782 = vlaneseq
        %v783 = vshrl.u32 %v782, 7
        %v784 = vsub.s32 5, %v783
        %v785 = vrot.slane %v758, %v784
        %v786 = vlaneseq
        %v787 = vshrl.u32 %v786, 7
        %v788 = vsub.s32 6, %v787
        %v789 = vrot.slane %v758, %v788
        %v790 = vlaneseq
        %v791 = vshrl.u32 %v790, 7
        %v792 = vsub.s32 7, %v791
        %v793 = vrot.slane %v758, %v792
        %v794 = vlaneseq
        %v795 = vshrl.u32 %v794, 7
        %v796 = vsub.s32 0, %v795
        %v797 = vrot.slane %v759, %v796
        %v798 = vlaneseq
        %v799 = vshrl.u32 %v798, 7
        %v800 = vsub.s32 1, %v799
        %v801 = vrot.slane %v759, %v800
        %v802 = vlaneseq
        %v803 = vshrl.u32 %v802, 7
        %v804 = vsub.s32 2, %v803
        %v805 = vrot.slane %v759, %v804
        %v806 = vlaneseq
        %v807 = vshrl.u32 %v806, 7
        %v808 = vsub.s32 3, %v807
        %v809 = vrot.slane %v759, %v808
        %v810 = vlaneseq
        %v811 = vshrl.u32 %v810, 7
        %v812 = vsub.s32 4, %v811
        %v813 = vrot.slane %v759, %v812
        %v814 = vlaneseq
        %v815 = vshrl.u32 %v814, 7
        %v816 = vsub.s32 5, %v815
        %v817 = vrot.slane %v759, %v816
        %832 = vmatprep.subr.mxu0 %v521
        %833 = vmatpush1.msra.mxu0 %v520
        %834 = vmatprep.subr.mxu0 %v507
        %835 = vmatpush1.msra.mxu0 %v506
        %836 = vmatprep.subr.mxu0 %v493
        %837 = vmatpush1.msra.mxu0 %v492
        %838 = vmatprep.subr.mxu0 %v479
        %839 = vmatpush1.msra.mxu0 %v478
        %840 = vmatprep.subr.mxu0 %v465
        %841 = vmatpush1.msra.mxu0 %v464
        %842 = vmatprep.subr.mxu0 %v451
        %843 = vmatpush1.msra.mxu0 %v450
        %844 = vmatprep.subr.mxu0 %v437
        %845 = vmatpush1.msra.mxu0 %v436
        %846 = vmatprep.subr.mxu0 %v423
        %847 = vmatpush1.msra.mxu0 %v422
        %848 = vmatprep.subr.mxu0 %v409
        %849 = vmatpush1.msra.mxu0 %v408
        %850 = vmatprep.subr.mxu0 %v395
        %851 = vmatpush1.msra.mxu0 %v394
        %852 = vmatprep.subr.mxu0 %v381
        %853 = vmatpush1.msra.mxu0 %v380
        %854 = vmatprep.subr.mxu0 %v367
        %855 = vmatpush1.msra.mxu0 %v366
        %856 = vmatprep.subr.mxu0 %v353
        %857 = vmatpush1.msra.mxu0 %v352
        %858 = vmatprep.subr.mxu0 %v339
        %859 = vmatpush1.msra.mxu0 %v338
        %860 = vmatprep.subr.mxu0 %v325
        %861 = vmatpush1.msra.mxu0 %v324
        %862 = vmatprep.subr.mxu0 %v311
        %863 = vmatpush1.msra.mxu0 %v310
        %864 = vmatprep.subr.mxu0 %v745
        %865 = vmatpush2.msra.mxu0 %v744
        %866 = vmatprep.subr.mxu0 %v731
        %867 = vmatpush2.msra.mxu0 %v730
        %868 = vmatprep.subr.mxu0 %v717
        %869 = vmatpush2.msra.mxu0 %v716
        %870 = vmatprep.subr.mxu0 %v703
        %871 = vmatpush2.msra.mxu0 %v702
        %872 = vmatprep.subr.mxu0 %v689
        %873 = vmatpush2.msra.mxu0 %v688
        %874 = vmatprep.subr.mxu0 %v675
        %875 = vmatpush2.msra.mxu0 %v674
        %876 = vmatprep.subr.mxu0 %v661
        %877 = vmatpush2.msra.mxu0 %v660
        %878 = vmatprep.subr.mxu0 %v647
        %879 = vmatpush2.msra.mxu0 %v646
        %880 = vmatprep.subr.mxu0 %v633
        %881 = vmatpush2.msra.mxu0 %v632
        %882 = vmatprep.subr.mxu0 %v619
        %883 = vmatpush2.msra.mxu0 %v618
        %884 = vmatprep.subr.mxu0 %v605
        %885 = vmatpush2.msra.mxu0 %v604
        %886 = vmatprep.subr.mxu0 %v591
        %887 = vmatpush2.msra.mxu0 %v590
        %888 = vmatprep.subr.mxu0 %v577
        %889 = vmatpush2.msra.mxu0 %v576
        %890 = vmatprep.subr.mxu0 %v563
        %891 = vmatpush2.msra.mxu0 %v562
        %892 = vmatprep.subr.mxu0 %v549
        %893 = vmatpush2.msra.mxu0 %v548
        %894 = vmatprep.subr.mxu0 %v535
        %895 = vmatpush2.msra.mxu0 %v534
        %896 = vmatprep.mubr.f32.mxu0 %v303
        %897 = vmatmul.mubr.f32.gmra.mxu0 %v302
        %v898 = vpop.f32.mrf.mxu0
        %v899 = vadd.f32 %v765, %v898
        %v900 = vpop.f32.mrf.mxu0
        %v901 = vadd.f32 %v769, %v900
        %902 = vmatprep.mubr.f32.mxu0 %v305
        %903 = vmatmul.mubr.f32.gmra.mxu0 %v304
        %v904 = vpop.f32.mrf.mxu0
        %v905 = vadd.f32 %v765, %v904
        %v906 = vpop.f32.mrf.mxu0
        %v907 = vadd.f32 %v769, %v906
        %908 = vmatprep.mubr.f32.mxu0 %v307
        %909 = vmatmul.mubr.f32.gmra.mxu0 %v306
        %v910 = vpop.f32.mrf.mxu0
        %v911 = vadd.f32 %v765, %v910
        %v912 = vpop.f32.mrf.mxu0
        %v913 = vadd.f32 %v769, %v912
        %914 = vmatprep.mubr.f32.mxu0 %v309
        %915 = vmatmul.mubr.f32.gmra.mxu0 %v308
        %v916 = vpop.f32.mrf.mxu0
        %v917 = vadd.f32 %v765, %v916
        %v918 = vpop.f32.mrf.mxu0
        %v919 = vadd.f32 %v769, %v918
        %920 = vdwg.mxu0
        %921 = vmatprep.subr.mxu0 %v523
        %922 = vmatpush1.msra.mxu0 %v522
        %923 = vmatprep.subr.mxu0 %v509
        %924 = vmatpush1.msra.mxu0 %v508
        %925 = vmatprep.subr.mxu0 %v495
        %926 = vmatpush1.msra.mxu0 %v494
        %927 = vmatprep.subr.mxu0 %v481
        %928 = vmatpush1.msra.mxu0 %v480
        %929 = vmatprep.subr.mxu0 %v467
        %930 = vmatpush1.msra.mxu0 %v466
        %931 = vmatprep.subr.mxu0 %v453
        %932 = vmatpush1.msra.mxu0 %v452
        %933 = vmatprep.subr.mxu0 %v439
        %934 = vmatpush1.msra.mxu0 %v438
        %935 = vmatprep.subr.mxu0 %v425
        %936 = vmatpush1.msra.mxu0 %v424
        %937 = vmatprep.subr.mxu0 %v411
        %938 = vmatpush1.msra.mxu0 %v410
        %939 = vmatprep.subr.mxu0 %v397
        %940 = vmatpush1.msra.mxu0 %v396
        %941 = vmatprep.subr.mxu0 %v383
        %942 = vmatpush1.msra.mxu0 %v382
        %943 = vmatprep.subr.mxu0 %v369
        %944 = vmatpush1.msra.mxu0 %v368
        %945 = vmatprep.subr.mxu0 %v355
        %946 = vmatpush1.msra.mxu0 %v354
        %947 = vmatprep.subr.mxu0 %v341
        %948 = vmatpush1.msra.mxu0 %v340
        %949 = vmatprep.subr.mxu0 %v327
        %950 = vmatpush1.msra.mxu0 %v326
        %951 = vmatprep.subr.mxu0 %v313
        %952 = vmatpush1.msra.mxu0 %v312
        %953 = vmatprep.subr.mxu0 %v747
        %954 = vmatpush2.msra.mxu0 %v746
        %955 = vmatprep.subr.mxu0 %v733
        %956 = vmatpush2.msra.mxu0 %v732
        %957 = vmatprep.subr.mxu0 %v719
        %958 = vmatpush2.msra.mxu0 %v718
        %959 = vmatprep.subr.mxu0 %v705
        %960 = vmatpush2.msra.mxu0 %v704
        %961 = vmatprep.subr.mxu0 %v691
        %962 = vmatpush2.msra.mxu0 %v690
        %963 = vmatprep.subr.mxu0 %v677
        %964 = vmatpush2.msra.mxu0 %v676
        %965 = vmatprep.subr.mxu0 %v663
        %966 = vmatpush2.msra.mxu0 %v662
        %967 = vmatprep.subr.mxu0 %v649
        %968 = vmatpush2.msra.mxu0 %v648
        %969 = vmatprep.subr.mxu0 %v635
        %970 = vmatpush2.msra.mxu0 %v634
        %971 = vmatprep.subr.mxu0 %v621
        %972 = vmatpush2.msra.mxu0 %v620
        %973 = vmatprep.subr.mxu0 %v607
        %974 = vmatpush2.msra.mxu0 %v606
        %975 = vmatprep.subr.mxu0 %v593
        %976 = vmatpush2.msra.mxu0 %v592
        %977 = vmatprep.subr.mxu0 %v579
        %978 = vmatpush2.msra.mxu0 %v578
        %979 = vmatprep.subr.mxu0 %v565
        %980 = vmatpush2.msra.mxu0 %v564
        %981 = vmatprep.subr.mxu0 %v551
        %982 = vmatpush2.msra.mxu0 %v550
        %983 = vmatprep.subr.mxu0 %v537
        %984 = vmatpush2.msra.mxu0 %v536
        %985 = vmatprep.mubr.f32.mxu0 %v303
        %986 = vmatmul.mubr.f32.gmra.mxu0 %v302
        %v987 = vpop.f32.mrf.mxu0
        %v988 = vadd.f32 %v773, %v987
        %v989 = vpop.f32.mrf.mxu0
        %v990 = vadd.f32 %v777, %v989
        %991 = vmatprep.mubr.f32.mxu0 %v305
        %992 = vmatmul.mubr.f32.gmra.mxu0 %v304
        %v993 = vpop.f32.mrf.mxu0
        %v994 = vadd.f32 %v773, %v993
        %v995 = vpop.f32.mrf.mxu0
        %v996 = vadd.f32 %v777, %v995
        %997 = vmatprep.mubr.f32.mxu0 %v307
        %998 = vmatmul.mubr.f32.gmra.mxu0 %v306
        %v999 = vpop.f32.mrf.mxu0
        %v1000 = vadd.f32 %v773, %v999
        %v1001 = vpop.f32.mrf.mxu0
        %v1002 = vadd.f32 %v777, %v1001
        %1003 = vmatprep.mubr.f32.mxu0 %v309
        %1004 = vmatmul.mubr.f32.gmra.mxu0 %v308
        %v1005 = vpop.f32.mrf.mxu0
        %v1006 = vadd.f32 %v773, %v1005
        %v1007 = vpop.f32.mrf.mxu0
        %v1008 = vadd.f32 %v777, %v1007
        %1009 = vdwg.mxu0
        %1010 = vmatprep.subr.mxu0 %v525
        %1011 = vmatpush1.msra.mxu0 %v524
        %1012 = vmatprep.subr.mxu0 %v511
        %1013 = vmatpush1.msra.mxu0 %v510
        %1014 = vmatprep.subr.mxu0 %v497
        %1015 = vmatpush1.msra.mxu0 %v496
        %1016 = vmatprep.subr.mxu0 %v483
        %1017 = vmatpush1.msra.mxu0 %v482
        %1018 = vmatprep.subr.mxu0 %v469
        %1019 = vmatpush1.msra.mxu0 %v468
        %1020 = vmatprep.subr.mxu0 %v455
        %1021 = vmatpush1.msra.mxu0 %v454
        %1022 = vmatprep.subr.mxu0 %v441
        %1023 = vmatpush1.msra.mxu0 %v440
        %1024 = vmatprep.subr.mxu0 %v427
        %1025 = vmatpush1.msra.mxu0 %v426
        %1026 = vmatprep.subr.mxu0 %v413
        %1027 = vmatpush1.msra.mxu0 %v412
        %1028 = vmatprep.subr.mxu0 %v399
        %1029 = vmatpush1.msra.mxu0 %v398
        %1030 = vmatprep.subr.mxu0 %v385
        %1031 = vmatpush1.msra.mxu0 %v384
        %1032 = vmatprep.subr.mxu0 %v371
        %1033 = vmatpush1.msra.mxu0 %v370
        %1034 = vmatprep.subr.mxu0 %v357
        %1035 = vmatpush1.msra.mxu0 %v356
        %1036 = vmatprep.subr.mxu0 %v343
        %1037 = vmatpush1.msra.mxu0 %v342
        %1038 = vmatprep.subr.mxu0 %v329
        %1039 = vmatpush1.msra.mxu0 %v328
        %1040 = vmatprep.subr.mxu0 %v315
        %1041 = vmatpush1.msra.mxu0 %v314
        %1042 = vmatprep.subr.mxu0 %v749
        %1043 = vmatpush2.msra.mxu0 %v748
        %1044 = vmatprep.subr.mxu0 %v735
        %1045 = vmatpush2.msra.mxu0 %v734
        %1046 = vmatprep.subr.mxu0 %v721
        %1047 = vmatpush2.msra.mxu0 %v720
        %1048 = vmatprep.subr.mxu0 %v707
        %1049 = vmatpush2.msra.mxu0 %v706
        %1050 = vmatprep.subr.mxu0 %v693
        %1051 = vmatpush2.msra.mxu0 %v692
        %1052 = vmatprep.subr.mxu0 %v679
        %1053 = vmatpush2.msra.mxu0 %v678
        %1054 = vmatprep.subr.mxu0 %v665
        %1055 = vmatpush2.msra.mxu0 %v664
        %1056 = vmatprep.subr.mxu0 %v651
        %1057 = vmatpush2.msra.mxu0 %v650
        %1058 = vmatprep.subr.mxu0 %v637
        %1059 = vmatpush2.msra.mxu0 %v636
        %1060 = vmatprep.subr.mxu0 %v623
        %1061 = vmatpush2.msra.mxu0 %v622
        %1062 = vmatprep.subr.mxu0 %v609
        %1063 = vmatpush2.msra.mxu0 %v608
        %1064 = vmatprep.subr.mxu0 %v595
        %1065 = vmatpush2.msra.mxu0 %v594
        %1066 = vmatprep.subr.mxu0 %v581
        %1067 = vmatpush2.msra.mxu0 %v580
        %1068 = vmatprep.subr.mxu0 %v567
        %1069 = vmatpush2.msra.mxu0 %v566
        %1070 = vmatprep.subr.mxu0 %v553
        %1071 = vmatpush2.msra.mxu0 %v552
        %1072 = vmatprep.subr.mxu0 %v539
        %1073 = vmatpush2.msra.mxu0 %v538
        %1074 = vmatprep.mubr.f32.mxu0 %v303
        %1075 = vmatmul.mubr.f32.gmra.mxu0 %v302
        %v1076 = vpop.f32.mrf.mxu0
        %v1077 = vadd.f32 %v781, %v1076
        %v1078 = vpop.f32.mrf.mxu0
        %v1079 = vadd.f32 %v785, %v1078
        %1080 = vmatprep.mubr.f32.mxu0 %v305
        %1081 = vmatmul.mubr.f32.gmra.mxu0 %v304
        %v1082 = vpop.f32.mrf.mxu0
        %v1083 = vadd.f32 %v781, %v1082
        %v1084 = vpop.f32.mrf.mxu0
        %v1085 = vadd.f32 %v785, %v1084
        %1086 = vmatprep.mubr.f32.mxu0 %v307
        %1087 = vmatmul.mubr.f32.gmra.mxu0 %v306
        %v1088 = vpop.f32.mrf.mxu0
        %v1089 = vadd.f32 %v781, %v1088
        %v1090 = vpop.f32.mrf.mxu0
        %v1091 = vadd.f32 %v785, %v1090
        %1092 = vmatprep.mubr.f32.mxu0 %v309
        %1093 = vmatmul.mubr.f32.gmra.mxu0 %v308
        %v1094 = vpop.f32.mrf.mxu0
        %v1095 = vadd.f32 %v781, %v1094
        %v1096 = vpop.f32.mrf.mxu0
        %v1097 = vadd.f32 %v785, %v1096
        %1098 = vdwg.mxu0
        %1099 = vmatprep.subr.mxu0 %v527
        %1100 = vmatpush1.msra.mxu0 %v526
        %1101 = vmatprep.subr.mxu0 %v513
        %1102 = vmatpush1.msra.mxu0 %v512
        %1103 = vmatprep.subr.mxu0 %v499
        %1104 = vmatpush1.msra.mxu0 %v498
        %1105 = vmatprep.subr.mxu0 %v485
        %1106 = vmatpush1.msra.mxu0 %v484
        %1107 = vmatprep.subr.mxu0 %v471
        %1108 = vmatpush1.msra.mxu0 %v470
        %1109 = vmatprep.subr.mxu0 %v457
        %1110 = vmatpush1.msra.mxu0 %v456
        %1111 = vmatprep.subr.mxu0 %v443
        %1112 = vmatpush1.msra.mxu0 %v442
        %1113 = vmatprep.subr.mxu0 %v429
        %1114 = vmatpush1.msra.mxu0 %v428
        %1115 = vmatprep.subr.mxu0 %v415
        %1116 = vmatpush1.msra.mxu0 %v414
        %1117 = vmatprep.subr.mxu0 %v401
        %1118 = vmatpush1.msra.mxu0 %v400
        %1119 = vmatprep.subr.mxu0 %v387
        %1120 = vmatpush1.msra.mxu0 %v386
        %1121 = vmatprep.subr.mxu0 %v373
        %1122 = vmatpush1.msra.mxu0 %v372
        %1123 = vmatprep.subr.mxu0 %v359
        %1124 = vmatpush1.msra.mxu0 %v358
        %1125 = vmatprep.subr.mxu0 %v345
        %1126 = vmatpush1.msra.mxu0 %v344
        %1127 = vmatprep.subr.mxu0 %v331
        %1128 = vmatpush1.msra.mxu0 %v330
        %1129 = vmatprep.subr.mxu0 %v317
        %1130 = vmatpush1.msra.mxu0 %v316
        %1131 = vmatprep.subr.mxu0 %v751
        %1132 = vmatpush2.msra.mxu0 %v750
        %1133 = vmatprep.subr.mxu0 %v737
        %1134 = vmatpush2.msra.mxu0 %v736
        %1135 = vmatprep.subr.mxu0 %v723
        %1136 = vmatpush2.msra.mxu0 %v722
        %1137 = vmatprep.subr.mxu0 %v709
        %1138 = vmatpush2.msra.mxu0 %v708
        %1139 = vmatprep.subr.mxu0 %v695
        %1140 = vmatpush2.msra.mxu0 %v694
        %1141 = vmatprep.subr.mxu0 %v681
        %1142 = vmatpush2.msra.mxu0 %v680
        %1143 = vmatprep.subr.mxu0 %v667
        %1144 = vmatpush2.msra.mxu0 %v666
        %1145 = vmatprep.subr.mxu0 %v653
        %1146 = vmatpush2.msra.mxu0 %v652
        %1147 = vmatprep.subr.mxu0 %v639
        %1148 = vmatpush2.msra.mxu0 %v638
        %1149 = vmatprep.subr.mxu0 %v625
        %1150 = vmatpush2.msra.mxu0 %v624
        %1151 = vmatprep.subr.mxu0 %v611
        %1152 = vmatpush2.msra.mxu0 %v610
        %1153 = vmatprep.subr.mxu0 %v597
        %1154 = vmatpush2.msra.mxu0 %v596
        %1155 = vmatprep.subr.mxu0 %v583
        %1156 = vmatpush2.msra.mxu0 %v582
        %1157 = vmatprep.subr.mxu0 %v569
        %1158 = vmatpush2.msra.mxu0 %v568
        %1159 = vmatprep.subr.mxu0 %v555
        %1160 = vmatpush2.msra.mxu0 %v554
        %1161 = vmatprep.subr.mxu0 %v541
        %1162 = vmatpush2.msra.mxu0 %v540
        %1163 = vmatprep.mubr.f32.mxu0 %v303
        %1164 = vmatmul.mubr.f32.gmra.mxu0 %v302
        %v1165 = vpop.f32.mrf.mxu0
        %v1166 = vadd.f32 %v789, %v1165
        %v1167 = vpop.f32.mrf.mxu0
        %v1168 = vadd.f32 %v793, %v1167
        %1169 = vmatprep.mubr.f32.mxu0 %v305
        %1170 = vmatmul.mubr.f32.gmra.mxu0 %v304
        %v1171 = vpop.f32.mrf.mxu0
        %v1172 = vadd.f32 %v789, %v1171
        %v1173 = vpop.f32.mrf.mxu0
        %v1174 = vadd.f32 %v793, %v1173
        %1175 = vmatprep.mubr.f32.mxu0 %v307
        %1176 = vmatmul.mubr.f32.gmra.mxu0 %v306
        %v1177 = vpop.f32.mrf.mxu0
        %v1178 = vadd.f32 %v789, %v1177
        %v1179 = vpop.f32.mrf.mxu0
        %v1180 = vadd.f32 %v793, %v1179
        %1181 = vmatprep.mubr.f32.mxu0 %v309
        %1182 = vmatmul.mubr.f32.gmra.mxu0 %v308
        %v1183 = vpop.f32.mrf.mxu0
        %v1184 = vadd.f32 %v789, %v1183
        %v1185 = vpop.f32.mrf.mxu0
        %v1186 = vadd.f32 %v793, %v1185
        %1187 = vdwg.mxu0
        %1188 = vmatprep.subr.mxu0 %v529
        %1189 = vmatpush1.msra.mxu0 %v528
        %1190 = vmatprep.subr.mxu0 %v515
        %1191 = vmatpush1.msra.mxu0 %v514
        %1192 = vmatprep.subr.mxu0 %v501
        %1193 = vmatpush1.msra.mxu0 %v500
        %1194 = vmatprep.subr.mxu0 %v487
        %1195 = vmatpush1.msra.mxu0 %v486
        %1196 = vmatprep.subr.mxu0 %v473
        %1197 = vmatpush1.msra.mxu0 %v472
        %1198 = vmatprep.subr.mxu0 %v459
        %1199 = vmatpush1.msra.mxu0 %v458
        %1200 = vmatprep.subr.mxu0 %v445
        %1201 = vmatpush1.msra.mxu0 %v444
        %1202 = vmatprep.subr.mxu0 %v431
        %1203 = vmatpush1.msra.mxu0 %v430
        %1204 = vmatprep.subr.mxu0 %v417
        %1205 = vmatpush1.msra.mxu0 %v416
        %1206 = vmatprep.subr.mxu0 %v403
        %1207 = vmatpush1.msra.mxu0 %v402
        %1208 = vmatprep.subr.mxu0 %v389
        %1209 = vmatpush1.msra.mxu0 %v388
        %1210 = vmatprep.subr.mxu0 %v375
        %1211 = vmatpush1.msra.mxu0 %v374
        %1212 = vmatprep.subr.mxu0 %v361
        %1213 = vmatpush1.msra.mxu0 %v360
        %1214 = vmatprep.subr.mxu0 %v347
        %1215 = vmatpush1.msra.mxu0 %v346
        %1216 = vmatprep.subr.mxu0 %v333
        %1217 = vmatpush1.msra.mxu0 %v332
        %1218 = vmatprep.subr.mxu0 %v319
        %1219 = vmatpush1.msra.mxu0 %v318
        %1220 = vmatprep.subr.mxu0 %v753
        %1221 = vmatpush2.msra.mxu0 %v752
        %1222 = vmatprep.subr.mxu0 %v739
        %1223 = vmatpush2.msra.mxu0 %v738
        %1224 = vmatprep.subr.mxu0 %v725
        %1225 = vmatpush2.msra.mxu0 %v724
        %1226 = vmatprep.subr.mxu0 %v711
        %1227 = vmatpush2.msra.mxu0 %v710
        %1228 = vmatprep.subr.mxu0 %v697
        %1229 = vmatpush2.msra.mxu0 %v696
        %1230 = vmatprep.subr.mxu0 %v683
        %1231 = vmatpush2.msra.mxu0 %v682
        %1232 = vmatprep.subr.mxu0 %v669
        %1233 = vmatpush2.msra.mxu0 %v668
        %1234 = vmatprep.subr.mxu0 %v655
        %1235 = vmatpush2.msra.mxu0 %v654
        %1236 = vmatprep.subr.mxu0 %v641
        %1237 = vmatpush2.msra.mxu0 %v640
        %1238 = vmatprep.subr.mxu0 %v627
        %1239 = vmatpush2.msra.mxu0 %v626
        %1240 = vmatprep.subr.mxu0 %v613
        %1241 = vmatpush2.msra.mxu0 %v612
        %1242 = vmatprep.subr.mxu0 %v599
        %1243 = vmatpush2.msra.mxu0 %v598
        %1244 = vmatprep.subr.mxu0 %v585
        %1245 = vmatpush2.msra.mxu0 %v584
        %1246 = vmatprep.subr.mxu0 %v571
        %1247 = vmatpush2.msra.mxu0 %v570
        %1248 = vmatprep.subr.mxu0 %v557
        %1249 = vmatpush2.msra.mxu0 %v556
        %1250 = vmatprep.subr.mxu0 %v543
        %1251 = vmatpush2.msra.mxu0 %v542
        %1252 = vmatprep.mubr.f32.mxu0 %v303
        %1253 = vmatmul.mubr.f32.gmra.mxu0 %v302
        %v1254 = vpop.f32.mrf.mxu0
        %v1255 = vadd.f32 %v797, %v1254
        %v1256 = vpop.f32.mrf.mxu0
        %v1257 = vadd.f32 %v801, %v1256
        %1258 = vmatprep.mubr.f32.mxu0 %v305
        %1259 = vmatmul.mubr.f32.gmra.mxu0 %v304
        %v1260 = vpop.f32.mrf.mxu0
        %v1261 = vadd.f32 %v797, %v1260
        %v1262 = vpop.f32.mrf.mxu0
        %v1263 = vadd.f32 %v801, %v1262
        %1264 = vmatprep.mubr.f32.mxu0 %v307
        %1265 = vmatmul.mubr.f32.gmra.mxu0 %v306
        %v1266 = vpop.f32.mrf.mxu0
        %v1267 = vadd.f32 %v797, %v1266
        %v1268 = vpop.f32.mrf.mxu0
        %v1269 = vadd.f32 %v801, %v1268
        %1270 = vmatprep.mubr.f32.mxu0 %v309
        %1271 = vmatmul.mubr.f32.gmra.mxu0 %v308
        %v1272 = vpop.f32.mrf.mxu0
        %v1273 = vadd.f32 %v797, %v1272
        %v1274 = vpop.f32.mrf.mxu0
        %v1275 = vadd.f32 %v801, %v1274
        %1276 = vdwg.mxu0
        %1277 = vmatprep.subr.mxu0 %v531
        %1278 = vmatpush1.msra.mxu0 %v530
        %1279 = vmatprep.subr.mxu0 %v517
        %1280 = vmatpush1.msra.mxu0 %v516
        %1281 = vmatprep.subr.mxu0 %v503
        %1282 = vmatpush1.msra.mxu0 %v502
        %1283 = vmatprep.subr.mxu0 %v489
        %1284 = vmatpush1.msra.mxu0 %v488
        %1285 = vmatprep.subr.mxu0 %v475
        %1286 = vmatpush1.msra.mxu0 %v474
        %1287 = vmatprep.subr.mxu0 %v461
        %1288 = vmatpush1.msra.mxu0 %v460
        %1289 = vmatprep.subr.mxu0 %v447
        %1290 = vmatpush1.msra.mxu0 %v446
        %1291 = vmatprep.subr.mxu0 %v433
        %1292 = vmatpush1.msra.mxu0 %v432
        %1293 = vmatprep.subr.mxu0 %v419
        %1294 = vmatpush1.msra.mxu0 %v418
        %1295 = vmatprep.subr.mxu0 %v405
        %1296 = vmatpush1.msra.mxu0 %v404
        %1297 = vmatprep.subr.mxu0 %v391
        %1298 = vmatpush1.msra.mxu0 %v390
        %1299 = vmatprep.subr.mxu0 %v377
        %1300 = vmatpush1.msra.mxu0 %v376
        %1301 = vmatprep.subr.mxu0 %v363
        %1302 = vmatpush1.msra.mxu0 %v362
        %1303 = vmatprep.subr.mxu0 %v349
        %1304 = vmatpush1.msra.mxu0 %v348
        %1305 = vmatprep.subr.mxu0 %v335
        %1306 = vmatpush1.msra.mxu0 %v334
        %1307 = vmatprep.subr.mxu0 %v321
        %1308 = vmatpush1.msra.mxu0 %v320
        %1309 = vmatprep.subr.mxu0 %v755
        %1310 = vmatpush2.msra.mxu0 %v754
        %1311 = vmatprep.subr.mxu0 %v741
        %1312 = vmatpush2.msra.mxu0 %v740
        %1313 = vmatprep.subr.mxu0 %v727
        %1314 = vmatpush2.msra.mxu0 %v726
        %1315 = vmatprep.subr.mxu0 %v713
        %1316 = vmatpush2.msra.mxu0 %v712
        %1317 = vmatprep.subr.mxu0 %v699
        %1318 = vmatpush2.msra.mxu0 %v698
        %1319 = vmatprep.subr.mxu0 %v685
        %1320 = vmatpush2.msra.mxu0 %v684
        %1321 = vmatprep.subr.mxu0 %v671
        %1322 = vmatpush2.msra.mxu0 %v670
        %1323 = vmatprep.subr.mxu0 %v657
        %1324 = vmatpush2.msra.mxu0 %v656
        %1325 = vmatprep.subr.mxu0 %v643
        %1326 = vmatpush2.msra.mxu0 %v642
        %1327 = vmatprep.subr.mxu0 %v629
        %1328 = vmatpush2.msra.mxu0 %v628
        %1329 = vmatprep.subr.mxu0 %v615
        %1330 = vmatpush2.msra.mxu0 %v614
        %1331 = vmatprep.subr.mxu0 %v601
        %1332 = vmatpush2.msra.mxu0 %v600
        %1333 = vmatprep.subr.mxu0 %v587
        %1334 = vmatpush2.msra.mxu0 %v586
        %1335 = vmatprep.subr.mxu0 %v573
        %1336 = vmatpush2.msra.mxu0 %v572
        %1337 = vmatprep.subr.mxu0 %v559
        %1338 = vmatpush2.msra.mxu0 %v558
        %1339 = vmatprep.subr.mxu0 %v545
        %1340 = vmatpush2.msra.mxu0 %v544
        %1341 = vmatprep.mubr.f32.mxu0 %v303
        %1342 = vmatmul.mubr.f32.gmra.mxu0 %v302
        %v1343 = vpop.f32.mrf.mxu0
        %v1344 = vadd.f32 %v805, %v1343
        %v1345 = vpop.f32.mrf.mxu0
        %v1346 = vadd.f32 %v809, %v1345
        %1347 = vmatprep.mubr.f32.mxu0 %v305
        %1348 = vmatmul.mubr.f32.gmra.mxu0 %v304
        %v1349 = vpop.f32.mrf.mxu0
        %v1350 = vadd.f32 %v805, %v1349
        %v1351 = vpop.f32.mrf.mxu0
        %v1352 = vadd.f32 %v809, %v1351
        %1353 = vmatprep.mubr.f32.mxu0 %v307
        %1354 = vmatmul.mubr.f32.gmra.mxu0 %v306
        %v1355 = vpop.f32.mrf.mxu0
        %v1356 = vadd.f32 %v805, %v1355
        %v1357 = vpop.f32.mrf.mxu0
        %v1358 = vadd.f32 %v809, %v1357
        %1359 = vmatprep.mubr.f32.mxu0 %v309
        %1360 = vmatmul.mubr.f32.gmra.mxu0 %v308
        %v1361 = vpop.f32.mrf.mxu0
        %v1362 = vadd.f32 %v805, %v1361
        %v1363 = vpop.f32.mrf.mxu0
        %v1364 = vadd.f32 %v809, %v1363
        %1365 = vdwg.mxu0
        %1366 = vmatprep.subr.mxu0 %v533
        %1367 = vmatpush1.msra.mxu0 %v532
        %1368 = vmatprep.subr.mxu0 %v519
        %1369 = vmatpush1.msra.mxu0 %v518
        %1370 = vmatprep.subr.mxu0 %v505
        %1371 = vmatpush1.msra.mxu0 %v504
        %1372 = vmatprep.subr.mxu0 %v491
        %1373 = vmatpush1.msra.mxu0 %v490
        %1374 = vmatprep.subr.mxu0 %v477
        %1375 = vmatpush1.msra.mxu0 %v476
        %1376 = vmatprep.subr.mxu0 %v463
        %1377 = vmatpush1.msra.mxu0 %v462
        %1378 = vmatprep.subr.mxu0 %v449
        %1379 = vmatpush1.msra.mxu0 %v448
        %1380 = vmatprep.subr.mxu0 %v435
        %1381 = vmatpush1.msra.mxu0 %v434
        %1382 = vmatprep.subr.mxu0 %v421
        %1383 = vmatpush1.msra.mxu0 %v420
        %1384 = vmatprep.subr.mxu0 %v407
        %1385 = vmatpush1.msra.mxu0 %v406
        %1386 = vmatprep.subr.mxu0 %v393
        %1387 = vmatpush1.msra.mxu0 %v392
        %1388 = vmatprep.subr.mxu0 %v379
        %1389 = vmatpush1.msra.mxu0 %v378
        %1390 = vmatprep.subr.mxu0 %v365
        %1391 = vmatpush1.msra.mxu0 %v364
        %1392 = vmatprep.subr.mxu0 %v351
        %1393 = vmatpush1.msra.mxu0 %v350
        %1394 = vmatprep.subr.mxu0 %v337
        %1395 = vmatpush1.msra.mxu0 %v336
        %1396 = vmatprep.subr.mxu0 %v323
        %1397 = vmatpush1.msra.mxu0 %v322
        %1398 = vmatprep.subr.mxu0 %v757
        %1399 = vmatpush2.msra.mxu0 %v756
        %1400 = vmatprep.subr.mxu0 %v743
        %1401 = vmatpush2.msra.mxu0 %v742
        %1402 = vmatprep.subr.mxu0 %v729
        %1403 = vmatpush2.msra.mxu0 %v728
        %1404 = vmatprep.subr.mxu0 %v715
        %1405 = vmatpush2.msra.mxu0 %v714
        %1406 = vmatprep.subr.mxu0 %v701
        %1407 = vmatpush2.msra.mxu0 %v700
        %1408 = vmatprep.subr.mxu0 %v687
        %1409 = vmatpush2.msra.mxu0 %v686
        %1410 = vmatprep.subr.mxu0 %v673
        %1411 = vmatpush2.msra.mxu0 %v672
        %1412 = vmatprep.subr.mxu0 %v659
        %1413 = vmatpush2.msra.mxu0 %v658
        %1414 = vmatprep.subr.mxu0 %v645
        %1415 = vmatpush2.msra.mxu0 %v644
        %1416 = vmatprep.subr.mxu0 %v631
        %1417 = vmatpush2.msra.mxu0 %v630
        %1418 = vmatprep.subr.mxu0 %v617
        %1419 = vmatpush2.msra.mxu0 %v616
        %1420 = vmatprep.subr.mxu0 %v603
        %1421 = vmatpush2.msra.mxu0 %v602
        %1422 = vmatprep.subr.mxu0 %v589
        %1423 = vmatpush2.msra.mxu0 %v588
        %1424 = vmatprep.subr.mxu0 %v575
        %1425 = vmatpush2.msra.mxu0 %v574
        %1426 = vmatprep.subr.mxu0 %v561
        %1427 = vmatpush2.msra.mxu0 %v560
        %1428 = vmatprep.subr.mxu0 %v547
        %1429 = vmatpush2.msra.mxu0 %v546
        %1430 = vmatprep.mubr.f32.mxu0 %v303
        %1431 = vmatmul.mubr.f32.gmra.mxu0 %v302
        %v1432 = vpop.f32.mrf.mxu0
        %v1433 = vadd.f32 %v813, %v1432
        %v1434 = vpop.f32.mrf.mxu0
        %v1435 = vadd.f32 %v817, %v1434
        %1436 = vmatprep.mubr.f32.mxu0 %v305
        %1437 = vmatmul.mubr.f32.gmra.mxu0 %v304
        %v1438 = vpop.f32.mrf.mxu0
        %v1439 = vadd.f32 %v813, %v1438
        %v1440 = vpop.f32.mrf.mxu0
        %v1441 = vadd.f32 %v817, %v1440
        %1442 = vmatprep.mubr.f32.mxu0 %v307
        %1443 = vmatmul.mubr.f32.gmra.mxu0 %v306
        %v1444 = vpop.f32.mrf.mxu0
        %v1445 = vadd.f32 %v813, %v1444
        %v1446 = vpop.f32.mrf.mxu0
        %v1447 = vadd.f32 %v817, %v1446
        %1448 = vmatprep.mubr.f32.mxu0 %v309
        %1449 = vmatmul.mubr.f32.gmra.mxu0 %v308
        %v1450 = vpop.f32.mrf.mxu0
        %v1451 = vadd.f32 %v813, %v1450
        %v1452 = vpop.f32.mrf.mxu0
        %v1453 = vadd.f32 %v817, %v1452
        %1454 = vdwg.mxu0
        %v1455 = vmax.f32 %v1433, 0.0
        %v1456 = vmax.f32 %v1435, 0.0
        %v1457 = vmax.f32 %v1439, 0.0
        %v1458 = vmax.f32 %v1441, 0.0
        %v1459 = vmax.f32 %v1445, 0.0
        %v1460 = vmax.f32 %v1447, 0.0
        %v1461 = vmax.f32 %v1451, 0.0
        %v1462 = vmax.f32 %v1453, 0.0
        %v1463 = vld [vmem:[#allocation5 + $0x70] sm:$0xff]
        %v1464 = vld [vmem:[#allocation5 + $0xe8] sm:$0xff]
        %v1465 = vld [vmem:[#allocation5 + $0x160] sm:$0xff]
        %v1466 = vld [vmem:[#allocation5 + $0x1d8] sm:$0xff]
        %v1467 = vld [vmem:[#allocation5 + $0x250] sm:$0xff]
        %v1468 = vld [vmem:[#allocation5 + $0x2c8] sm:$0xff]
        %v1469 = vld [vmem:[#allocation5 + $0x340] sm:$0xff]
        %v1470 = vld [vmem:[#allocation5 + $0x3b8] sm:$0xff]
        %v1471 = vld [vmem:[#allocation5 + $0x430] sm:$0xff]
        %v1472 = vld [vmem:[#allocation5 + $0x4a8] sm:$0xff]
        %v1473 = vld [vmem:[#allocation5 + $0x520] sm:$0xff]
        %v1474 = vld [vmem:[#allocation5 + $0x598] sm:$0xff]
        %v1475 = vld [vmem:[#allocation5 + $0x610] sm:$0xff]
        %v1476 = vld [vmem:[#allocation5 + $0x688] sm:$0xff]
        %v1477 = vld [vmem:[#allocation5 + $0x700] sm:$0xff]
        %v1478 = vld [vmem:[#allocation5 + $0x778] sm:$0xff]
        %v1479 = vld [vmem:[#allocation5 + $0x7f0] sm:$0xff]
        %v1480 = vld [vmem:[#allocation5 + $0x868] sm:$0xff]
        %v1481 = vld [vmem:[#allocation5 + $0x8e0] sm:$0xff]
        %v1482 = vld [vmem:[#allocation5 + $0x958] sm:$0xff]
        %v1483 = vld [vmem:[#allocation5 + $0x9d0] sm:$0xff]
        %v1484 = vld [vmem:[#allocation5 + $0xa48] sm:$0xff]
        %v1485 = vld [vmem:[#allocation5 + $0xac0] sm:$0xff]
        %v1486 = vld [vmem:[#allocation5 + $0xb38] sm:$0xff]
        %v1487 = vld [vmem:[#allocation5 + $0xbb0] sm:$0xff]
        %v1488 = vld [vmem:[#allocation5 + $0xc28] sm:$0xff]
        %v1489 = vld [vmem:[#allocation5 + $0xca0] sm:$0xff]
        %v1490 = vld [vmem:[#allocation5 + $0xd18] sm:$0xff]
        %v1491 = vld [vmem:[#allocation5 + $0xd90] sm:$0xff]
        %v1492 = vld [vmem:[#allocation5 + $0xe08] sm:$0xff]
        %v1493 = vld [vmem:[#allocation5 + $0xe80] sm:$0xff]
        %v1494 = vld [vmem:[#allocation5 + $0xef8] sm:$0xff]
        %v1495 = vld [vmem:[#allocation10 + $0xe] sm:$0x1]
        %v1497 = vlaneseq
        %v1498 = vshrl.u32 %v1497, 7
        %v1499 = vsub.s32 0, %v1498
        %v1500 = vrot.slane %v1495, %v1499
        %1502 = vmatprep.subr.mxu0 0.0
        %1503 = vmatpush1.msra.mxu0 %v1478
        %1504 = vmatprep.subr.mxu0 0.0
        %1505 = vmatpush1.msra.mxu0 %v1477
        %1506 = vmatprep.subr.mxu0 0.0
        %1507 = vmatpush1.msra.mxu0 %v1476
        %1508 = vmatprep.subr.mxu0 0.0
        %1509 = vmatpush1.msra.mxu0 %v1475
        %1510 = vmatprep.subr.mxu0 0.0
        %1511 = vmatpush1.msra.mxu0 %v1474
        %1512 = vmatprep.subr.mxu0 0.0
        %1513 = vmatpush1.msra.mxu0 %v1473
        %1514 = vmatprep.subr.mxu0 0.0
        %1515 = vmatpush1.msra.mxu0 %v1472
        %1516 = vmatprep.subr.mxu0 0.0
        %1517 = vmatpush1.msra.mxu0 %v1471
        %1518 = vmatprep.subr.mxu0 0.0
        %1519 = vmatpush1.msra.mxu0 %v1470
        %1520 = vmatprep.subr.mxu0 0.0
        %1521 = vmatpush1.msra.mxu0 %v1469
        %1522 = vmatprep.subr.mxu0 0.0
        %1523 = vmatpush1.msra.mxu0 %v1468
        %1524 = vmatprep.subr.mxu0 0.0
        %1525 = vmatpush1.msra.mxu0 %v1467
        %1526 = vmatprep.subr.mxu0 0.0
        %1527 = vmatpush1.msra.mxu0 %v1466
        %1528 = vmatprep.subr.mxu0 0.0
        %1529 = vmatpush1.msra.mxu0 %v1465
        %1530 = vmatprep.subr.mxu0 0.0
        %1531 = vmatpush1.msra.mxu0 %v1464
        %1532 = vmatprep.subr.mxu0 0.0
        %1533 = vmatpush1.msra.mxu0 %v1463
        %1534 = vmatprep.subr.mxu0 0.0
        %1535 = vmatpush2.msra.mxu0 %v1494
        %1536 = vmatprep.subr.mxu0 0.0
        %1537 = vmatpush2.msra.mxu0 %v1493
        %1538 = vmatprep.subr.mxu0 0.0
        %1539 = vmatpush2.msra.mxu0 %v1492
        %1540 = vmatprep.subr.mxu0 0.0
        %1541 = vmatpush2.msra.mxu0 %v1491
        %1542 = vmatprep.subr.mxu0 0.0
        %1543 = vmatpush2.msra.mxu0 %v1490
        %1544 = vmatprep.subr.mxu0 0.0
        %1545 = vmatpush2.msra.mxu0 %v1489
        %1546 = vmatprep.subr.mxu0 0.0
        %1547 = vmatpush2.msra.mxu0 %v1488
        %1548 = vmatprep.subr.mxu0 0.0
        %1549 = vmatpush2.msra.mxu0 %v1487
        %1550 = vmatprep.subr.mxu0 0.0
        %1551 = vmatpush2.msra.mxu0 %v1486
        %1552 = vmatprep.subr.mxu0 0.0
        %1553 = vmatpush2.msra.mxu0 %v1485
        %1554 = vmatprep.subr.mxu0 0.0
        %1555 = vmatpush2.msra.mxu0 %v1484
        %1556 = vmatprep.subr.mxu0 0.0
        %1557 = vmatpush2.msra.mxu0 %v1483
        %1558 = vmatprep.subr.mxu0 0.0
        %1559 = vmatpush2.msra.mxu0 %v1482
        %1560 = vmatprep.subr.mxu0 0.0
        %1561 = vmatpush2.msra.mxu0 %v1481
        %1562 = vmatprep.subr.mxu0 0.0
        %1563 = vmatpush2.msra.mxu0 %v1480
        %1564 = vmatprep.subr.mxu0 0.0
        %1565 = vmatpush2.msra.mxu0 %v1479
        %1566 = vmatprep.mubr.f32.mxu0 %v1456
        %1567 = vmatmul.mubr.f32.gmra.mxu0 %v1455
        %v1568 = vpop.f32.mrf.mxu0
        %v1569 = vadd.f32 %v1500, %v1568
        %v1570 = vpop.f32.mrf.mxu0
        %1571 = vmatprep.mubr.f32.mxu0 %v1458
        %1572 = vmatmul.mubr.f32.gmra.mxu0 %v1457
        %v1573 = vpop.f32.mrf.mxu0
        %v1574 = vadd.f32 %v1500, %v1573
        %v1575 = vpop.f32.mrf.mxu0
        %1576 = vmatprep.mubr.f32.mxu0 %v1460
        %1577 = vmatmul.mubr.f32.gmra.mxu0 %v1459
        %v1578 = vpop.f32.mrf.mxu0
        %v1579 = vadd.f32 %v1500, %v1578
        %v1580 = vpop.f32.mrf.mxu0
        %1581 = vmatprep.mubr.f32.mxu0 %v1462
        %1582 = vmatmul.mubr.f32.gmra.mxu0 %v1461
        %v1583 = vpop.f32.mrf.mxu0
        %v1584 = vadd.f32 %v1500, %v1583
        %v1585 = vpop.f32.mrf.mxu0
        %1586 = vdwg.mxu0
        %v1587 = vmax.f32 %v1569, 0.0
        %v1588 = vmax.f32 %v1574, 0.0
        %v1589 = vmax.f32 %v1579, 0.0
        %v1590 = vmax.f32 %v1584, 0.0
        %v1591 = vld [vmem:[#allocation7] sm:$0xff]
        %v1592 = vld [vmem:[#allocation7 + $0x8] sm:$0xff]
        %v1593 = vld [vmem:[#allocation7 + $0x10] sm:$0xff]
        %v1594 = vld [vmem:[#allocation7 + $0x18] sm:$0xff]
        %v1595 = vld [vmem:[#allocation7 + $0x78] sm:$0xff]
        %v1596 = vld [vmem:[#allocation7 + $0x80] sm:$0xff]
        %v1597 = vld [vmem:[#allocation7 + $0x88] sm:$0xff]
        %v1598 = vld [vmem:[#allocation7 + $0x90] sm:$0xff]
        %v1599 = vld [vmem:[#allocation7 + $0xf0] sm:$0xff]
        %v1600 = vld [vmem:[#allocation7 + $0xf8] sm:$0xff]
        %v1601 = vld [vmem:[#allocation7 + $0x100] sm:$0xff]
        %v1602 = vld [vmem:[#allocation7 + $0x108] sm:$0xff]
        %v1603 = vld [vmem:[#allocation7 + $0x168] sm:$0xff]
        %v1604 = vld [vmem:[#allocation7 + $0x170] sm:$0xff]
        %v1605 = vld [vmem:[#allocation7 + $0x178] sm:$0xff]
        %v1606 = vld [vmem:[#allocation7 + $0x180] sm:$0xff]
        %v1607 = vld [vmem:[#allocation7 + $0x1e0] sm:$0xff]
        %v1608 = vld [vmem:[#allocation7 + $0x1e8] sm:$0xff]
        %v1609 = vld [vmem:[#allocation7 + $0x1f0] sm:$0xff]
        %v1610 = vld [vmem:[#allocation7 + $0x1f8] sm:$0xff]
        %v1611 = vld [vmem:[#allocation7 + $0x258] sm:$0xff]
        %v1612 = vld [vmem:[#allocation7 + $0x260] sm:$0xff]
        %v1613 = vld [vmem:[#allocation7 + $0x268] sm:$0xff]
        %v1614 = vld [vmem:[#allocation7 + $0x270] sm:$0xff]
        %v1615 = vld [vmem:[#allocation7 + $0x2d0] sm:$0xff]
        %v1616 = vld [vmem:[#allocation7 + $0x2d8] sm:$0xff]
        %v1617 = vld [vmem:[#allocation7 + $0x2e0] sm:$0xff]
        %v1618 = vld [vmem:[#allocation7 + $0x2e8] sm:$0xff]
        %v1619 = vld [vmem:[#allocation7 + $0x348] sm:$0xff]
        %v1620 = vld [vmem:[#allocation7 + $0x350] sm:$0xff]
        %v1621 = vld [vmem:[#allocation7 + $0x358] sm:$0xff]
        %v1622 = vld [vmem:[#allocation7 + $0x360] sm:$0xff]
        %v1623 = vld [vmem:[#allocation7 + $0x3c0] sm:$0xff]
        %v1624 = vld [vmem:[#allocation7 + $0x3c8] sm:$0xff]
        %v1625 = vld [vmem:[#allocation7 + $0x3d0] sm:$0xff]
        %v1626 = vld [vmem:[#allocation7 + $0x3d8] sm:$0xff]
        %v1627 = vld [vmem:[#allocation7 + $0x438] sm:$0xff]
        %v1628 = vld [vmem:[#allocation7 + $0x440] sm:$0xff]
        %v1629 = vld [vmem:[#allocation7 + $0x448] sm:$0xff]
        %v1630 = vld [vmem:[#allocation7 + $0x450] sm:$0xff]
        %v1631 = vld [vmem:[#allocation7 + $0x4b0] sm:$0xff]
        %v1632 = vld [vmem:[#allocation7 + $0x4b8] sm:$0xff]
        %v1633 = vld [vmem:[#allocation7 + $0x4c0] sm:$0xff]
        %v1634 = vld [vmem:[#allocation7 + $0x4c8] sm:$0xff]
        %v1635 = vld [vmem:[#allocation7 + $0x528] sm:$0xff]
        %v1636 = vld [vmem:[#allocation7 + $0x530] sm:$0xff]
        %v1637 = vld [vmem:[#allocation7 + $0x538] sm:$0xff]
        %v1638 = vld [vmem:[#allocation7 + $0x540] sm:$0xff]
        %v1639 = vld [vmem:[#allocation7 + $0x5a0] sm:$0xff]
        %v1640 = vld [vmem:[#allocation7 + $0x5a8] sm:$0xff]
        %v1641 = vld [vmem:[#allocation7 + $0x5b0] sm:$0xff]
        %v1642 = vld [vmem:[#allocation7 + $0x5b8] sm:$0xff]
        %v1643 = vld [vmem:[#allocation7 + $0x618] sm:$0xff]
        %v1644 = vld [vmem:[#allocation7 + $0x620] sm:$0xff]
        %v1645 = vld [vmem:[#allocation7 + $0x628] sm:$0xff]
        %v1646 = vld [vmem:[#allocation7 + $0x630] sm:$0xff]
        %v1647 = vld [vmem:[#allocation7 + $0x690] sm:$0xff]
        %v1648 = vld [vmem:[#allocation7 + $0x698] sm:$0xff]
        %v1649 = vld [vmem:[#allocation7 + $0x6a0] sm:$0xff]
        %v1650 = vld [vmem:[#allocation7 + $0x6a8] sm:$0xff]
        %v1651 = vld [vmem:[#allocation7 + $0x708] sm:$0xff]
        %v1652 = vld [vmem:[#allocation7 + $0x710] sm:$0xff]
        %v1653 = vld [vmem:[#allocation7 + $0x718] sm:$0xff]
        %v1654 = vld [vmem:[#allocation7 + $0x720] sm:$0xff]
        %v1655 = vld [vmem:[#allocation10 + $0xf] sm:$0xf]
        %v1657 = vlaneseq
        %v1658 = vshrl.u32 %v1657, 7
        %v1659 = vsub.s32 0, %v1658
        %v1660 = vrot.slane %v1655, %v1659
        %v1661 = vlaneseq
        %v1662 = vshrl.u32 %v1661, 7
        %v1663 = vsub.s32 1, %v1662
        %v1664 = vrot.slane %v1655, %v1663
        %v1665 = vlaneseq
        %v1666 = vshrl.u32 %v1665, 7
        %v1667 = vsub.s32 2, %v1666
        %v1668 = vrot.slane %v1655, %v1667
        %v1669 = vlaneseq
        %v1670 = vshrl.u32 %v1669, 7
        %v1671 = vsub.s32 3, %v1670
        %v1672 = vrot.slane %v1655, %v1671
        %1677 = vmatprep.subr.mxu0 %v1652
        %1678 = vmatpush1.msra.mxu0 %v1651
        %1679 = vmatprep.subr.mxu0 %v1648
        %1680 = vmatpush1.msra.mxu0 %v1647
        %1681 = vmatprep.subr.mxu0 %v1644
        %1682 = vmatpush1.msra.mxu0 %v1643
        %1683 = vmatprep.subr.mxu0 %v1640
        %1684 = vmatpush1.msra.mxu0 %v1639
        %1685 = vmatprep.subr.mxu0 %v1636
        %1686 = vmatpush1.msra.mxu0 %v1635
        %1687 = vmatprep.subr.mxu0 %v1632
        %1688 = vmatpush1.msra.mxu0 %v1631
        %1689 = vmatprep.subr.mxu0 %v1628
        %1690 = vmatpush1.msra.mxu0 %v1627
        %1691 = vmatprep.subr.mxu0 %v1624
        %1692 = vmatpush1.msra.mxu0 %v1623
        %1693 = vmatprep.subr.mxu0 %v1620
        %1694 = vmatpush1.msra.mxu0 %v1619
        %1695 = vmatprep.subr.mxu0 %v1616
        %1696 = vmatpush1.msra.mxu0 %v1615
        %1697 = vmatprep.subr.mxu0 %v1612
        %1698 = vmatpush1.msra.mxu0 %v1611
        %1699 = vmatprep.subr.mxu0 %v1608
        %1700 = vmatpush1.msra.mxu0 %v1607
        %1701 = vmatprep.subr.mxu0 %v1604
        %1702 = vmatpush1.msra.mxu0 %v1603
        %1703 = vmatprep.subr.mxu0 %v1600
        %1704 = vmatpush1.msra.mxu0 %v1599
        %1705 = vmatprep.subr.mxu0 %v1596
        %1706 = vmatpush1.msra.mxu0 %v1595
        %1707 = vmatprep.subr.mxu0 %v1592
        %1708 = vmatpush1.msra.mxu0 %v1591
        %1709 = vmatprep.subr.mxu0 0.0
        %1710 = vmatpush2.msra.mxu0 0.0
        %1711 = vmatprep.subr.mxu0 0.0
        %1712 = vmatpush2.msra.mxu0 0.0
        %1713 = vmatprep.subr.mxu0 0.0
        %1714 = vmatpush2.msra.mxu0 0.0
        %1715 = vmatprep.subr.mxu0 0.0
        %1716 = vmatpush2.msra.mxu0 0.0
        %1717 = vmatprep.subr.mxu0 0.0
        %1718 = vmatpush2.msra.mxu0 0.0
        %1719 = vmatprep.subr.mxu0 0.0
        %1720 = vmatpush2.msra.mxu0 0.0
        %1721 = vmatprep.subr.mxu0 0.0
        %1722 = vmatpush2.msra.mxu0 0.0
        %1723 = vmatprep.subr.mxu0 0.0
        %1724 = vmatpush2.msra.mxu0 0.0
        %1725 = vmatprep.subr.mxu0 0.0
        %1726 = vmatpush2.msra.mxu0 0.0
        %1727 = vmatprep.subr.mxu0 0.0
        %1728 = vmatpush2.msra.mxu0 0.0
        %1729 = vmatprep.subr.mxu0 0.0
        %1730 = vmatpush2.msra.mxu0 0.0
        %1731 = vmatprep.subr.mxu0 0.0
        %1732 = vmatpush2.msra.mxu0 0.0
        %1733 = vmatprep.subr.mxu0 0.0
        %1734 = vmatpush2.msra.mxu0 0.0
        %1735 = vmatprep.subr.mxu0 0.0
        %1736 = vmatpush2.msra.mxu0 0.0
        %1737 = vmatprep.subr.mxu0 0.0
        %1738 = vmatpush2.msra.mxu0 0.0
        %1739 = vmatprep.subr.mxu0 0.0
        %1740 = vmatpush2.msra.mxu0 0.0
        %1741 = vmatprep.mubr.f32.mxu0 0.0
        %1742 = vmatmul.mubr.f32.gmra.mxu0 %v1587
        %v1743 = vpop.f32.mrf.mxu0
        %v1744 = vadd.f32 %v1660, %v1743
        %v1745 = vpop.f32.mrf.mxu0
        %v1746 = vadd.f32 %v1664, %v1745
        %1747 = vmatprep.mubr.f32.mxu0 0.0
        %1748 = vmatmul.mubr.f32.gmra.mxu0 %v1588
        %v1749 = vpop.f32.mrf.mxu0
        %v1750 = vadd.f32 %v1660, %v1749
        %v1751 = vpop.f32.mrf.mxu0
        %v1752 = vadd.f32 %v1664, %v1751
        %1753 = vmatprep.mubr.f32.mxu0 0.0
        %1754 = vmatmul.mubr.f32.gmra.mxu0 %v1589
        %v1755 = vpop.f32.mrf.mxu0
        %v1756 = vadd.f32 %v1660, %v1755
        %v1757 = vpop.f32.mrf.mxu0
        %v1758 = vadd.f32 %v1664, %v1757
        %1759 = vmatprep.mubr.f32.mxu0 0.0
        %1760 = vmatmul.mubr.f32.gmra.mxu0 %v1590
        %v1761 = vpop.f32.mrf.mxu0
        %v1762 = vadd.f32 %v1660, %v1761
        %v1763 = vpop.f32.mrf.mxu0
        %v1764 = vadd.f32 %v1664, %v1763
        %1765 = vdwg.mxu0
        %1766 = vmatprep.subr.mxu0 %v1654
        %1767 = vmatpush1.msra.mxu0 %v1653
        %1768 = vmatprep.subr.mxu0 %v1650
        %1769 = vmatpush1.msra.mxu0 %v1649
        %1770 = vmatprep.subr.mxu0 %v1646
        %1771 = vmatpush1.msra.mxu0 %v1645
        %1772 = vmatprep.subr.mxu0 %v1642
        %1773 = vmatpush1.msra.mxu0 %v1641
        %1774 = vmatprep.subr.mxu0 %v1638
        %1775 = vmatpush1.msra.mxu0 %v1637
        %1776 = vmatprep.subr.mxu0 %v1634
        %1777 = vmatpush1.msra.mxu0 %v1633
        %1778 = vmatprep.subr.mxu0 %v1630
        %1779 = vmatpush1.msra.mxu0 %v1629
        %1780 = vmatprep.subr.mxu0 %v1626
        %1781 = vmatpush1.msra.mxu0 %v1625
        %1782 = vmatprep.subr.mxu0 %v1622
        %1783 = vmatpush1.msra.mxu0 %v1621
        %1784 = vmatprep.subr.mxu0 %v1618
        %1785 = vmatpush1.msra.mxu0 %v1617
        %1786 = vmatprep.subr.mxu0 %v1614
        %1787 = vmatpush1.msra.mxu0 %v1613
        %1788 = vmatprep.subr.mxu0 %v1610
        %1789 = vmatpush1.msra.mxu0 %v1609
        %1790 = vmatprep.subr.mxu0 %v1606
        %1791 = vmatpush1.msra.mxu0 %v1605
        %1792 = vmatprep.subr.mxu0 %v1602
        %1793 = vmatpush1.msra.mxu0 %v1601
        %1794 = vmatprep.subr.mxu0 %v1598
        %1795 = vmatpush1.msra.mxu0 %v1597
        %1796 = vmatprep.subr.mxu0 %v1594
        %1797 = vmatpush1.msra.mxu0 %v1593
        %1798 = vmatprep.subr.mxu0 0.0
        %1799 = vmatpush2.msra.mxu0 0.0
        %1800 = vmatprep.subr.mxu0 0.0
        %1801 = vmatpush2.msra.mxu0 0.0
        %1802 = vmatprep.subr.mxu0 0.0
        %1803 = vmatpush2.msra.mxu0 0.0
        %1804 = vmatprep.subr.mxu0 0.0
        %1805 = vmatpush2.msra.mxu0 0.0
        %1806 = vmatprep.subr.mxu0 0.0
        %1807 = vmatpush2.msra.mxu0 0.0
        %1808 = vmatprep.subr.mxu0 0.0
        %1809 = vmatpush2.msra.mxu0 0.0
        %1810 = vmatprep.subr.mxu0 0.0
        %1811 = vmatpush2.msra.mxu0 0.0
        %1812 = vmatprep.subr.mxu0 0.0
        %1813 = vmatpush2.msra.mxu0 0.0
        %1814 = vmatprep.subr.mxu0 0.0
        %1815 = vmatpush2.msra.mxu0 0.0
        %1816 = vmatprep.subr.mxu0 0.0
        %1817 = vmatpush2.msra.mxu0 0.0
        %1818 = vmatprep.subr.mxu0 0.0
        %1819 = vmatpush2.msra.mxu0 0.0
        %1820 = vmatprep.subr.mxu0 0.0
        %1821 = vmatpush2.msra.mxu0 0.0
        %1822 = vmatprep.subr.mxu0 0.0
        %1823 = vmatpush2.msra.mxu0 0.0
        %1824 = vmatprep.subr.mxu0 0.0
        %1825 = vmatpush2.msra.mxu0 0.0
        %1826 = vmatprep.subr.mxu0 0.0
        %1827 = vmatpush2.msra.mxu0 0.0
        %1828 = vmatprep.subr.mxu0 0.0
        %1829 = vmatpush2.msra.mxu0 0.0
        %1830 = vmatprep.mubr.f32.mxu0 0.0
        %1831 = vmatmul.mubr.f32.gmra.mxu0 %v1587
        %v1832 = vpop.f32.mrf.mxu0
        %v1833 = vadd.f32 %v1668, %v1832
        %v1834 = vpop.f32.mrf.mxu0
        %v1835 = vadd.f32 %v1672, %v1834
        %1836 = vmatprep.mubr.f32.mxu0 0.0
        %1837 = vmatmul.mubr.f32.gmra.mxu0 %v1588
        %v1838 = vpop.f32.mrf.mxu0
        %v1839 = vadd.f32 %v1668, %v1838
        %v1840 = vpop.f32.mrf.mxu0
        %v1841 = vadd.f32 %v1672, %v1840
        %1842 = vmatprep.mubr.f32.mxu0 0.0
        %1843 = vmatmul.mubr.f32.gmra.mxu0 %v1589
        %v1844 = vpop.f32.mrf.mxu0
        %v1845 = vadd.f32 %v1668, %v1844
        %v1846 = vpop.f32.mrf.mxu0
        %v1847 = vadd.f32 %v1672, %v1846
        %1848 = vmatprep.mubr.f32.mxu0 0.0
        %1849 = vmatmul.mubr.f32.gmra.mxu0 %v1590
        %v1850 = vpop.f32.mrf.mxu0
        %v1851 = vadd.f32 %v1668, %v1850
        %v1852 = vpop.f32.mrf.mxu0
        %v1853 = vadd.f32 %v1672, %v1852
        %1854 = vdwg.mxu0
        %v1855 = vsub.f32 %v1077, %v1744
        %v1856 = vsub.f32 %v1079, %v1746
        %v1857 = vsub.f32 %v1166, %v1833
        %v1858 = vsub.f32 %v1168, %v1835
        %v1859 = vsub.f32 %v1083, %v1750
        %v1860 = vsub.f32 %v1085, %v1752
        %v1861 = vsub.f32 %v1172, %v1839
        %v1862 = vsub.f32 %v1174, %v1841
        %v1863 = vsub.f32 %v1089, %v1756
        %v1864 = vsub.f32 %v1091, %v1758
        %v1865 = vsub.f32 %v1178, %v1845
        %v1866 = vsub.f32 %v1180, %v1847
        %v1867 = vsub.f32 %v1095, %v1762
        %v1868 = vsub.f32 %v1097, %v1764
        %v1869 = vsub.f32 %v1184, %v1851
        %v1870 = vsub.f32 %v1186, %v1853
        %v1871 = vmul.f32 %v899, %v1855
        %v1872 = vmul.f32 %v901, %v1856
        %v1873 = vmul.f32 %v988, %v1857
        %v1874 = vmul.f32 %v990, %v1858
        %v1875 = vmul.f32 %v905, %v1859
        %v1876 = vmul.f32 %v907, %v1860
        %v1877 = vmul.f32 %v994, %v1861
        %v1878 = vmul.f32 %v996, %v1862
        %v1879 = vmul.f32 %v911, %v1863
        %v1880 = vmul.f32 %v913, %v1864
        %v1881 = vmul.f32 %v1000, %v1865
        %v1882 = vmul.f32 %v1002, %v1866
        %v1883 = vmul.f32 %v917, %v1867
        %v1884 = vmul.f32 %v919, %v1868
        %v1885 = vmul.f32 %v1006, %v1869
        %v1886 = vmul.f32 %v1008, %v1870
        %v1887 = vld [vmem:[#allocation8] sm:$0xff]
        %v1888 = vld [vmem:[#allocation8 + $0x18] sm:$0xff]
        %v1889 = vld [vmem:[#allocation8 + $0x30] sm:$0xff]
        %v1890 = vld [vmem:[#allocation8 + $0x48] sm:$0xff]
        %v1891 = vld [vmem:[#allocation8 + $0x60] sm:$0xff]
        %v1892 = vld [vmem:[#allocation8 + $0x78] sm:$0xff]
        %v1893 = vld [vmem:[#allocation8 + $0x90] sm:$0xff]
        %v1894 = vld [vmem:[#allocation8 + $0xa8] sm:$0xff]
        %v1895 = vld [vmem:[#allocation8 + $0xc0] sm:$0xff]
        %v1896 = vld [vmem:[#allocation8 + $0xd8] sm:$0xff]
        %v1897 = vld [vmem:[#allocation8 + $0xf0] sm:$0xff]
        %v1898 = vld [vmem:[#allocation8 + $0x108] sm:$0xff]
        %v1899 = vld [vmem:[#allocation8 + $0x120] sm:$0xff]
        %v1900 = vld [vmem:[#allocation8 + $0x138] sm:$0xff]
        %v1901 = vld [vmem:[#allocation8 + $0x150] sm:$0xff]
        %v1902 = vld [vmem:[#allocation8 + $0x168] sm:$0xff]
        %v1903 = vld [vmem:[#allocation8 + $0x180] sm:$0xff]
        %v1904 = vld [vmem:[#allocation8 + $0x198] sm:$0xff]
        %v1905 = vld [vmem:[#allocation8 + $0x1b0] sm:$0xff]
        %v1906 = vld [vmem:[#allocation8 + $0x1c8] sm:$0xff]
        %v1907 = vld [vmem:[#allocation8 + $0x1e0] sm:$0xff]
        %v1908 = vld [vmem:[#allocation8 + $0x1f8] sm:$0xff]
        %v1909 = vld [vmem:[#allocation8 + $0x210] sm:$0xff]
        %v1910 = vld [vmem:[#allocation8 + $0x228] sm:$0xff]
        %v1911 = vld [vmem:[#allocation8 + $0x240] sm:$0xff]
        %v1912 = vld [vmem:[#allocation8 + $0x258] sm:$0xff]
        %v1913 = vld [vmem:[#allocation8 + $0x270] sm:$0xff]
        %v1914 = vld [vmem:[#allocation8 + $0x288] sm:$0xff]
        %v1915 = vld [vmem:[#allocation8 + $0x2a0] sm:$0xff]
        %v1916 = vld [vmem:[#allocation8 + $0x2b8] sm:$0xff]
        %v1917 = vld [vmem:[#allocation8 + $0x2d0] sm:$0xff]
        %v1918 = vld [vmem:[#allocation8 + $0x2e8] sm:$0xff]
        %v1919 = vld [vmem:[#allocation8 + $0x300] sm:$0xff]
        %v1920 = vld [vmem:[#allocation8 + $0x318] sm:$0xff]
        %v1921 = vld [vmem:[#allocation8 + $0x330] sm:$0xff]
        %v1922 = vld [vmem:[#allocation8 + $0x348] sm:$0xff]
        %v1923 = vld [vmem:[#allocation8 + $0x360] sm:$0xff]
        %v1924 = vld [vmem:[#allocation8 + $0x378] sm:$0xff]
        %v1925 = vld [vmem:[#allocation8 + $0x390] sm:$0xff]
        %v1926 = vld [vmem:[#allocation8 + $0x3a8] sm:$0xff]
        %v1927 = vld [vmem:[#allocation8 + $0x3c0] sm:$0xff]
        %v1928 = vld [vmem:[#allocation8 + $0x3d8] sm:$0xff]
        %v1929 = vld [vmem:[#allocation8 + $0x3f0] sm:$0xff]
        %v1930 = vld [vmem:[#allocation8 + $0x408] sm:$0xff]
        %v1931 = vld [vmem:[#allocation8 + $0x420] sm:$0xff]
        %v1932 = vld [vmem:[#allocation8 + $0x438] sm:$0xff]
        %v1933 = vld [vmem:[#allocation8 + $0x450] sm:$0xff]
        %v1934 = vld [vmem:[#allocation8 + $0x468] sm:$0xff]
        %v1935 = vld [vmem:[#allocation8 + $0x480] sm:$0xff]
        %v1936 = vld [vmem:[#allocation8 + $0x498] sm:$0xff]
        %v1937 = vld [vmem:[#allocation8 + $0x4b0] sm:$0xff]
        %v1938 = vld [vmem:[#allocation8 + $0x4c8] sm:$0xff]
        %v1939 = vld [vmem:[#allocation8 + $0x4e0] sm:$0xff]
        %v1940 = vld [vmem:[#allocation8 + $0x4f8] sm:$0xff]
        %v1941 = vld [vmem:[#allocation8 + $0x510] sm:$0xff]
        %v1942 = vld [vmem:[#allocation8 + $0x528] sm:$0xff]
        %v1943 = vld [vmem:[#allocation8 + $0x540] sm:$0xff]
        %v1944 = vld [vmem:[#allocation8 + $0x558] sm:$0xff]
        %v1945 = vld [vmem:[#allocation8 + $0x570] sm:$0xff]
        %v1946 = vld [vmem:[#allocation8 + $0x588] sm:$0xff]
        %v1947 = vld [vmem:[#allocation8 + $0x5a0] sm:$0xff]
        %v1948 = vld [vmem:[#allocation8 + $0x5b8] sm:$0xff]
        %v1949 = vld [vmem:[#allocation8 + $0x5d0] sm:$0xff]
        %v1950 = vld [vmem:[#allocation8 + $0x5e8] sm:$0xff]
        %v1951 = vld [vmem:[#allocation10 + $0x13] sm:$0x1]
        %v1953 = vlaneseq
        %v1954 = vshrl.u32 %v1953, 7
        %v1955 = vsub.s32 0, %v1954
        %v1956 = vrot.slane %v1951, %v1955
        %1958 = vmatprep.subr.mxu0 0.0
        %1959 = vmatpush1.msra.mxu0 %v1902
        %1960 = vmatprep.subr.mxu0 0.0
        %1961 = vmatpush1.msra.mxu0 %v1901
        %1962 = vmatprep.subr.mxu0 0.0
        %1963 = vmatpush1.msra.mxu0 %v1900
        %1964 = vmatprep.subr.mxu0 0.0
        %1965 = vmatpush1.msra.mxu0 %v1899
        %1966 = vmatprep.subr.mxu0 0.0
        %1967 = vmatpush1.msra.mxu0 %v1898
        %1968 = vmatprep.subr.mxu0 0.0
        %1969 = vmatpush1.msra.mxu0 %v1897
        %1970 = vmatprep.subr.mxu0 0.0
        %1971 = vmatpush1.msra.mxu0 %v1896
        %1972 = vmatprep.subr.mxu0 0.0
        %1973 = vmatpush1.msra.mxu0 %v1895
        %1974 = vmatprep.subr.mxu0 0.0
        %1975 = vmatpush1.msra.mxu0 %v1894
        %1976 = vmatprep.subr.mxu0 0.0
        %1977 = vmatpush1.msra.mxu0 %v1893
        %1978 = vmatprep.subr.mxu0 0.0
        %1979 = vmatpush1.msra.mxu0 %v1892
        %1980 = vmatprep.subr.mxu0 0.0
        %1981 = vmatpush1.msra.mxu0 %v1891
        %1982 = vmatprep.subr.mxu0 0.0
        %1983 = vmatpush1.msra.mxu0 %v1890
        %1984 = vmatprep.subr.mxu0 0.0
        %1985 = vmatpush1.msra.mxu0 %v1889
        %1986 = vmatprep.subr.mxu0 0.0
        %1987 = vmatpush1.msra.mxu0 %v1888
        %1988 = vmatprep.subr.mxu0 0.0
        %1989 = vmatpush1.msra.mxu0 %v1887
        %1990 = vmatprep.subr.mxu0 0.0
        %1991 = vmatpush2.msra.mxu0 %v1918
        %1992 = vmatprep.subr.mxu0 0.0
        %1993 = vmatpush2.msra.mxu0 %v1917
        %1994 = vmatprep.subr.mxu0 0.0
        %1995 = vmatpush2.msra.mxu0 %v1916
        %1996 = vmatprep.subr.mxu0 0.0
        %1997 = vmatpush2.msra.mxu0 %v1915
        %1998 = vmatprep.subr.mxu0 0.0
        %1999 = vmatpush2.msra.mxu0 %v1914
        %2000 = vmatprep.subr.mxu0 0.0
        %2001 = vmatpush2.msra.mxu0 %v1913
        %2002 = vmatprep.subr.mxu0 0.0
        %2003 = vmatpush2.msra.mxu0 %v1912
        %2004 = vmatprep.subr.mxu0 0.0
        %2005 = vmatpush2.msra.mxu0 %v1911
        %2006 = vmatprep.subr.mxu0 0.0
        %2007 = vmatpush2.msra.mxu0 %v1910
        %2008 = vmatprep.subr.mxu0 0.0
        %2009 = vmatpush2.msra.mxu0 %v1909
        %2010 = vmatprep.subr.mxu0 0.0
        %2011 = vmatpush2.msra.mxu0 %v1908
        %2012 = vmatprep.subr.mxu0 0.0
        %2013 = vmatpush2.msra.mxu0 %v1907
        %2014 = vmatprep.subr.mxu0 0.0
        %2015 = vmatpush2.msra.mxu0 %v1906
        %2016 = vmatprep.subr.mxu0 0.0
        %2017 = vmatpush2.msra.mxu0 %v1905
        %2018 = vmatprep.subr.mxu0 0.0
        %2019 = vmatpush2.msra.mxu0 %v1904
        %2020 = vmatprep.subr.mxu0 0.0
        %2021 = vmatpush2.msra.mxu0 %v1903
        %2022 = vmatprep.mubr.f32.mxu0 %v1872
        %2023 = vmatmul.mubr.f32.gmra.mxu0 %v1871
        %v2024 = vpop.f32.mrf.mxu0
        %v2025 = vadd.f32 %v1956, %v2024
        %v2026 = vpop.f32.mrf.mxu0
        %2027 = vmatprep.mubr.f32.mxu0 %v1876
        %2028 = vmatmul.mubr.f32.gmra.mxu0 %v1875
        %v2029 = vpop.f32.mrf.mxu0
        %v2030 = vadd.f32 %v1956, %v2029
        %v2031 = vpop.f32.mrf.mxu0
        %2032 = vmatprep.mubr.f32.mxu0 %v1880
        %2033 = vmatmul.mubr.f32.gmra.mxu0 %v1879
        %v2034 = vpop.f32.mrf.mxu0
        %v2035 = vadd.f32 %v1956, %v2034
        %v2036 = vpop.f32.mrf.mxu0
        %2037 = vmatprep.mubr.f32.mxu0 %v1884
        %2038 = vmatmul.mubr.f32.gmra.mxu0 %v1883
        %v2039 = vpop.f32.mrf.mxu0
        %v2040 = vadd.f32 %v1956, %v2039
        %v2041 = vpop.f32.mrf.mxu0
        %2042 = vdwg.mxu0
        %2043 = vmatprep.subr.mxu0 0.0
        %2044 = vmatpush1.msra.mxu0 %v1934
        %2045 = vmatprep.subr.mxu0 0.0
        %2046 = vmatpush1.msra.mxu0 %v1933
        %2047 = vmatprep.subr.mxu0 0.0
        %2048 = vmatpush1.msra.mxu0 %v1932
        %2049 = vmatprep.subr.mxu0 0.0
        %2050 = vmatpush1.msra.mxu0 %v1931
        %2051 = vmatprep.subr.mxu0 0.0
        %2052 = vmatpush1.msra.mxu0 %v1930
        %2053 = vmatprep.subr.mxu0 0.0
        %2054 = vmatpush1.msra.mxu0 %v1929
        %2055 = vmatprep.subr.mxu0 0.0
        %2056 = vmatpush1.msra.mxu0 %v1928
        %2057 = vmatprep.subr.mxu0 0.0
        %2058 = vmatpush1.msra.mxu0 %v1927
        %2059 = vmatprep.subr.mxu0 0.0
        %2060 = vmatpush1.msra.mxu0 %v1926
        %2061 = vmatprep.subr.mxu0 0.0
        %2062 = vmatpush1.msra.mxu0 %v1925
        %2063 = vmatprep.subr.mxu0 0.0
        %2064 = vmatpush1.msra.mxu0 %v1924
        %2065 = vmatprep.subr.mxu0 0.0
        %2066 = vmatpush1.msra.mxu0 %v1923
        %2067 = vmatprep.subr.mxu0 0.0
        %2068 = vmatpush1.msra.mxu0 %v1922
        %2069 = vmatprep.subr.mxu0 0.0
        %2070 = vmatpush1.msra.mxu0 %v1921
        %2071 = vmatprep.subr.mxu0 0.0
        %2072 = vmatpush1.msra.mxu0 %v1920
        %2073 = vmatprep.subr.mxu0 0.0
        %2074 = vmatpush1.msra.mxu0 %v1919
        %2075 = vmatprep.subr.mxu0 0.0
        %2076 = vmatpush2.msra.mxu0 %v1950
        %2077 = vmatprep.subr.mxu0 0.0
        %2078 = vmatpush2.msra.mxu0 %v1949
        %2079 = vmatprep.subr.mxu0 0.0
        %2080 = vmatpush2.msra.mxu0 %v1948
        %2081 = vmatprep.subr.mxu0 0.0
        %2082 = vmatpush2.msra.mxu0 %v1947
        %2083 = vmatprep.subr.mxu0 0.0
        %2084 = vmatpush2.msra.mxu0 %v1946
        %2085 = vmatprep.subr.mxu0 0.0
        %2086 = vmatpush2.msra.mxu0 %v1945
        %2087 = vmatprep.subr.mxu0 0.0
        %2088 = vmatpush2.msra.mxu0 %v1944
        %2089 = vmatprep.subr.mxu0 0.0
        %2090 = vmatpush2.msra.mxu0 %v1943
        %2091 = vmatprep.subr.mxu0 0.0
        %2092 = vmatpush2.msra.mxu0 %v1942
        %2093 = vmatprep.subr.mxu0 0.0
        %2094 = vmatpush2.msra.mxu0 %v1941
        %2095 = vmatprep.subr.mxu0 0.0
        %2096 = vmatpush2.msra.mxu0 %v1940
        %2097 = vmatprep.subr.mxu0 0.0
        %2098 = vmatpush2.msra.mxu0 %v1939
        %2099 = vmatprep.subr.mxu0 0.0
        %2100 = vmatpush2.msra.mxu0 %v1938
        %2101 = vmatprep.subr.mxu0 0.0
        %2102 = vmatpush2.msra.mxu0 %v1937
        %2103 = vmatprep.subr.mxu0 0.0
        %2104 = vmatpush2.msra.mxu0 %v1936
        %2105 = vmatprep.subr.mxu0 0.0
        %2106 = vmatpush2.msra.mxu0 %v1935
        %2107 = vmatprep.mubr.f32.mxu0 %v1874
        %2108 = vmatmul.mubr.f32.gmra.mxu0 %v1873
        %v2109 = vpop.f32.mrf.mxu0
        %v2110 = vadd.f32 %v2025, %v2109
        %v2111 = vpop.f32.mrf.mxu0
        %2112 = vmatprep.mubr.f32.mxu0 %v1878
        %2113 = vmatmul.mubr.f32.gmra.mxu0 %v1877
        %v2114 = vpop.f32.mrf.mxu0
        %v2115 = vadd.f32 %v2030, %v2114
        %v2116 = vpop.f32.mrf.mxu0
        %2117 = vmatprep.mubr.f32.mxu0 %v1882
        %2118 = vmatmul.mubr.f32.gmra.mxu0 %v1881
        %v2119 = vpop.f32.mrf.mxu0
        %v2120 = vadd.f32 %v2035, %v2119
        %v2121 = vpop.f32.mrf.mxu0
        %2122 = vmatprep.mubr.f32.mxu0 %v1886
        %2123 = vmatmul.mubr.f32.gmra.mxu0 %v1885
        %v2124 = vpop.f32.mrf.mxu0
        %v2125 = vadd.f32 %v2040, %v2124
        %v2126 = vpop.f32.mrf.mxu0
        %2127 = vdwg.mxu0
        %2128 = vmax.xlane.f32.xlu0 %v2110
        %v2129 = vpop.xlane.xlu0 %2128
        %2130 = vmax.xlane.f32.xlu0 %v2115
        %v2131 = vpop.xlane.xlu0 %2130
        %2132 = vmax.xlane.f32.xlu0 %v2120
        %v2133 = vpop.xlane.xlu0 %2132
        %2134 = vmax.xlane.f32.xlu0 %v2125
        %v2135 = vpop.xlane.xlu0 %2134
        %v2136 = vsub.f32 %v2110, %v2129
        %v2137 = vsub.f32 %v2115, %v2131
        %v2138 = vsub.f32 %v2120, %v2133
        %v2139 = vsub.f32 %v2125, %v2135
        %v2140 = vmul.f32 %v2136, 1.442695
        %v2141 = vpow.pop %v2140
        %v2142 = vmul.f32 %v2137, 1.442695
        %v2143 = vpow.pop %v2142
        %v2144 = vmul.f32 %v2138, 1.442695
        %v2145 = vpow.pop %v2144
        %v2146 = vmul.f32 %v2139, 1.442695
        %v2147 = vpow.pop %v2146
        %v2148 = vld [vmem:[#allocation7 + $0x50] sm:$0xff]
        %v2149 = vld [vmem:[#allocation7 + $0xc8] sm:$0xff]
        %v2150 = vld [vmem:[#allocation7 + $0x140] sm:$0xff]
        %v2151 = vld [vmem:[#allocation7 + $0x1b8] sm:$0xff]
        %v2152 = vld [vmem:[#allocation7 + $0x230] sm:$0xff]
        %v2153 = vld [vmem:[#allocation7 + $0x2a8] sm:$0xff]
        %v2154 = vld [vmem:[#allocation7 + $0x320] sm:$0xff]
        %v2155 = vld [vmem:[#allocation7 + $0x398] sm:$0xff]
        %v2156 = vld [vmem:[#allocation7 + $0x410] sm:$0xff]
        %v2157 = vld [vmem:[#allocation7 + $0x488] sm:$0xff]
        %v2158 = vld [vmem:[#allocation7 + $0x500] sm:$0xff]
        %v2159 = vld [vmem:[#allocation7 + $0x578] sm:$0xff]
        %v2160 = vld [vmem:[#allocation7 + $0x5f0] sm:$0xff]
        %v2161 = vld [vmem:[#allocation7 + $0x668] sm:$0xff]
        %v2162 = vld [vmem:[#allocation7 + $0x6e0] sm:$0xff]
        %v2163 = vld [vmem:[#allocation7 + $0x758] sm:$0xff]
        %2164 = vmatprep.subr.mxu0 0.0
        %2165 = vmatpush1.msra.mxu0 %v2163
        %2166 = vmatprep.subr.mxu0 0.0
        %2167 = vmatpush1.msra.mxu0 %v2162
        %2168 = vmatprep.subr.mxu0 0.0
        %2169 = vmatpush1.msra.mxu0 %v2161
        %2170 = vmatprep.subr.mxu0 0.0
        %2171 = vmatpush1.msra.mxu0 %v2160
        %2172 = vmatprep.subr.mxu0 0.0
        %2173 = vmatpush1.msra.mxu0 %v2159
        %2174 = vmatprep.subr.mxu0 0.0
        %2175 = vmatpush1.msra.mxu0 %v2158
        %2176 = vmatprep.subr.mxu0 0.0
        %2177 = vmatpush1.msra.mxu0 %v2157
        %2178 = vmatprep.subr.mxu0 0.0
        %2179 = vmatpush1.msra.mxu0 %v2156
        %2180 = vmatprep.subr.mxu0 0.0
        %2181 = vmatpush1.msra.mxu0 %v2155
        %2182 = vmatprep.subr.mxu0 0.0
        %2183 = vmatpush1.msra.mxu0 %v2154
        %2184 = vmatprep.subr.mxu0 0.0
        %2185 = vmatpush1.msra.mxu0 %v2153
        %2186 = vmatprep.subr.mxu0 0.0
        %2187 = vmatpush1.msra.mxu0 %v2152
        %2188 = vmatprep.subr.mxu0 0.0
        %2189 = vmatpush1.msra.mxu0 %v2151
        %2190 = vmatprep.subr.mxu0 0.0
        %2191 = vmatpush1.msra.mxu0 %v2150
        %2192 = vmatprep.subr.mxu0 0.0
        %2193 = vmatpush1.msra.mxu0 %v2149
        %2194 = vmatprep.subr.mxu0 0.0
        %2195 = vmatpush1.msra.mxu0 %v2148
        %2196 = vmatprep.subr.mxu0 0.0
        %2197 = vmatpush2.msra.mxu0 0.0
        %2198 = vmatprep.subr.mxu0 0.0
        %2199 = vmatpush2.msra.mxu0 0.0
        %2200 = vmatprep.subr.mxu0 0.0
        %2201 = vmatpush2.msra.mxu0 0.0
        %2202 = vmatprep.subr.mxu0 0.0
        %2203 = vmatpush2.msra.mxu0 0.0
        %2204 = vmatprep.subr.mxu0 0.0
        %2205 = vmatpush2.msra.mxu0 0.0
        %2206 = vmatprep.subr.mxu0 0.0
        %2207 = vmatpush2.msra.mxu0 0.0
        %2208 = vmatprep.subr.mxu0 0.0
        %2209 = vmatpush2.msra.mxu0 0.0
        %2210 = vmatprep.subr.mxu0 0.0
        %2211 = vmatpush2.msra.mxu0 0.0
        %2212 = vmatprep.subr.mxu0 0.0
        %2213 = vmatpush2.msra.mxu0 0.0
        %2214 = vmatprep.subr.mxu0 0.0
        %2215 = vmatpush2.msra.mxu0 0.0
        %2216 = vmatprep.subr.mxu0 0.0
        %2217 = vmatpush2.msra.mxu0 0.0
        %2218 = vmatprep.subr.mxu0 0.0
        %2219 = vmatpush2.msra.mxu0 0.0
        %2220 = vmatprep.subr.mxu0 0.0
        %2221 = vmatpush2.msra.mxu0 0.0
        %2222 = vmatprep.subr.mxu0 0.0
        %2223 = vmatpush2.msra.mxu0 0.0
        %2224 = vmatprep.subr.mxu0 0.0
        %2225 = vmatpush2.msra.mxu0 0.0
        %2226 = vmatprep.subr.mxu0 0.0
        %2227 = vmatpush2.msra.mxu0 0.0
        %2228 = vmatprep.mubr.f32.mxu0 0.0
        %2229 = vmatmul.mubr.f32.gmra.mxu0 %v2141
        %v2230 = vpop.f32.mrf.mxu0
        %v2231 = vadd.f32 0.0, %v2230
        %v2232 = vpop.f32.mrf.mxu0
        %2233 = vmatprep.mubr.f32.mxu0 0.0
        %2234 = vmatmul.mubr.f32.gmra.mxu0 %v2143
        %v2235 = vpop.f32.mrf.mxu0
        %v2236 = vadd.f32 0.0, %v2235
        %v2237 = vpop.f32.mrf.mxu0
        %2238 = vmatprep.mubr.f32.mxu0 0.0
        %2239 = vmatmul.mubr.f32.gmra.mxu0 %v2145
        %v2240 = vpop.f32.mrf.mxu0
        %v2241 = vadd.f32 0.0, %v2240
        %v2242 = vpop.f32.mrf.mxu0
        %2243 = vmatprep.mubr.f32.mxu0 0.0
        %2244 = vmatmul.mubr.f32.gmra.mxu0 %v2147
        %v2245 = vpop.f32.mrf.mxu0
        %v2246 = vadd.f32 0.0, %v2245
        %v2247 = vpop.f32.mrf.mxu0
        %2248 = vdwg.mxu0
        %v2249 = vld [vmem:[#allocation7 + $0x58] sm:$0xff]
        %v2250 = vld [vmem:[#allocation7 + $0x60] sm:$0xff]
        %v2251 = vld [vmem:[#allocation7 + $0x68] sm:$0xff]
        %v2252 = vld [vmem:[#allocation7 + $0x70] sm:$0xff]
        %v2253 = vld [vmem:[#allocation7 + $0xd0] sm:$0xff]
        %v2254 = vld [vmem:[#allocation7 + $0xd8] sm:$0xff]
        %v2255 = vld [vmem:[#allocation7 + $0xe0] sm:$0xff]
        %v2256 = vld [vmem:[#allocation7 + $0xe8] sm:$0xff]
        %v2257 = vld [vmem:[#allocation7 + $0x148] sm:$0xff]
        %v2258 = vld [vmem:[#allocation7 + $0x150] sm:$0xff]
        %v2259 = vld [vmem:[#allocation7 + $0x158] sm:$0xff]
        %v2260 = vld [vmem:[#allocation7 + $0x160] sm:$0xff]
        %v2261 = vld [vmem:[#allocation7 + $0x1c0] sm:$0xff]
        %v2262 = vld [vmem:[#allocation7 + $0x1c8] sm:$0xff]
        %v2263 = vld [vmem:[#allocation7 + $0x1d0] sm:$0xff]
        %v2264 = vld [vmem:[#allocation7 + $0x1d8] sm:$0xff]
        %v2265 = vld [vmem:[#allocation7 + $0x238] sm:$0xff]
        %v2266 = vld [vmem:[#allocation7 + $0x240] sm:$0xff]
        %v2267 = vld [vmem:[#allocation7 + $0x248] sm:$0xff]
        %v2268 = vld [vmem:[#allocation7 + $0x250] sm:$0xff]
        %v2269 = vld [vmem:[#allocation7 + $0x2b0] sm:$0xff]
        %v2270 = vld [vmem:[#allocation7 + $0x2b8] sm:$0xff]
        %v2271 = vld [vmem:[#allocation7 + $0x2c0] sm:$0xff]
        %v2272 = vld [vmem:[#allocation7 + $0x2c8] sm:$0xff]
        %v2273 = vld [vmem:[#allocation7 + $0x328] sm:$0xff]
        %v2274 = vld [vmem:[#allocation7 + $0x330] sm:$0xff]
        %v2275 = vld [vmem:[#allocation7 + $0x338] sm:$0xff]
        %v2276 = vld [vmem:[#allocation7 + $0x340] sm:$0xff]
        %v2277 = vld [vmem:[#allocation7 + $0x3a0] sm:$0xff]
        %v2278 = vld [vmem:[#allocation7 + $0x3a8] sm:$0xff]
        %v2279 = vld [vmem:[#allocation7 + $0x3b0] sm:$0xff]
        %v2280 = vld [vmem:[#allocation7 + $0x3b8] sm:$0xff]
        %v2281 = vld [vmem:[#allocation7 + $0x418] sm:$0xff]
        %v2282 = vld [vmem:[#allocation7 + $0x420] sm:$0xff]
        %v2283 = vld [vmem:[#allocation7 + $0x428] sm:$0xff]
        %v2284 = vld [vmem:[#allocation7 + $0x430] sm:$0xff]
        %v2285 = vld [vmem:[#allocation7 + $0x490] sm:$0xff]
        %v2286 = vld [vmem:[#allocation7 + $0x498] sm:$0xff]
        %v2287 = vld [vmem:[#allocation7 + $0x4a0] sm:$0xff]
        %v2288 = vld [vmem:[#allocation7 + $0x4a8] sm:$0xff]
        %v2289 = vld [vmem:[#allocation7 + $0x508] sm:$0xff]
        %v2290 = vld [vmem:[#allocation7 + $0x510] sm:$0xff]
        %v2291 = vld [vmem:[#allocation7 + $0x518] sm:$0xff]
        %v2292 = vld [vmem:[#allocation7 + $0x520] sm:$0xff]
        %v2293 = vld [vmem:[#allocation7 + $0x580] sm:$0xff]
        %v2294 = vld [vmem:[#allocation7 + $0x588] sm:$0xff]
        %v2295 = vld [vmem:[#allocation7 + $0x590] sm:$0xff]
        %v2296 = vld [vmem:[#allocation7 + $0x598] sm:$0xff]
        %v2297 = vld [vmem:[#allocation7 + $0x5f8] sm:$0xff]
        %v2298 = vld [vmem:[#allocation7 + $0x600] sm:$0xff]
        %v2299 = vld [vmem:[#allocation7 + $0x608] sm:$0xff]
        %v2300 = vld [vmem:[#allocation7 + $0x610] sm:$0xff]
        %v2301 = vld [vmem:[#allocation7 + $0x670] sm:$0xff]
        %v2302 = vld [vmem:[#allocation7 + $0x678] sm:$0xff]
        %v2303 = vld [vmem:[#allocation7 + $0x680] sm:$0xff]
        %v2304 = vld [vmem:[#allocation7 + $0x688] sm:$0xff]
        %v2305 = vld [vmem:[#allocation7 + $0x6e8] sm:$0xff]
        %v2306 = vld [vmem:[#allocation7 + $0x6f0] sm:$0xff]
        %v2307 = vld [vmem:[#allocation7 + $0x6f8] sm:$0xff]
        %v2308 = vld [vmem:[#allocation7 + $0x700] sm:$0xff]
        %v2309 = vld [vmem:[#allocation7 + $0x760] sm:$0xff]
        %v2310 = vld [vmem:[#allocation7 + $0x768] sm:$0xff]
        %v2311 = vld [vmem:[#allocation7 + $0x770] sm:$0xff]
        %v2312 = vld [vmem:[#allocation7 + $0x778] sm:$0xff]
        %2313 = vmatprep.subr.mxu0 %v2310
        %2314 = vmatpush1.msra.mxu0 %v2309
        %2315 = vmatprep.subr.mxu0 %v2306
        %2316 = vmatpush1.msra.mxu0 %v2305
        %2317 = vmatprep.subr.mxu0 %v2302
        %2318 = vmatpush1.msra.mxu0 %v2301
        %2319 = vmatprep.subr.mxu0 %v2298
        %2320 = vmatpush1.msra.mxu0 %v2297
        %2321 = vmatprep.subr.mxu0 %v2294
        %2322 = vmatpush1.msra.mxu0 %v2293
        %2323 = vmatprep.subr.mxu0 %v2290
        %2324 = vmatpush1.msra.mxu0 %v2289
        %2325 = vmatprep.subr.mxu0 %v2286
        %2326 = vmatpush1.msra.mxu0 %v2285
        %2327 = vmatprep.subr.mxu0 %v2282
        %2328 = vmatpush1.msra.mxu0 %v2281
        %2329 = vmatprep.subr.mxu0 %v2278
        %2330 = vmatpush1.msra.mxu0 %v2277
        %2331 = vmatprep.subr.mxu0 %v2274
        %2332 = vmatpush1.msra.mxu0 %v2273
        %2333 = vmatprep.subr.mxu0 %v2270
        %2334 = vmatpush1.msra.mxu0 %v2269
        %2335 = vmatprep.subr.mxu0 %v2266
        %2336 = vmatpush1.msra.mxu0 %v2265
        %2337 = vmatprep.subr.mxu0 %v2262
        %2338 = vmatpush1.msra.mxu0 %v2261
        %2339 = vmatprep.subr.mxu0 %v2258
        %2340 = vmatpush1.msra.mxu0 %v2257
        %2341 = vmatprep.subr.mxu0 %v2254
        %2342 = vmatpush1.msra.mxu0 %v2253
        %2343 = vmatprep.subr.mxu0 %v2250
        %2344 = vmatpush1.msra.mxu0 %v2249
        %2345 = vmatprep.subr.mxu0 0.0
        %2346 = vmatpush2.msra.mxu0 0.0
        %2347 = vmatprep.subr.mxu0 0.0
        %2348 = vmatpush2.msra.mxu0 0.0
        %2349 = vmatprep.subr.mxu0 0.0
        %2350 = vmatpush2.msra.mxu0 0.0
        %2351 = vmatprep.subr.mxu0 0.0
        %2352 = vmatpush2.msra.mxu0 0.0
        %2353 = vmatprep.subr.mxu0 0.0
        %2354 = vmatpush2.msra.mxu0 0.0
        %2355 = vmatprep.subr.mxu0 0.0
        %2356 = vmatpush2.msra.mxu0 0.0
        %2357 = vmatprep.subr.mxu0 0.0
        %2358 = vmatpush2.msra.mxu0 0.0
        %2359 = vmatprep.subr.mxu0 0.0
        %2360 = vmatpush2.msra.mxu0 0.0
        %2361 = vmatprep.subr.mxu0 0.0
        %2362 = vmatpush2.msra.mxu0 0.0
        %2363 = vmatprep.subr.mxu0 0.0
        %2364 = vmatpush2.msra.mxu0 0.0
        %2365 = vmatprep.subr.mxu0 0.0
        %2366 = vmatpush2.msra.mxu0 0.0
        %2367 = vmatprep.subr.mxu0 0.0
        %2368 = vmatpush2.msra.mxu0 0.0
        %2369 = vmatprep.subr.mxu0 0.0
        %2370 = vmatpush2.msra.mxu0 0.0
        %2371 = vmatprep.subr.mxu0 0.0
        %2372 = vmatpush2.msra.mxu0 0.0
        %2373 = vmatprep.subr.mxu0 0.0
        %2374 = vmatpush2.msra.mxu0 0.0
        %2375 = vmatprep.subr.mxu0 0.0
        %2376 = vmatpush2.msra.mxu0 0.0
        %2377 = vmatprep.mubr.f32.mxu0 0.0
        %2378 = vmatmul.mubr.f32.gmra.mxu0 %v2141
        %v2379 = vpop.f32.mrf.mxu0
        %v2380 = vadd.f32 0.0, %v2379
        %v2381 = vpop.f32.mrf.mxu0
        %v2382 = vadd.f32 0.0, %v2381
        %2383 = vmatprep.mubr.f32.mxu0 0.0
        %2384 = vmatmul.mubr.f32.gmra.mxu0 %v2143
        %v2385 = vpop.f32.mrf.mxu0
        %v2386 = vadd.f32 0.0, %v2385
        %v2387 = vpop.f32.mrf.mxu0
        %v2388 = vadd.f32 0.0, %v2387
        %2389 = vmatprep.mubr.f32.mxu0 0.0
        %2390 = vmatmul.mubr.f32.gmra.mxu0 %v2145
        %v2391 = vpop.f32.mrf.mxu0
        %v2392 = vadd.f32 0.0, %v2391
        %v2393 = vpop.f32.mrf.mxu0
        %v2394 = vadd.f32 0.0, %v2393
        %2395 = vmatprep.mubr.f32.mxu0 0.0
        %2396 = vmatmul.mubr.f32.gmra.mxu0 %v2147
        %v2397 = vpop.f32.mrf.mxu0
        %v2398 = vadd.f32 0.0, %v2397
        %v2399 = vpop.f32.mrf.mxu0
        %v2400 = vadd.f32 0.0, %v2399
        %2401 = vdwg.mxu0
        %2402 = vmatprep.subr.mxu0 %v2312
        %2403 = vmatpush1.msra.mxu0 %v2311
        %2404 = vmatprep.subr.mxu0 %v2308
        %2405 = vmatpush1.msra.mxu0 %v2307
        %2406 = vmatprep.subr.mxu0 %v2304
        %2407 = vmatpush1.msra.mxu0 %v2303
        %2408 = vmatprep.subr.mxu0 %v2300
        %2409 = vmatpush1.msra.mxu0 %v2299
        %2410 = vmatprep.subr.mxu0 %v2296
        %2411 = vmatpush1.msra.mxu0 %v2295
        %2412 = vmatprep.subr.mxu0 %v2292
        %2413 = vmatpush1.msra.mxu0 %v2291
        %2414 = vmatprep.subr.mxu0 %v2288
        %2415 = vmatpush1.msra.mxu0 %v2287
        %2416 = vmatprep.subr.mxu0 %v2284
        %2417 = vmatpush1.msra.mxu0 %v2283
        %2418 = vmatprep.subr.mxu0 %v2280
        %2419 = vmatpush1.msra.mxu0 %v2279
        %2420 = vmatprep.subr.mxu0 %v2276
        %2421 = vmatpush1.msra.mxu0 %v2275
        %2422 = vmatprep.subr.mxu0 %v2272
        %2423 = vmatpush1.msra.mxu0 %v2271
        %2424 = vmatprep.subr.mxu0 %v2268
        %2425 = vmatpush1.msra.mxu0 %v2267
        %2426 = vmatprep.subr.mxu0 %v2264
        %2427 = vmatpush1.msra.mxu0 %v2263
        %2428 = vmatprep.subr.mxu0 %v2260
        %2429 = vmatpush1.msra.mxu0 %v2259
        %2430 = vmatprep.subr.mxu0 %v2256
        %2431 = vmatpush1.msra.mxu0 %v2255
        %2432 = vmatprep.subr.mxu0 %v2252
        %2433 = vmatpush1.msra.mxu0 %v2251
        %2434 = vmatprep.subr.mxu0 0.0
        %2435 = vmatpush2.msra.mxu0 0.0
        %2436 = vmatprep.subr.mxu0 0.0
        %2437 = vmatpush2.msra.mxu0 0.0
        %2438 = vmatprep.subr.mxu0 0.0
        %2439 = vmatpush2.msra.mxu0 0.0
        %2440 = vmatprep.subr.mxu0 0.0
        %2441 = vmatpush2.msra.mxu0 0.0
        %2442 = vmatprep.subr.mxu0 0.0
        %2443 = vmatpush2.msra.mxu0 0.0
        %2444 = vmatprep.subr.mxu0 0.0
        %2445 = vmatpush2.msra.mxu0 0.0
        %2446 = vmatprep.subr.mxu0 0.0
        %2447 = vmatpush2.msra.mxu0 0.0
        %2448 = vmatprep.subr.mxu0 0.0
        %2449 = vmatpush2.msra.mxu0 0.0
        %2450 = vmatprep.subr.mxu0 0.0
        %2451 = vmatpush2.msra.mxu0 0.0
        %2452 = vmatprep.subr.mxu0 0.0
        %2453 = vmatpush2.msra.mxu0 0.0
        %2454 = vmatprep.subr.mxu0 0.0
        %2455 = vmatpush2.msra.mxu0 0.0
        %2456 = vmatprep.subr.mxu0 0.0
        %2457 = vmatpush2.msra.mxu0 0.0
        %2458 = vmatprep.subr.mxu0 0.0
        %2459 = vmatpush2.msra.mxu0 0.0
        %2460 = vmatprep.subr.mxu0 0.0
        %2461 = vmatpush2.msra.mxu0 0.0
        %2462 = vmatprep.subr.mxu0 0.0
        %2463 = vmatpush2.msra.mxu0 0.0
        %2464 = vmatprep.subr.mxu0 0.0
        %2465 = vmatpush2.msra.mxu0 0.0
        %2466 = vmatprep.mubr.f32.mxu0 0.0
        %2467 = vmatmul.mubr.f32.gmra.mxu0 %v2141
        %v2468 = vpop.f32.mrf.mxu0
        %v2469 = vadd.f32 0.0, %v2468
        %v2470 = vpop.f32.mrf.mxu0
        %v2471 = vadd.f32 0.0, %v2470
        %2472 = vmatprep.mubr.f32.mxu0 0.0
        %2473 = vmatmul.mubr.f32.gmra.mxu0 %v2143
        %v2474 = vpop.f32.mrf.mxu0
        %v2475 = vadd.f32 0.0, %v2474
        %v2476 = vpop.f32.mrf.mxu0
        %v2477 = vadd.f32 0.0, %v2476
        %2478 = vmatprep.mubr.f32.mxu0 0.0
        %2479 = vmatmul.mubr.f32.gmra.mxu0 %v2145
        %v2480 = vpop.f32.mrf.mxu0
        %v2481 = vadd.f32 0.0, %v2480
        %v2482 = vpop.f32.mrf.mxu0
        %v2483 = vadd.f32 0.0, %v2482
        %2484 = vmatprep.mubr.f32.mxu0 0.0
        %2485 = vmatmul.mubr.f32.gmra.mxu0 %v2147
        %v2486 = vpop.f32.mrf.mxu0
        %v2487 = vadd.f32 0.0, %v2486
        %v2488 = vpop.f32.mrf.mxu0
        %v2489 = vadd.f32 0.0, %v2488
        %2490 = vdwg.mxu0
        %v2491 = vmul.f32 %v2380, %v1255
        %v2492 = vmul.f32 %v2382, %v1257
        %v2493 = vmul.f32 %v2469, %v1344
        %v2494 = vmul.f32 %v2471, %v1346
        %v2495 = vmul.f32 %v2386, %v1261
        %v2496 = vmul.f32 %v2388, %v1263
        %v2497 = vmul.f32 %v2475, %v1350
        %v2498 = vmul.f32 %v2477, %v1352
        %v2499 = vmul.f32 %v2392, %v1267
        %v2500 = vmul.f32 %v2394, %v1269
        %v2501 = vmul.f32 %v2481, %v1356
        %v2502 = vmul.f32 %v2483, %v1358
        %v2503 = vmul.f32 %v2398, %v1273
        %v2504 = vmul.f32 %v2400, %v1275
        %v2505 = vmul.f32 %v2487, %v1362
        %v2506 = vmul.f32 %v2489, %v1364
        %v2507 = vld [vmem:[#allocation8 + $0x8] sm:$0xff]
        %v2508 = vld [vmem:[#allocation8 + $0x20] sm:$0xff]
        %v2509 = vld [vmem:[#allocation8 + $0x38] sm:$0xff]
        %v2510 = vld [vmem:[#allocation8 + $0x50] sm:$0xff]
        %v2511 = vld [vmem:[#allocation8 + $0x68] sm:$0xff]
        %v2512 = vld [vmem:[#allocation8 + $0x80] sm:$0xff]
        %v2513 = vld [vmem:[#allocation8 + $0x98] sm:$0xff]
        %v2514 = vld [vmem:[#allocation8 + $0xb0] sm:$0xff]
        %v2515 = vld [vmem:[#allocation8 + $0xc8] sm:$0xff]
        %v2516 = vld [vmem:[#allocation8 + $0xe0] sm:$0xff]
        %v2517 = vld [vmem:[#allocation8 + $0xf8] sm:$0xff]
        %v2518 = vld [vmem:[#allocation8 + $0x110] sm:$0xff]
        %v2519 = vld [vmem:[#allocation8 + $0x128] sm:$0xff]
        %v2520 = vld [vmem:[#allocation8 + $0x140] sm:$0xff]
        %v2521 = vld [vmem:[#allocation8 + $0x158] sm:$0xff]
        %v2522 = vld [vmem:[#allocation8 + $0x170] sm:$0xff]
        %v2523 = vld [vmem:[#allocation8 + $0x188] sm:$0xff]
        %v2524 = vld [vmem:[#allocation8 + $0x1a0] sm:$0xff]
        %v2525 = vld [vmem:[#allocation8 + $0x1b8] sm:$0xff]
        %v2526 = vld [vmem:[#allocation8 + $0x1d0] sm:$0xff]
        %v2527 = vld [vmem:[#allocation8 + $0x1e8] sm:$0xff]
        %v2528 = vld [vmem:[#allocation8 + $0x200] sm:$0xff]
        %v2529 = vld [vmem:[#allocation8 + $0x218] sm:$0xff]
        %v2530 = vld [vmem:[#allocation8 + $0x230] sm:$0xff]
        %v2531 = vld [vmem:[#allocation8 + $0x248] sm:$0xff]
        %v2532 = vld [vmem:[#allocation8 + $0x260] sm:$0xff]
        %v2533 = vld [vmem:[#allocation8 + $0x278] sm:$0xff]
        %v2534 = vld [vmem:[#allocation8 + $0x290] sm:$0xff]
        %v2535 = vld [vmem:[#allocation8 + $0x2a8] sm:$0xff]
        %v2536 = vld [vmem:[#allocation8 + $0x2c0] sm:$0xff]
        %v2537 = vld [vmem:[#allocation8 + $0x2d8] sm:$0xff]
        %v2538 = vld [vmem:[#allocation8 + $0x2f0] sm:$0xff]
        %v2539 = vld [vmem:[#allocation8 + $0x308] sm:$0xff]
        %v2540 = vld [vmem:[#allocation8 + $0x320] sm:$0xff]
        %v2541 = vld [vmem:[#allocation8 + $0x338] sm:$0xff]
        %v2542 = vld [vmem:[#allocation8 + $0x350] sm:$0xff]
        %v2543 = vld [vmem:[#allocation8 + $0x368] sm:$0xff]
        %v2544 = vld [vmem:[#allocation8 + $0x380] sm:$0xff]
        %v2545 = vld [vmem:[#allocation8 + $0x398] sm:$0xff]
        %v2546 = vld [vmem:[#allocation8 + $0x3b0] sm:$0xff]
        %v2547 = vld [vmem:[#allocation8 + $0x3c8] sm:$0xff]
        %v2548 = vld [vmem:[#allocation8 + $0x3e0] sm:$0xff]
        %v2549 = vld [vmem:[#allocation8 + $0x3f8] sm:$0xff]
        %v2550 = vld [vmem:[#allocation8 + $0x410] sm:$0xff]
        %v2551 = vld [vmem:[#allocation8 + $0x428] sm:$0xff]
        %v2552 = vld [vmem:[#allocation8 + $0x440] sm:$0xff]
        %v2553 = vld [vmem:[#allocation8 + $0x458] sm:$0xff]
        %v2554 = vld [vmem:[#allocation8 + $0x470] sm:$0xff]
        %v2555 = vld [vmem:[#allocation8 + $0x488] sm:$0xff]
        %v2556 = vld [vmem:[#allocation8 + $0x4a0] sm:$0xff]
        %v2557 = vld [vmem:[#allocation8 + $0x4b8] sm:$0xff]
        %v2558 = vld [vmem:[#allocation8 + $0x4d0] sm:$0xff]
        %v2559 = vld [vmem:[#allocation8 + $0x4e8] sm:$0xff]
        %v2560 = vld [vmem:[#allocation8 + $0x500] sm:$0xff]
        %v2561 = vld [vmem:[#allocation8 + $0x518] sm:$0xff]
        %v2562 = vld [vmem:[#allocation8 + $0x530] sm:$0xff]
        %v2563 = vld [vmem:[#allocation8 + $0x548] sm:$0xff]
        %v2564 = vld [vmem:[#allocation8 + $0x560] sm:$0xff]
        %v2565 = vld [vmem:[#allocation8 + $0x578] sm:$0xff]
        %v2566 = vld [vmem:[#allocation8 + $0x590] sm:$0xff]
        %v2567 = vld [vmem:[#allocation8 + $0x5a8] sm:$0xff]
        %v2568 = vld [vmem:[#allocation8 + $0x5c0] sm:$0xff]
        %v2569 = vld [vmem:[#allocation8 + $0x5d8] sm:$0xff]
        %v2570 = vld [vmem:[#allocation8 + $0x5f0] sm:$0xff]
        %2571 = vmatprep.subr.mxu0 0.0
        %2572 = vmatpush1.msra.mxu0 %v2522
        %2573 = vmatprep.subr.mxu0 0.0
        %2574 = vmatpush1.msra.mxu0 %v2521
        %2575 = vmatprep.subr.mxu0 0.0
        %2576 = vmatpush1.msra.mxu0 %v2520
        %2577 = vmatprep.subr.mxu0 0.0
        %2578 = vmatpush1.msra.mxu0 %v2519
        %2579 = vmatprep.subr.mxu0 0.0
        %2580 = vmatpush1.msra.mxu0 %v2518
        %2581 = vmatprep.subr.mxu0 0.0
        %2582 = vmatpush1.msra.mxu0 %v2517
        %2583 = vmatprep.subr.mxu0 0.0
        %2584 = vmatpush1.msra.mxu0 %v2516
        %2585 = vmatprep.subr.mxu0 0.0
        %2586 = vmatpush1.msra.mxu0 %v2515
        %2587 = vmatprep.subr.mxu0 0.0
        %2588 = vmatpush1.msra.mxu0 %v2514
        %2589 = vmatprep.subr.mxu0 0.0
        %2590 = vmatpush1.msra.mxu0 %v2513
        %2591 = vmatprep.subr.mxu0 0.0
        %2592 = vmatpush1.msra.mxu0 %v2512
        %2593 = vmatprep.subr.mxu0 0.0
        %2594 = vmatpush1.msra.mxu0 %v2511
        %2595 = vmatprep.subr.mxu0 0.0
        %2596 = vmatpush1.msra.mxu0 %v2510
        %2597 = vmatprep.subr.mxu0 0.0
        %2598 = vmatpush1.msra.mxu0 %v2509
        %2599 = vmatprep.subr.mxu0 0.0
        %2600 = vmatpush1.msra.mxu0 %v2508
        %2601 = vmatprep.subr.mxu0 0.0
        %2602 = vmatpush1.msra.mxu0 %v2507
        %2603 = vmatprep.subr.mxu0 0.0
        %2604 = vmatpush2.msra.mxu0 %v2538
        %2605 = vmatprep.subr.mxu0 0.0
        %2606 = vmatpush2.msra.mxu0 %v2537
        %2607 = vmatprep.subr.mxu0 0.0
        %2608 = vmatpush2.msra.mxu0 %v2536
        %2609 = vmatprep.subr.mxu0 0.0
        %2610 = vmatpush2.msra.mxu0 %v2535
        %2611 = vmatprep.subr.mxu0 0.0
        %2612 = vmatpush2.msra.mxu0 %v2534
        %2613 = vmatprep.subr.mxu0 0.0
        %2614 = vmatpush2.msra.mxu0 %v2533
        %2615 = vmatprep.subr.mxu0 0.0
        %2616 = vmatpush2.msra.mxu0 %v2532
        %2617 = vmatprep.subr.mxu0 0.0
        %2618 = vmatpush2.msra.mxu0 %v2531
        %2619 = vmatprep.subr.mxu0 0.0
        %2620 = vmatpush2.msra.mxu0 %v2530
        %2621 = vmatprep.subr.mxu0 0.0
        %2622 = vmatpush2.msra.mxu0 %v2529
        %2623 = vmatprep.subr.mxu0 0.0
        %2624 = vmatpush2.msra.mxu0 %v2528
        %2625 = vmatprep.subr.mxu0 0.0
        %2626 = vmatpush2.msra.mxu0 %v2527
        %2627 = vmatprep.subr.mxu0 0.0
        %2628 = vmatpush2.msra.mxu0 %v2526
        %2629 = vmatprep.subr.mxu0 0.0
        %2630 = vmatpush2.msra.mxu0 %v2525
        %2631 = vmatprep.subr.mxu0 0.0
        %2632 = vmatpush2.msra.mxu0 %v2524
        %2633 = vmatprep.subr.mxu0 0.0
        %2634 = vmatpush2.msra.mxu0 %v2523
        %2635 = vmatprep.mubr.f32.mxu0 %v2492
        %2636 = vmatmul.mubr.f32.gmra.mxu0 %v2491
        %v2637 = vpop.f32.mrf.mxu0
        %v2638 = vadd.f32 0.0, %v2637
        %v2639 = vpop.f32.mrf.mxu0
        %2640 = vmatprep.mubr.f32.mxu0 %v2496
        %2641 = vmatmul.mubr.f32.gmra.mxu0 %v2495
        %v2642 = vpop.f32.mrf.mxu0
        %v2643 = vadd.f32 0.0, %v2642
        %v2644 = vpop.f32.mrf.mxu0
        %2645 = vmatprep.mubr.f32.mxu0 %v2500
        %2646 = vmatmul.mubr.f32.gmra.mxu0 %v2499
        %v2647 = vpop.f32.mrf.mxu0
        %v2648 = vadd.f32 0.0, %v2647
        %v2649 = vpop.f32.mrf.mxu0
        %2650 = vmatprep.mubr.f32.mxu0 %v2504
        %2651 = vmatmul.mubr.f32.gmra.mxu0 %v2503
        %v2652 = vpop.f32.mrf.mxu0
        %v2653 = vadd.f32 0.0, %v2652
        %v2654 = vpop.f32.mrf.mxu0
        %2655 = vdwg.mxu0
        %2656 = vmatprep.subr.mxu0 0.0
        %2657 = vmatpush1.msra.mxu0 %v2554
        %2658 = vmatprep.subr.mxu0 0.0
        %2659 = vmatpush1.msra.mxu0 %v2553
        %2660 = vmatprep.subr.mxu0 0.0
        %2661 = vmatpush1.msra.mxu0 %v2552
        %2662 = vmatprep.subr.mxu0 0.0
        %2663 = vmatpush1.msra.mxu0 %v2551
        %2664 = vmatprep.subr.mxu0 0.0
        %2665 = vmatpush1.msra.mxu0 %v2550
        %2666 = vmatprep.subr.mxu0 0.0
        %2667 = vmatpush1.msra.mxu0 %v2549
        %2668 = vmatprep.subr.mxu0 0.0
        %2669 = vmatpush1.msra.mxu0 %v2548
        %2670 = vmatprep.subr.mxu0 0.0
        %2671 = vmatpush1.msra.mxu0 %v2547
        %2672 = vmatprep.subr.mxu0 0.0
        %2673 = vmatpush1.msra.mxu0 %v2546
        %2674 = vmatprep.subr.mxu0 0.0
        %2675 = vmatpush1.msra.mxu0 %v2545
        %2676 = vmatprep.subr.mxu0 0.0
        %2677 = vmatpush1.msra.mxu0 %v2544
        %2678 = vmatprep.subr.mxu0 0.0
        %2679 = vmatpush1.msra.mxu0 %v2543
        %2680 = vmatprep.subr.mxu0 0.0
        %2681 = vmatpush1.msra.mxu0 %v2542
        %2682 = vmatprep.subr.mxu0 0.0
        %2683 = vmatpush1.msra.mxu0 %v2541
        %2684 = vmatprep.subr.mxu0 0.0
        %2685 = vmatpush1.msra.mxu0 %v2540
        %2686 = vmatprep.subr.mxu0 0.0
        %2687 = vmatpush1.msra.mxu0 %v2539
        %2688 = vmatprep.subr.mxu0 0.0
        %2689 = vmatpush2.msra.mxu0 %v2570
        %2690 = vmatprep.subr.mxu0 0.0
        %2691 = vmatpush2.msra.mxu0 %v2569
        %2692 = vmatprep.subr.mxu0 0.0
        %2693 = vmatpush2.msra.mxu0 %v2568
        %2694 = vmatprep.subr.mxu0 0.0
        %2695 = vmatpush2.msra.mxu0 %v2567
        %2696 = vmatprep.subr.mxu0 0.0
        %2697 = vmatpush2.msra.mxu0 %v2566
        %2698 = vmatprep.subr.mxu0 0.0
        %2699 = vmatpush2.msra.mxu0 %v2565
        %2700 = vmatprep.subr.mxu0 0.0
        %2701 = vmatpush2.msra.mxu0 %v2564
        %2702 = vmatprep.subr.mxu0 0.0
        %2703 = vmatpush2.msra.mxu0 %v2563
        %2704 = vmatprep.subr.mxu0 0.0
        %2705 = vmatpush2.msra.mxu0 %v2562
        %2706 = vmatprep.subr.mxu0 0.0
        %2707 = vmatpush2.msra.mxu0 %v2561
        %2708 = vmatprep.subr.mxu0 0.0
        %2709 = vmatpush2.msra.mxu0 %v2560
        %2710 = vmatprep.subr.mxu0 0.0
        %2711 = vmatpush2.msra.mxu0 %v2559
        %2712 = vmatprep.subr.mxu0 0.0
        %2713 = vmatpush2.msra.mxu0 %v2558
        %2714 = vmatprep.subr.mxu0 0.0
        %2715 = vmatpush2.msra.mxu0 %v2557
        %2716 = vmatprep.subr.mxu0 0.0
        %2717 = vmatpush2.msra.mxu0 %v2556
        %2718 = vmatprep.subr.mxu0 0.0
        %2719 = vmatpush2.msra.mxu0 %v2555
        %2720 = vmatprep.mubr.f32.mxu0 %v2494
        %2721 = vmatmul.mubr.f32.gmra.mxu0 %v2493
        %v2722 = vpop.f32.mrf.mxu0
        %v2723 = vadd.f32 %v2638, %v2722
        %v2724 = vpop.f32.mrf.mxu0
        %2725 = vmatprep.mubr.f32.mxu0 %v2498
        %2726 = vmatmul.mubr.f32.gmra.mxu0 %v2497
        %v2727 = vpop.f32.mrf.mxu0
        %v2728 = vadd.f32 %v2643, %v2727
        %v2729 = vpop.f32.mrf.mxu0
        %2730 = vmatprep.mubr.f32.mxu0 %v2502
        %2731 = vmatmul.mubr.f32.gmra.mxu0 %v2501
        %v2732 = vpop.f32.mrf.mxu0
        %v2733 = vadd.f32 %v2648, %v2732
        %v2734 = vpop.f32.mrf.mxu0
        %2735 = vmatprep.mubr.f32.mxu0 %v2506
        %2736 = vmatmul.mubr.f32.gmra.mxu0 %v2505
        %v2737 = vpop.f32.mrf.mxu0
        %v2738 = vadd.f32 %v2653, %v2737
        %v2739 = vpop.f32.mrf.mxu0
        %2740 = vdwg.mxu0
        %v2741 = vrcp.pop %v2231
        %v2742 = vrcp.pop %v2236
        %v2743 = vrcp.pop %v2241
        %v2744 = vrcp.pop %v2246
        %v2745 = vmul.f32 %v2723, %v2741
        %v2746 = vmul.f32 %v2728, %v2742
        %v2747 = vmul.f32 %v2733, %v2743
        %v2748 = vmul.f32 %v2738, %v2744
        %v2749 = vld [vmem:[#allocation7 + $0x20] sm:$0xff]
        %v2750 = vld [vmem:[#allocation7 + $0x98] sm:$0xff]
        %v2751 = vld [vmem:[#allocation7 + $0x110] sm:$0xff]
        %v2752 = vld [vmem:[#allocation7 + $0x188] sm:$0xff]
        %v2753 = vld [vmem:[#allocation7 + $0x200] sm:$0xff]
        %v2754 = vld [vmem:[#allocation7 + $0x278] sm:$0xff]
        %v2755 = vld [vmem:[#allocation7 + $0x2f0] sm:$0xff]
        %v2756 = vld [vmem:[#allocation7 + $0x368] sm:$0xff]
        %v2757 = vld [vmem:[#allocation7 + $0x3e0] sm:$0xff]
        %v2758 = vld [vmem:[#allocation7 + $0x458] sm:$0xff]
        %v2759 = vld [vmem:[#allocation7 + $0x4d0] sm:$0xff]
        %v2760 = vld [vmem:[#allocation7 + $0x548] sm:$0xff]
        %v2761 = vld [vmem:[#allocation7 + $0x5c0] sm:$0xff]
        %v2762 = vld [vmem:[#allocation7 + $0x638] sm:$0xff]
        %v2763 = vld [vmem:[#allocation7 + $0x6b0] sm:$0xff]
        %v2764 = vld [vmem:[#allocation7 + $0x728] sm:$0xff]
        %v2765 = vld [vmem:[#allocation10 + $0x14] sm:$0x1]
        %v2767 = vlaneseq
        %v2768 = vshrl.u32 %v2767, 7
        %v2769 = vsub.s32 0, %v2768
        %v2770 = vrot.slane %v2765, %v2769
        %2772 = vmatprep.subr.mxu0 0.0
        %2773 = vmatpush1.msra.mxu0 %v2764
        %2774 = vmatprep.subr.mxu0 0.0
        %2775 = vmatpush1.msra.mxu0 %v2763
        %2776 = vmatprep.subr.mxu0 0.0
        %2777 = vmatpush1.msra.mxu0 %v2762
        %2778 = vmatprep.subr.mxu0 0.0
        %2779 = vmatpush1.msra.mxu0 %v2761
        %2780 = vmatprep.subr.mxu0 0.0
        %2781 = vmatpush1.msra.mxu0 %v2760
        %2782 = vmatprep.subr.mxu0 0.0
        %2783 = vmatpush1.msra.mxu0 %v2759
        %2784 = vmatprep.subr.mxu0 0.0
        %2785 = vmatpush1.msra.mxu0 %v2758
        %2786 = vmatprep.subr.mxu0 0.0
        %2787 = vmatpush1.msra.mxu0 %v2757
        %2788 = vmatprep.subr.mxu0 0.0
        %2789 = vmatpush1.msra.mxu0 %v2756
        %2790 = vmatprep.subr.mxu0 0.0
        %2791 = vmatpush1.msra.mxu0 %v2755
        %2792 = vmatprep.subr.mxu0 0.0
        %2793 = vmatpush1.msra.mxu0 %v2754
        %2794 = vmatprep.subr.mxu0 0.0
        %2795 = vmatpush1.msra.mxu0 %v2753
        %2796 = vmatprep.subr.mxu0 0.0
        %2797 = vmatpush1.msra.mxu0 %v2752
        %2798 = vmatprep.subr.mxu0 0.0
        %2799 = vmatpush1.msra.mxu0 %v2751
        %2800 = vmatprep.subr.mxu0 0.0
        %2801 = vmatpush1.msra.mxu0 %v2750
        %2802 = vmatprep.subr.mxu0 0.0
        %2803 = vmatpush1.msra.mxu0 %v2749
        %2804 = vmatprep.subr.mxu0 0.0
        %2805 = vmatpush2.msra.mxu0 0.0
        %2806 = vmatprep.subr.mxu0 0.0
        %2807 = vmatpush2.msra.mxu0 0.0
        %2808 = vmatprep.subr.mxu0 0.0
        %2809 = vmatpush2.msra.mxu0 0.0
        %2810 = vmatprep.subr.mxu0 0.0
        %2811 = vmatpush2.msra.mxu0 0.0
        %2812 = vmatprep.subr.mxu0 0.0
        %2813 = vmatpush2.msra.mxu0 0.0
        %2814 = vmatprep.subr.mxu0 0.0
        %2815 = vmatpush2.msra.mxu0 0.0
        %2816 = vmatprep.subr.mxu0 0.0
        %2817 = vmatpush2.msra.mxu0 0.0
        %2818 = vmatprep.subr.mxu0 0.0
        %2819 = vmatpush2.msra.mxu0 0.0
        %2820 = vmatprep.subr.mxu0 0.0
        %2821 = vmatpush2.msra.mxu0 0.0
        %2822 = vmatprep.subr.mxu0 0.0
        %2823 = vmatpush2.msra.mxu0 0.0
        %2824 = vmatprep.subr.mxu0 0.0
        %2825 = vmatpush2.msra.mxu0 0.0
        %2826 = vmatprep.subr.mxu0 0.0
        %2827 = vmatpush2.msra.mxu0 0.0
        %2828 = vmatprep.subr.mxu0 0.0
        %2829 = vmatpush2.msra.mxu0 0.0
        %2830 = vmatprep.subr.mxu0 0.0
        %2831 = vmatpush2.msra.mxu0 0.0
        %2832 = vmatprep.subr.mxu0 0.0
        %2833 = vmatpush2.msra.mxu0 0.0
        %2834 = vmatprep.subr.mxu0 0.0
        %2835 = vmatpush2.msra.mxu0 0.0
        %2836 = vmatprep.mubr.f32.mxu0 0.0
        %2837 = vmatmul.mubr.f32.gmra.mxu0 %v2745
        %v2838 = vpop.f32.mrf.mxu0
        %v2839 = vadd.f32 %v2770, %v2838
        %v2840 = vpop.f32.mrf.mxu0
        %2841 = vmatprep.mubr.f32.mxu0 0.0
        %2842 = vmatmul.mubr.f32.gmra.mxu0 %v2746
        %v2843 = vpop.f32.mrf.mxu0
        %v2844 = vadd.f32 %v2770, %v2843
        %v2845 = vpop.f32.mrf.mxu0
        %2846 = vmatprep.mubr.f32.mxu0 0.0
        %2847 = vmatmul.mubr.f32.gmra.mxu0 %v2747
        %v2848 = vpop.f32.mrf.mxu0
        %v2849 = vadd.f32 %v2770, %v2848
        %v2850 = vpop.f32.mrf.mxu0
        %2851 = vmatprep.mubr.f32.mxu0 0.0
        %2852 = vmatmul.mubr.f32.gmra.mxu0 %v2748
        %v2853 = vpop.f32.mrf.mxu0
        %v2854 = vadd.f32 %v2770, %v2853
        %v2855 = vpop.f32.mrf.mxu0
        %2856 = vdwg.mxu0
        %v2857 = vld [vmem:[#allocation7 + $0x48] sm:$0xff]
        %v2858 = vld [vmem:[#allocation7 + $0xc0] sm:$0xff]
        %v2859 = vld [vmem:[#allocation7 + $0x138] sm:$0xff]
        %v2860 = vld [vmem:[#allocation7 + $0x1b0] sm:$0xff]
        %v2861 = vld [vmem:[#allocation7 + $0x228] sm:$0xff]
        %v2862 = vld [vmem:[#allocation7 + $0x2a0] sm:$0xff]
        %v2863 = vld [vmem:[#allocation7 + $0x318] sm:$0xff]
        %v2864 = vld [vmem:[#allocation7 + $0x390] sm:$0xff]
        %v2865 = vld [vmem:[#allocation7 + $0x408] sm:$0xff]
        %v2866 = vld [vmem:[#allocation7 + $0x480] sm:$0xff]
        %v2867 = vld [vmem:[#allocation7 + $0x4f8] sm:$0xff]
        %v2868 = vld [vmem:[#allocation7 + $0x570] sm:$0xff]
        %v2869 = vld [vmem:[#allocation7 + $0x5e8] sm:$0xff]
        %v2870 = vld [vmem:[#allocation7 + $0x660] sm:$0xff]
        %v2871 = vld [vmem:[#allocation7 + $0x6d8] sm:$0xff]
        %v2872 = vld [vmem:[#allocation7 + $0x750] sm:$0xff]
        %v2873 = vadd.f32 %v302, %v2839
        %v2874 = vadd.f32 %v304, %v2844
        %v2875 = vadd.f32 %v306, %v2849
        %v2876 = vadd.f32 %v308, %v2854
        %2877 = vmatprep.subr.mxu0 0.0
        %2878 = vmatpush1.msra.mxu0 %v2872
        %2879 = vmatprep.subr.mxu0 0.0
        %2880 = vmatpush1.msra.mxu0 %v2871
        %2881 = vmatprep.subr.mxu0 0.0
        %2882 = vmatpush1.msra.mxu0 %v2870
        %2883 = vmatprep.subr.mxu0 0.0
        %2884 = vmatpush1.msra.mxu0 %v2869
        %2885 = vmatprep.subr.mxu0 0.0
        %2886 = vmatpush1.msra.mxu0 %v2868
        %2887 = vmatprep.subr.mxu0 0.0
        %2888 = vmatpush1.msra.mxu0 %v2867
        %2889 = vmatprep.subr.mxu0 0.0
        %2890 = vmatpush1.msra.mxu0 %v2866
        %2891 = vmatprep.subr.mxu0 0.0
        %2892 = vmatpush1.msra.mxu0 %v2865
        %2893 = vmatprep.subr.mxu0 0.0
        %2894 = vmatpush1.msra.mxu0 %v2864
        %2895 = vmatprep.subr.mxu0 0.0
        %2896 = vmatpush1.msra.mxu0 %v2863
        %2897 = vmatprep.subr.mxu0 0.0
        %2898 = vmatpush1.msra.mxu0 %v2862
        %2899 = vmatprep.subr.mxu0 0.0
        %2900 = vmatpush1.msra.mxu0 %v2861
        %2901 = vmatprep.subr.mxu0 0.0
        %2902 = vmatpush1.msra.mxu0 %v2860
        %2903 = vmatprep.subr.mxu0 0.0
        %2904 = vmatpush1.msra.mxu0 %v2859
        %2905 = vmatprep.subr.mxu0 0.0
        %2906 = vmatpush1.msra.mxu0 %v2858
        %2907 = vmatprep.subr.mxu0 0.0
        %2908 = vmatpush1.msra.mxu0 %v2857
        %2909 = vmatprep.subr.mxu0 0.0
        %2910 = vmatpush2.msra.mxu0 0.0
        %2911 = vmatprep.subr.mxu0 0.0
        %2912 = vmatpush2.msra.mxu0 0.0
        %2913 = vmatprep.subr.mxu0 0.0
        %2914 = vmatpush2.msra.mxu0 0.0
        %2915 = vmatprep.subr.mxu0 0.0
        %2916 = vmatpush2.msra.mxu0 0.0
        %2917 = vmatprep.subr.mxu0 0.0
        %2918 = vmatpush2.msra.mxu0 0.0
        %2919 = vmatprep.subr.mxu0 0.0
        %2920 = vmatpush2.msra.mxu0 0.0
        %2921 = vmatprep.subr.mxu0 0.0
        %2922 = vmatpush2.msra.mxu0 0.0
        %2923 = vmatprep.subr.mxu0 0.0
        %2924 = vmatpush2.msra.mxu0 0.0
        %2925 = vmatprep.subr.mxu0 0.0
        %2926 = vmatpush2.msra.mxu0 0.0
        %2927 = vmatprep.subr.mxu0 0.0
        %2928 = vmatpush2.msra.mxu0 0.0
        %2929 = vmatprep.subr.mxu0 0.0
        %2930 = vmatpush2.msra.mxu0 0.0
        %2931 = vmatprep.subr.mxu0 0.0
        %2932 = vmatpush2.msra.mxu0 0.0
        %2933 = vmatprep.subr.mxu0 0.0
        %2934 = vmatpush2.msra.mxu0 0.0
        %2935 = vmatprep.subr.mxu0 0.0
        %2936 = vmatpush2.msra.mxu0 0.0
        %2937 = vmatprep.subr.mxu0 0.0
        %2938 = vmatpush2.msra.mxu0 0.0
        %2939 = vmatprep.subr.mxu0 0.0
        %2940 = vmatpush2.msra.mxu0 0.0
        %2941 = vmatprep.mubr.f32.mxu0 0.0
        %2942 = vmatmul.mubr.f32.gmra.mxu0 %v2873
        %v2943 = vpop.f32.mrf.mxu0
        %v2944 = vadd.f32 0.0, %v2943
        %v2945 = vpop.f32.mrf.mxu0
        %2946 = vmatprep.mubr.f32.mxu0 0.0
        %2947 = vmatmul.mubr.f32.gmra.mxu0 %v2874
        %v2948 = vpop.f32.mrf.mxu0
        %v2949 = vadd.f32 0.0, %v2948
        %v2950 = vpop.f32.mrf.mxu0
        %2951 = vmatprep.mubr.f32.mxu0 0.0
        %2952 = vmatmul.mubr.f32.gmra.mxu0 %v2875
        %v2953 = vpop.f32.mrf.mxu0
        %v2954 = vadd.f32 0.0, %v2953
        %v2955 = vpop.f32.mrf.mxu0
        %2956 = vmatprep.mubr.f32.mxu0 0.0
        %2957 = vmatmul.mubr.f32.gmra.mxu0 %v2876
        %v2958 = vpop.f32.mrf.mxu0
        %v2959 = vadd.f32 0.0, %v2958
        %v2960 = vpop.f32.mrf.mxu0
        %2961 = vdwg.mxu0
        %v2962 = vsub.f32 %v2873, %v2944
        %v2963 = vsub.f32 %v2874, %v2949
        %v2964 = vsub.f32 %v2875, %v2954
        %v2965 = vsub.f32 %v2876, %v2959
        %v2966 = vmul.f32 %v2962, %v2962
        %v2967 = vmul.f32 %v2963, %v2963
        %v2968 = vmul.f32 %v2964, %v2964
        %v2969 = vmul.f32 %v2965, %v2965
        %2970 = vmatprep.subr.mxu0 0.0
        %2971 = vmatpush1.msra.mxu0 %v2872
        %2972 = vmatprep.subr.mxu0 0.0
        %2973 = vmatpush1.msra.mxu0 %v2871
        %2974 = vmatprep.subr.mxu0 0.0
        %2975 = vmatpush1.msra.mxu0 %v2870
        %2976 = vmatprep.subr.mxu0 0.0
        %2977 = vmatpush1.msra.mxu0 %v2869
        %2978 = vmatprep.subr.mxu0 0.0
        %2979 = vmatpush1.msra.mxu0 %v2868
        %2980 = vmatprep.subr.mxu0 0.0
        %2981 = vmatpush1.msra.mxu0 %v2867
        %2982 = vmatprep.subr.mxu0 0.0
        %2983 = vmatpush1.msra.mxu0 %v2866
        %2984 = vmatprep.subr.mxu0 0.0
        %2985 = vmatpush1.msra.mxu0 %v2865
        %2986 = vmatprep.subr.mxu0 0.0
        %2987 = vmatpush1.msra.mxu0 %v2864
        %2988 = vmatprep.subr.mxu0 0.0
        %2989 = vmatpush1.msra.mxu0 %v2863
        %2990 = vmatprep.subr.mxu0 0.0
        %2991 = vmatpush1.msra.mxu0 %v2862
        %2992 = vmatprep.subr.mxu0 0.0
        %2993 = vmatpush1.msra.mxu0 %v2861
        %2994 = vmatprep.subr.mxu0 0.0
        %2995 = vmatpush1.msra.mxu0 %v2860
        %2996 = vmatprep.subr.mxu0 0.0
        %2997 = vmatpush1.msra.mxu0 %v2859
        %2998 = vmatprep.subr.mxu0 0.0
        %2999 = vmatpush1.msra.mxu0 %v2858
        %3000 = vmatprep.subr.mxu0 0.0
        %3001 = vmatpush1.msra.mxu0 %v2857
        %3002 = vmatprep.subr.mxu0 0.0
        %3003 = vmatpush2.msra.mxu0 0.0
        %3004 = vmatprep.subr.mxu0 0.0
        %3005 = vmatpush2.msra.mxu0 0.0
        %3006 = vmatprep.subr.mxu0 0.0
        %3007 = vmatpush2.msra.mxu0 0.0
        %3008 = vmatprep.subr.mxu0 0.0
        %3009 = vmatpush2.msra.mxu0 0.0
        %3010 = vmatprep.subr.mxu0 0.0
        %3011 = vmatpush2.msra.mxu0 0.0
        %3012 = vmatprep.subr.mxu0 0.0
        %3013 = vmatpush2.msra.mxu0 0.0
        %3014 = vmatprep.subr.mxu0 0.0
        %3015 = vmatpush2.msra.mxu0 0.0
        %3016 = vmatprep.subr.mxu0 0.0
        %3017 = vmatpush2.msra.mxu0 0.0
        %3018 = vmatprep.subr.mxu0 0.0
        %3019 = vmatpush2.msra.mxu0 0.0
        %3020 = vmatprep.subr.mxu0 0.0
        %3021 = vmatpush2.msra.mxu0 0.0
        %3022 = vmatprep.subr.mxu0 0.0
        %3023 = vmatpush2.msra.mxu0 0.0
        %3024 = vmatprep.subr.mxu0 0.0
        %3025 = vmatpush2.msra.mxu0 0.0
        %3026 = vmatprep.subr.mxu0 0.0
        %3027 = vmatpush2.msra.mxu0 0.0
        %3028 = vmatprep.subr.mxu0 0.0
        %3029 = vmatpush2.msra.mxu0 0.0
        %3030 = vmatprep.subr.mxu0 0.0
        %3031 = vmatpush2.msra.mxu0 0.0
        %3032 = vmatprep.subr.mxu0 0.0
        %3033 = vmatpush2.msra.mxu0 0.0
        %3034 = vmatprep.mubr.f32.mxu0 0.0
        %3035 = vmatmul.mubr.f32.gmra.mxu0 %v2966
        %v3036 = vpop.f32.mrf.mxu0
        %v3037 = vadd.f32 1e-05, %v3036
        %v3038 = vpop.f32.mrf.mxu0
        %3039 = vmatprep.mubr.f32.mxu0 0.0
        %3040 = vmatmul.mubr.f32.gmra.mxu0 %v2967
        %v3041 = vpop.f32.mrf.mxu0
        %v3042 = vadd.f32 1e-05, %v3041
        %v3043 = vpop.f32.mrf.mxu0
        %3044 = vmatprep.mubr.f32.mxu0 0.0
        %3045 = vmatmul.mubr.f32.gmra.mxu0 %v2968
        %v3046 = vpop.f32.mrf.mxu0
        %v3047 = vadd.f32 1e-05, %v3046
        %v3048 = vpop.f32.mrf.mxu0
        %3049 = vmatprep.mubr.f32.mxu0 0.0
        %3050 = vmatmul.mubr.f32.gmra.mxu0 %v2969
        %v3051 = vpop.f32.mrf.mxu0
        %v3052 = vadd.f32 1e-05, %v3051
        %v3053 = vpop.f32.mrf.mxu0
        %3054 = vdwg.mxu0
        %v3055 = vrsqrt.pop %v3037
        %v3056 = vrsqrt.pop %v3042
        %v3057 = vrsqrt.pop %v3047
        %v3058 = vrsqrt.pop %v3052
        %v3059 = vmul.f32 %v2962, %v3055
        %v3060 = vmul.f32 %v2963, %v3056
        %v3061 = vmul.f32 %v2964, %v3057
        %v3062 = vmul.f32 %v2965, %v3058
        %v3063 = vld [vmem:[#allocation10 + $0x1a] sm:$0x1]
        %v3065 = vlaneseq
        %v3066 = vshrl.u32 %v3065, 7
        %v3067 = vsub.s32 0, %v3066
        %v3068 = vrot.slane %v3063, %v3067
        %v3070 = vmul.f32 %v3059, %v3068
        %v3071 = vmul.f32 %v3060, %v3068
        %v3072 = vmul.f32 %v3061, %v3068
        %v3073 = vmul.f32 %v3062, %v3068
        %v3074 = vld [vmem:[#allocation10 + $0x1b] sm:$0x1]
        %v3076 = vlaneseq
        %v3077 = vshrl.u32 %v3076, 7
        %v3078 = vsub.s32 0, %v3077
        %v3079 = vrot.slane %v3074, %v3078
        %v3081 = vadd.f32 %v3070, %v3079
        %v3082 = vadd.f32 %v3071, %v3079
        %v3083 = vadd.f32 %v3072, %v3079
        %v3084 = vadd.f32 %v3073, %v3079
        %v3085 = vld [vmem:[#allocation7 + $0x28] sm:$0xff]
        %v3086 = vld [vmem:[#allocation7 + $0x30] sm:$0xff]
        %v3087 = vld [vmem:[#allocation7 + $0x38] sm:$0xff]
        %v3088 = vld [vmem:[#allocation7 + $0x40] sm:$0xff]
        %v3089 = vld [vmem:[#allocation7 + $0xa0] sm:$0xff]
        %v3090 = vld [vmem:[#allocation7 + $0xa8] sm:$0xff]
        %v3091 = vld [vmem:[#allocation7 + $0xb0] sm:$0xff]
        %v3092 = vld [vmem:[#allocation7 + $0xb8] sm:$0xff]
        %v3093 = vld [vmem:[#allocation7 + $0x118] sm:$0xff]
        %v3094 = vld [vmem:[#allocation7 + $0x120] sm:$0xff]
        %v3095 = vld [vmem:[#allocation7 + $0x128] sm:$0xff]
        %v3096 = vld [vmem:[#allocation7 + $0x130] sm:$0xff]
        %v3097 = vld [vmem:[#allocation7 + $0x190] sm:$0xff]
        %v3098 = vld [vmem:[#allocation7 + $0x198] sm:$0xff]
        %v3099 = vld [vmem:[#allocation7 + $0x1a0] sm:$0xff]
        %v3100 = vld [vmem:[#allocation7 + $0x1a8] sm:$0xff]
        %v3101 = vld [vmem:[#allocation7 + $0x208] sm:$0xff]
        %v3102 = vld [vmem:[#allocation7 + $0x210] sm:$0xff]
        %v3103 = vld [vmem:[#allocation7 + $0x218] sm:$0xff]
        %v3104 = vld [vmem:[#allocation7 + $0x220] sm:$0xff]
        %v3105 = vld [vmem:[#allocation7 + $0x280] sm:$0xff]
        %v3106 = vld [vmem:[#allocation7 + $0x288] sm:$0xff]
        %v3107 = vld [vmem:[#allocation7 + $0x290] sm:$0xff]
        %v3108 = vld [vmem:[#allocation7 + $0x298] sm:$0xff]
        %v3109 = vld [vmem:[#allocation7 + $0x2f8] sm:$0xff]
        %v3110 = vld [vmem:[#allocation7 + $0x300] sm:$0xff]
        %v3111 = vld [vmem:[#allocation7 + $0x308] sm:$0xff]
        %v3112 = vld [vmem:[#allocation7 + $0x310] sm:$0xff]
        %v3113 = vld [vmem:[#allocation7 + $0x370] sm:$0xff]
        %v3114 = vld [vmem:[#allocation7 + $0x378] sm:$0xff]
        %v3115 = vld [vmem:[#allocation7 + $0x380] sm:$0xff]
        %v3116 = vld [vmem:[#allocation7 + $0x388] sm:$0xff]
        %v3117 = vld [vmem:[#allocation7 + $0x3e8] sm:$0xff]
        %v3118 = vld [vmem:[#allocation7 + $0x3f0] sm:$0xff]
        %v3119 = vld [vmem:[#allocation7 + $0x3f8] sm:$0xff]
        %v3120 = vld [vmem:[#allocation7 + $0x400] sm:$0xff]
        %v3121 = vld [vmem:[#allocation7 + $0x460] sm:$0xff]
        %v3122 = vld [vmem:[#allocation7 + $0x468] sm:$0xff]
        %v3123 = vld [vmem:[#allocation7 + $0x470] sm:$0xff]
        %v3124 = vld [vmem:[#allocation7 + $0x478] sm:$0xff]
        %v3125 = vld [vmem:[#allocation7 + $0x4d8] sm:$0xff]
        %v3126 = vld [vmem:[#allocation7 + $0x4e0] sm:$0xff]
        %v3127 = vld [vmem:[#allocation7 + $0x4e8] sm:$0xff]
        %v3128 = vld [vmem:[#allocation7 + $0x4f0] sm:$0xff]
        %v3129 = vld [vmem:[#allocation7 + $0x550] sm:$0xff]
        %v3130 = vld [vmem:[#allocation7 + $0x558] sm:$0xff]
        %v3131 = vld [vmem:[#allocation7 + $0x560] sm:$0xff]
        %v3132 = vld [vmem:[#allocation7 + $0x568] sm:$0xff]
        %v3133 = vld [vmem:[#allocation7 + $0x5c8] sm:$0xff]
        %v3134 = vld [vmem:[#allocation7 + $0x5d0] sm:$0xff]
        %v3135 = vld [vmem:[#allocation7 + $0x5d8] sm:$0xff]
        %v3136 = vld [vmem:[#allocation7 + $0x5e0] sm:$0xff]
        %v3137 = vld [vmem:[#allocation7 + $0x640] sm:$0xff]
        %v3138 = vld [vmem:[#allocation7 + $0x648] sm:$0xff]
        %v3139 = vld [vmem:[#allocation7 + $0x650] sm:$0xff]
        %v3140 = vld [vmem:[#allocation7 + $0x658] sm:$0xff]
        %v3141 = vld [vmem:[#allocation7 + $0x6b8] sm:$0xff]
        %v3142 = vld [vmem:[#allocation7 + $0x6c0] sm:$0xff]
        %v3143 = vld [vmem:[#allocation7 + $0x6c8] sm:$0xff]
        %v3144 = vld [vmem:[#allocation7 + $0x6d0] sm:$0xff]
        %v3145 = vld [vmem:[#allocation7 + $0x730] sm:$0xff]
        %v3146 = vld [vmem:[#allocation7 + $0x738] sm:$0xff]
        %v3147 = vld [vmem:[#allocation7 + $0x740] sm:$0xff]
        %v3148 = vld [vmem:[#allocation7 + $0x748] sm:$0xff]
        %v3149 = vld [vmem:[#allocation10 + $0x15] sm:$0xf]
        %v3151 = vlaneseq
        %v3152 = vshrl.u32 %v3151, 7
        %v3153 = vsub.s32 0, %v3152
        %v3154 = vrot.slane %v3149, %v3153
        %v3155 = vlaneseq
        %v3156 = vshrl.u32 %v3155, 7
        %v3157 = vsub.s32 1, %v3156
        %v3158 = vrot.slane %v3149, %v3157
        %v3159 = vlaneseq
        %v3160 = vshrl.u32 %v3159, 7
        %v3161 = vsub.s32 2, %v3160
        %v3162 = vrot.slane %v3149, %v3161
        %v3163 = vlaneseq
        %v3164 = vshrl.u32 %v3163, 7
        %v3165 = vsub.s32 3, %v3164
        %v3166 = vrot.slane %v3149, %v3165
        %3171 = vmatprep.subr.mxu0 %v3146
        %3172 = vmatpush1.msra.mxu0 %v3145
        %3173 = vmatprep.subr.mxu0 %v3142
        %3174 = vmatpush1.msra.mxu0 %v3141
        %3175 = vmatprep.subr.mxu0 %v3138
        %3176 = vmatpush1.msra.mxu0 %v3137
        %3177 = vmatprep.subr.mxu0 %v3134
        %3178 = vmatpush1.msra.mxu0 %v3133
        %3179 = vmatprep.subr.mxu0 %v3130
        %3180 = vmatpush1.msra.mxu0 %v3129
        %3181 = vmatprep.subr.mxu0 %v3126
        %3182 = vmatpush1.msra.mxu0 %v3125
        %3183 = vmatprep.subr.mxu0 %v3122
        %3184 = vmatpush1.msra.mxu0 %v3121
        %3185 = vmatprep.subr.mxu0 %v3118
        %3186 = vmatpush1.msra.mxu0 %v3117
        %3187 = vmatprep.subr.mxu0 %v3114
        %3188 = vmatpush1.msra.mxu0 %v3113
        %3189 = vmatprep.subr.mxu0 %v3110
        %3190 = vmatpush1.msra.mxu0 %v3109
        %3191 = vmatprep.subr.mxu0 %v3106
        %3192 = vmatpush1.msra.mxu0 %v3105
        %3193 = vmatprep.subr.mxu0 %v3102
        %3194 = vmatpush1.msra.mxu0 %v3101
        %3195 = vmatprep.subr.mxu0 %v3098
        %3196 = vmatpush1.msra.mxu0 %v3097
        %3197 = vmatprep.subr.mxu0 %v3094
        %3198 = vmatpush1.msra.mxu0 %v3093
        %3199 = vmatprep.subr.mxu0 %v3090
        %3200 = vmatpush1.msra.mxu0 %v3089
        %3201 = vmatprep.subr.mxu0 %v3086
        %3202 = vmatpush1.msra.mxu0 %v3085
        %3203 = vmatprep.subr.mxu0 0.0
        %3204 = vmatpush2.msra.mxu0 0.0
        %3205 = vmatprep.subr.mxu0 0.0
        %3206 = vmatpush2.msra.mxu0 0.0
        %3207 = vmatprep.subr.mxu0 0.0
        %3208 = vmatpush2.msra.mxu0 0.0
        %3209 = vmatprep.subr.mxu0 0.0
        %3210 = vmatpush2.msra.mxu0 0.0
        %3211 = vmatprep.subr.mxu0 0.0
        %3212 = vmatpush2.msra.mxu0 0.0
        %3213 = vmatprep.subr.mxu0 0.0
        %3214 = vmatpush2.msra.mxu0 0.0
        %3215 = vmatprep.subr.mxu0 0.0
        %3216 = vmatpush2.msra.mxu0 0.0
        %3217 = vmatprep.subr.mxu0 0.0
        %3218 = vmatpush2.msra.mxu0 0.0
        %3219 = vmatprep.subr.mxu0 0.0
        %3220 = vmatpush2.msra.mxu0 0.0
        %3221 = vmatprep.subr.mxu0 0.0
        %3222 = vmatpush2.msra.mxu0 0.0
        %3223 = vmatprep.subr.mxu0 0.0
        %3224 = vmatpush2.msra.mxu0 0.0
        %3225 = vmatprep.subr.mxu0 0.0
        %3226 = vmatpush2.msra.mxu0 0.0
        %3227 = vmatprep.subr.mxu0 0.0
        %3228 = vmatpush2.msra.mxu0 0.0
        %3229 = vmatprep.subr.mxu0 0.0
        %3230 = vmatpush2.msra.mxu0 0.0
        %3231 = vmatprep.subr.mxu0 0.0
        %3232 = vmatpush2.msra.mxu0 0.0
        %3233 = vmatprep.subr.mxu0 0.0
        %3234 = vmatpush2.msra.mxu0 0.0
        %3235 = vmatprep.mubr.f32.mxu0 0.0
        %3236 = vmatmul.mubr.f32.gmra.mxu0 %v3081
        %v3237 = vpop.f32.mrf.mxu0
        %v3238 = vadd.f32 %v3154, %v3237
        %v3239 = vpop.f32.mrf.mxu0
        %v3240 = vadd.f32 %v3158, %v3239
        %3241 = vmatprep.mubr.f32.mxu0 0.0
        %3242 = vmatmul.mubr.f32.gmra.mxu0 %v3082
        %v3243 = vpop.f32.mrf.mxu0
        %v3244 = vadd.f32 %v3154, %v3243
        %v3245 = vpop.f32.mrf.mxu0
        %v3246 = vadd.f32 %v3158, %v3245
        %3247 = vmatprep.mubr.f32.mxu0 0.0
        %3248 = vmatmul.mubr.f32.gmra.mxu0 %v3083
        %v3249 = vpop.f32.mrf.mxu0
        %v3250 = vadd.f32 %v3154, %v3249
        %v3251 = vpop.f32.mrf.mxu0
        %v3252 = vadd.f32 %v3158, %v3251
        %3253 = vmatprep.mubr.f32.mxu0 0.0
        %3254 = vmatmul.mubr.f32.gmra.mxu0 %v3084
        %v3255 = vpop.f32.mrf.mxu0
        %v3256 = vadd.f32 %v3154, %v3255
        %v3257 = vpop.f32.mrf.mxu0
        %v3258 = vadd.f32 %v3158, %v3257
        %3259 = vdwg.mxu0
        %3260 = vmatprep.subr.mxu0 %v3148
        %3261 = vmatpush1.msra.mxu0 %v3147
        %3262 = vmatprep.subr.mxu0 %v3144
        %3263 = vmatpush1.msra.mxu0 %v3143
        %3264 = vmatprep.subr.mxu0 %v3140
        %3265 = vmatpush1.msra.mxu0 %v3139
        %3266 = vmatprep.subr.mxu0 %v3136
        %3267 = vmatpush1.msra.mxu0 %v3135
        %3268 = vmatprep.subr.mxu0 %v3132
        %3269 = vmatpush1.msra.mxu0 %v3131
        %3270 = vmatprep.subr.mxu0 %v3128
        %3271 = vmatpush1.msra.mxu0 %v3127
        %3272 = vmatprep.subr.mxu0 %v3124
        %3273 = vmatpush1.msra.mxu0 %v3123
        %3274 = vmatprep.subr.mxu0 %v3120
        %3275 = vmatpush1.msra.mxu0 %v3119
        %3276 = vmatprep.subr.mxu0 %v3116
        %3277 = vmatpush1.msra.mxu0 %v3115
        %3278 = vmatprep.subr.mxu0 %v3112
        %3279 = vmatpush1.msra.mxu0 %v3111
        %3280 = vmatprep.subr.mxu0 %v3108
        %3281 = vmatpush1.msra.mxu0 %v3107
        %3282 = vmatprep.subr.mxu0 %v3104
        %3283 = vmatpush1.msra.mxu0 %v3103
        %3284 = vmatprep.subr.mxu0 %v3100
        %3285 = vmatpush1.msra.mxu0 %v3099
        %3286 = vmatprep.subr.mxu0 %v3096
        %3287 = vmatpush1.msra.mxu0 %v3095
        %3288 = vmatprep.subr.mxu0 %v3092
        %3289 = vmatpush1.msra.mxu0 %v3091
        %3290 = vmatprep.subr.mxu0 %v3088
        %3291 = vmatpush1.msra.mxu0 %v3087
        %3292 = vmatprep.subr.mxu0 0.0
        %3293 = vmatpush2.msra.mxu0 0.0
        %3294 = vmatprep.subr.mxu0 0.0
        %3295 = vmatpush2.msra.mxu0 0.0
        %3296 = vmatprep.subr.mxu0 0.0
        %3297 = vmatpush2.msra.mxu0 0.0
        %3298 = vmatprep.subr.mxu0 0.0
        %3299 = vmatpush2.msra.mxu0 0.0
        %3300 = vmatprep.subr.mxu0 0.0
        %3301 = vmatpush2.msra.mxu0 0.0
        %3302 = vmatprep.subr.mxu0 0.0
        %3303 = vmatpush2.msra.mxu0 0.0
        %3304 = vmatprep.subr.mxu0 0.0
        %3305 = vmatpush2.msra.mxu0 0.0
        %3306 = vmatprep.subr.mxu0 0.0
        %3307 = vmatpush2.msra.mxu0 0.0
        %3308 = vmatprep.subr.mxu0 0.0
        %3309 = vmatpush2.msra.mxu0 0.0
        %3310 = vmatprep.subr.mxu0 0.0
        %3311 = vmatpush2.msra.mxu0 0.0
        %3312 = vmatprep.subr.mxu0 0.0
        %3313 = vmatpush2.msra.mxu0 0.0
        %3314 = vmatprep.subr.mxu0 0.0
        %3315 = vmatpush2.msra.mxu0 0.0
        %3316 = vmatprep.subr.mxu0 0.0
        %3317 = vmatpush2.msra.mxu0 0.0
        %3318 = vmatprep.subr.mxu0 0.0
        %3319 = vmatpush2.msra.mxu0 0.0
        %3320 = vmatprep.subr.mxu0 0.0
        %3321 = vmatpush2.msra.mxu0 0.0
        %3322 = vmatprep.subr.mxu0 0.0
        %3323 = vmatpush2.msra.mxu0 0.0
        %3324 = vmatprep.mubr.f32.mxu0 0.0
        %3325 = vmatmul.mubr.f32.gmra.mxu0 %v3081
        %v3326 = vpop.f32.mrf.mxu0
        %v3327 = vadd.f32 %v3162, %v3326
        %v3328 = vpop.f32.mrf.mxu0
        %v3329 = vadd.f32 %v3166, %v3328
        %3330 = vmatprep.mubr.f32.mxu0 0.0
        %3331 = vmatmul.mubr.f32.gmra.mxu0 %v3082
        %v3332 = vpop.f32.mrf.mxu0
        %v3333 = vadd.f32 %v3162, %v3332
        %v3334 = vpop.f32.mrf.mxu0
        %v3335 = vadd.f32 %v3166, %v3334
        %3336 = vmatprep.mubr.f32.mxu0 0.0
        %3337 = vmatmul.mubr.f32.gmra.mxu0 %v3083
        %v3338 = vpop.f32.mrf.mxu0
        %v3339 = vadd.f32 %v3162, %v3338
        %v3340 = vpop.f32.mrf.mxu0
        %v3341 = vadd.f32 %v3166, %v3340
        %3342 = vmatprep.mubr.f32.mxu0 0.0
        %3343 = vmatmul.mubr.f32.gmra.mxu0 %v3084
        %v3344 = vpop.f32.mrf.mxu0
        %v3345 = vadd.f32 %v3162, %v3344
        %v3346 = vpop.f32.mrf.mxu0
        %v3347 = vadd.f32 %v3166, %v3346
        %3348 = vdwg.mxu0
        %vm3349 = vcmp.gt.f32.partialorder %v3238, 0.0
        %vm3350 = vcmp.gt.f32.partialorder %v3240, 0.0
        %vm3351 = vcmp.gt.f32.partialorder %v3327, 0.0
        %vm3352 = vcmp.gt.f32.partialorder %v3329, 0.0
        %vm3353 = vcmp.gt.f32.partialorder %v3244, 0.0
        %vm3354 = vcmp.gt.f32.partialorder %v3246, 0.0
        %vm3355 = vcmp.gt.f32.partialorder %v3333, 0.0
        %vm3356 = vcmp.gt.f32.partialorder %v3335, 0.0
        %vm3357 = vcmp.gt.f32.partialorder %v3250, 0.0
        %vm3358 = vcmp.gt.f32.partialorder %v3252, 0.0
        %vm3359 = vcmp.gt.f32.partialorder %v3339, 0.0
        %vm3360 = vcmp.gt.f32.partialorder %v3341, 0.0
        %vm3361 = vcmp.gt.f32.partialorder %v3256, 0.0
        %vm3362 = vcmp.gt.f32.partialorder %v3258, 0.0
        %vm3363 = vcmp.gt.f32.partialorder %v3345, 0.0
        %vm3364 = vcmp.gt.f32.partialorder %v3347, 0.0
        %v3365 = vmul.f32 %v3238, 0.01
        %v3366 = vmul.f32 %v3240, 0.01
        %v3367 = vmul.f32 %v3327, 0.01
        %v3368 = vmul.f32 %v3329, 0.01
        %v3369 = vmul.f32 %v3244, 0.01
        %v3370 = vmul.f32 %v3246, 0.01
        %v3371 = vmul.f32 %v3333, 0.01
        %v3372 = vmul.f32 %v3335, 0.01
        %v3373 = vmul.f32 %v3250, 0.01
        %v3374 = vmul.f32 %v3252, 0.01
        %v3375 = vmul.f32 %v3339, 0.01
        %v3376 = vmul.f32 %v3341, 0.01
        %v3377 = vmul.f32 %v3256, 0.01
        %v3378 = vmul.f32 %v3258, 0.01
        %v3379 = vmul.f32 %v3345, 0.01
        %v3380 = vmul.f32 %v3347, 0.01
        %v3381 = vsel %vm3349, %v3238, %v3365
        %v3382 = vsel %vm3350, %v3240, %v3366
        %v3383 = vsel %vm3351, %v3327, %v3367
        %v3384 = vsel %vm3352, %v3329, %v3368
        %v3385 = vsel %vm3353, %v3244, %v3369
        %v3386 = vsel %vm3354, %v3246, %v3370
        %v3387 = vsel %vm3355, %v3333, %v3371
        %v3388 = vsel %vm3356, %v3335, %v3372
        %v3389 = vsel %vm3357, %v3250, %v3373
        %v3390 = vsel %vm3358, %v3252, %v3374
        %v3391 = vsel %vm3359, %v3339, %v3375
        %v3392 = vsel %vm3360, %v3341, %v3376
        %v3393 = vsel %vm3361, %v3256, %v3377
        %v3394 = vsel %vm3362, %v3258, %v3378
        %v3395 = vsel %vm3363, %v3345, %v3379
        %v3396 = vsel %vm3364, %v3347, %v3380
        %v3397 = vld [vmem:[#allocation8 + $0x10] sm:$0xff]
        %v3398 = vld [vmem:[#allocation8 + $0x28] sm:$0xff]
        %v3399 = vld [vmem:[#allocation8 + $0x40] sm:$0xff]
        %v3400 = vld [vmem:[#allocation8 + $0x58] sm:$0xff]
        %v3401 = vld [vmem:[#allocation8 + $0x70] sm:$0xff]
        %v3402 = vld [vmem:[#allocation8 + $0x88] sm:$0xff]
        %v3403 = vld [vmem:[#allocation8 + $0xa0] sm:$0xff]
        %v3404 = vld [vmem:[#allocation8 + $0xb8] sm:$0xff]
        %v3405 = vld [vmem:[#allocation8 + $0xd0] sm:$0xff]
        %v3406 = vld [vmem:[#allocation8 + $0xe8] sm:$0xff]
        %v3407 = vld [vmem:[#allocation8 + $0x100] sm:$0xff]
        %v3408 = vld [vmem:[#allocation8 + $0x118] sm:$0xff]
        %v3409 = vld [vmem:[#allocation8 + $0x130] sm:$0xff]
        %v3410 = vld [vmem:[#allocation8 + $0x148] sm:$0xff]
        %v3411 = vld [vmem:[#allocation8 + $0x160] sm:$0xff]
        %v3412 = vld [vmem:[#allocation8 + $0x178] sm:$0xff]
        %v3413 = vld [vmem:[#allocation8 + $0x190] sm:$0xff]
        %v3414 = vld [vmem:[#allocation8 + $0x1a8] sm:$0xff]
        %v3415 = vld [vmem:[#allocation8 + $0x1c0] sm:$0xff]
        %v3416 = vld [vmem:[#allocation8 + $0x1d8] sm:$0xff]
        %v3417 = vld [vmem:[#allocation8 + $0x1f0] sm:$0xff]
        %v3418 = vld [vmem:[#allocation8 + $0x208] sm:$0xff]
        %v3419 = vld [vmem:[#allocation8 + $0x220] sm:$0xff]
        %v3420 = vld [vmem:[#allocation8 + $0x238] sm:$0xff]
        %v3421 = vld [vmem:[#allocation8 + $0x250] sm:$0xff]
        %v3422 = vld [vmem:[#allocation8 + $0x268] sm:$0xff]
        %v3423 = vld [vmem:[#allocation8 + $0x280] sm:$0xff]
        %v3424 = vld [vmem:[#allocation8 + $0x298] sm:$0xff]
        %v3425 = vld [vmem:[#allocation8 + $0x2b0] sm:$0xff]
        %v3426 = vld [vmem:[#allocation8 + $0x2c8] sm:$0xff]
        %v3427 = vld [vmem:[#allocation8 + $0x2e0] sm:$0xff]
        %v3428 = vld [vmem:[#allocation8 + $0x2f8] sm:$0xff]
        %v3429 = vld [vmem:[#allocation8 + $0x310] sm:$0xff]
        %v3430 = vld [vmem:[#allocation8 + $0x328] sm:$0xff]
        %v3431 = vld [vmem:[#allocation8 + $0x340] sm:$0xff]
        %v3432 = vld [vmem:[#allocation8 + $0x358] sm:$0xff]
        %v3433 = vld [vmem:[#allocation8 + $0x370] sm:$0xff]
        %v3434 = vld [vmem:[#allocation8 + $0x388] sm:$0xff]
        %v3435 = vld [vmem:[#allocation8 + $0x3a0] sm:$0xff]
        %v3436 = vld [vmem:[#allocation8 + $0x3b8] sm:$0xff]
        %v3437 = vld [vmem:[#allocation8 + $0x3d0] sm:$0xff]
        %v3438 = vld [vmem:[#allocation8 + $0x3e8] sm:$0xff]
        %v3439 = vld [vmem:[#allocation8 + $0x400] sm:$0xff]
        %v3440 = vld [vmem:[#allocation8 + $0x418] sm:$0xff]
        %v3441 = vld [vmem:[#allocation8 + $0x430] sm:$0xff]
        %v3442 = vld [vmem:[#allocation8 + $0x448] sm:$0xff]
        %v3443 = vld [vmem:[#allocation8 + $0x460] sm:$0xff]
        %v3444 = vld [vmem:[#allocation8 + $0x478] sm:$0xff]
        %v3445 = vld [vmem:[#allocation8 + $0x490] sm:$0xff]
        %v3446 = vld [vmem:[#allocation8 + $0x4a8] sm:$0xff]
        %v3447 = vld [vmem:[#allocation8 + $0x4c0] sm:$0xff]
        %v3448 = vld [vmem:[#allocation8 + $0x4d8] sm:$0xff]
        %v3449 = vld [vmem:[#allocation8 + $0x4f0] sm:$0xff]
        %v3450 = vld [vmem:[#allocation8 + $0x508] sm:$0xff]
        %v3451 = vld [vmem:[#allocation8 + $0x520] sm:$0xff]
        %v3452 = vld [vmem:[#allocation8 + $0x538] sm:$0xff]
        %v3453 = vld [vmem:[#allocation8 + $0x550] sm:$0xff]
        %v3454 = vld [vmem:[#allocation8 + $0x568] sm:$0xff]
        %v3455 = vld [vmem:[#allocation8 + $0x580] sm:$0xff]
        %v3456 = vld [vmem:[#allocation8 + $0x598] sm:$0xff]
        %v3457 = vld [vmem:[#allocation8 + $0x5b0] sm:$0xff]
        %v3458 = vld [vmem:[#allocation8 + $0x5c8] sm:$0xff]
        %v3459 = vld [vmem:[#allocation8 + $0x5e0] sm:$0xff]
        %v3460 = vld [vmem:[#allocation8 + $0x5f8] sm:$0xff]
        %v3461 = vld [vmem:[#allocation10 + $0x19] sm:$0x1]
        %v3463 = vlaneseq
        %v3464 = vshrl.u32 %v3463, 7
        %v3465 = vsub.s32 0, %v3464
        %v3466 = vrot.slane %v3461, %v3465
        %3468 = vmatprep.subr.mxu0 0.0
        %3469 = vmatpush1.msra.mxu0 %v3412
        %3470 = vmatprep.subr.mxu0 0.0
        %3471 = vmatpush1.msra.mxu0 %v3411
        %3472 = vmatprep.subr.mxu0 0.0
        %3473 = vmatpush1.msra.mxu0 %v3410
        %3474 = vmatprep.subr.mxu0 0.0
        %3475 = vmatpush1.msra.mxu0 %v3409
        %3476 = vmatprep.subr.mxu0 0.0
        %3477 = vmatpush1.msra.mxu0 %v3408
        %3478 = vmatprep.subr.mxu0 0.0
        %3479 = vmatpush1.msra.mxu0 %v3407
        %3480 = vmatprep.subr.mxu0 0.0
        %3481 = vmatpush1.msra.mxu0 %v3406
        %3482 = vmatprep.subr.mxu0 0.0
        %3483 = vmatpush1.msra.mxu0 %v3405
        %3484 = vmatprep.subr.mxu0 0.0
        %3485 = vmatpush1.msra.mxu0 %v3404
        %3486 = vmatprep.subr.mxu0 0.0
        %3487 = vmatpush1.msra.mxu0 %v3403
        %3488 = vmatprep.subr.mxu0 0.0
        %3489 = vmatpush1.msra.mxu0 %v3402
        %3490 = vmatprep.subr.mxu0 0.0
        %3491 = vmatpush1.msra.mxu0 %v3401
        %3492 = vmatprep.subr.mxu0 0.0
        %3493 = vmatpush1.msra.mxu0 %v3400
        %3494 = vmatprep.subr.mxu0 0.0
        %3495 = vmatpush1.msra.mxu0 %v3399
        %3496 = vmatprep.subr.mxu0 0.0
        %3497 = vmatpush1.msra.mxu0 %v3398
        %3498 = vmatprep.subr.mxu0 0.0
        %3499 = vmatpush1.msra.mxu0 %v3397
        %3500 = vmatprep.subr.mxu0 0.0
        %3501 = vmatpush2.msra.mxu0 %v3428
        %3502 = vmatprep.subr.mxu0 0.0
        %3503 = vmatpush2.msra.mxu0 %v3427
        %3504 = vmatprep.subr.mxu0 0.0
        %3505 = vmatpush2.msra.mxu0 %v3426
        %3506 = vmatprep.subr.mxu0 0.0
        %3507 = vmatpush2.msra.mxu0 %v3425
        %3508 = vmatprep.subr.mxu0 0.0
        %3509 = vmatpush2.msra.mxu0 %v3424
        %3510 = vmatprep.subr.mxu0 0.0
        %3511 = vmatpush2.msra.mxu0 %v3423
        %3512 = vmatprep.subr.mxu0 0.0
        %3513 = vmatpush2.msra.mxu0 %v3422
        %3514 = vmatprep.subr.mxu0 0.0
        %3515 = vmatpush2.msra.mxu0 %v3421
        %3516 = vmatprep.subr.mxu0 0.0
        %3517 = vmatpush2.msra.mxu0 %v3420
        %3518 = vmatprep.subr.mxu0 0.0
        %3519 = vmatpush2.msra.mxu0 %v3419
        %3520 = vmatprep.subr.mxu0 0.0
        %3521 = vmatpush2.msra.mxu0 %v3418
        %3522 = vmatprep.subr.mxu0 0.0
        %3523 = vmatpush2.msra.mxu0 %v3417
        %3524 = vmatprep.subr.mxu0 0.0
        %3525 = vmatpush2.msra.mxu0 %v3416
        %3526 = vmatprep.subr.mxu0 0.0
        %3527 = vmatpush2.msra.mxu0 %v3415
        %3528 = vmatprep.subr.mxu0 0.0
        %3529 = vmatpush2.msra.mxu0 %v3414
        %3530 = vmatprep.subr.mxu0 0.0
        %3531 = vmatpush2.msra.mxu0 %v3413
        %3532 = vmatprep.mubr.f32.mxu0 %v3382
        %3533 = vmatmul.mubr.f32.gmra.mxu0 %v3381
        %v3534 = vpop.f32.mrf.mxu0
        %v3535 = vadd.f32 %v3466, %v3534
        %v3536 = vpop.f32.mrf.mxu0
        %3537 = vmatprep.mubr.f32.mxu0 %v3386
        %3538 = vmatmul.mubr.f32.gmra.mxu0 %v3385
        %v3539 = vpop.f32.mrf.mxu0
        %v3540 = vadd.f32 %v3466, %v3539
        %v3541 = vpop.f32.mrf.mxu0
        %3542 = vmatprep.mubr.f32.mxu0 %v3390
        %3543 = vmatmul.mubr.f32.gmra.mxu0 %v3389
        %v3544 = vpop.f32.mrf.mxu0
        %v3545 = vadd.f32 %v3466, %v3544
        %v3546 = vpop.f32.mrf.mxu0
        %3547 = vmatprep.mubr.f32.mxu0 %v3394
        %3548 = vmatmul.mubr.f32.gmra.mxu0 %v3393
        %v3549 = vpop.f32.mrf.mxu0
        %v3550 = vadd.f32 %v3466, %v3549
        %v3551 = vpop.f32.mrf.mxu0
        %3552 = vdwg.mxu0
        %3553 = vmatprep.subr.mxu0 0.0
        %3554 = vmatpush1.msra.mxu0 %v3444
        %3555 = vmatprep.subr.mxu0 0.0
        %3556 = vmatpush1.msra.mxu0 %v3443
        %3557 = vmatprep.subr.mxu0 0.0
        %3558 = vmatpush1.msra.mxu0 %v3442
        %3559 = vmatprep.subr.mxu0 0.0
        %3560 = vmatpush1.msra.mxu0 %v3441
        %3561 = vmatprep.subr.mxu0 0.0
        %3562 = vmatpush1.msra.mxu0 %v3440
        %3563 = vmatprep.subr.mxu0 0.0
        %3564 = vmatpush1.msra.mxu0 %v3439
        %3565 = vmatprep.subr.mxu0 0.0
        %3566 = vmatpush1.msra.mxu0 %v3438
        %3567 = vmatprep.subr.mxu0 0.0
        %3568 = vmatpush1.msra.mxu0 %v3437
        %3569 = vmatprep.subr.mxu0 0.0
        %3570 = vmatpush1.msra.mxu0 %v3436
        %3571 = vmatprep.subr.mxu0 0.0
        %3572 = vmatpush1.msra.mxu0 %v3435
        %3573 = vmatprep.subr.mxu0 0.0
        %3574 = vmatpush1.msra.mxu0 %v3434
        %3575 = vmatprep.subr.mxu0 0.0
        %3576 = vmatpush1.msra.mxu0 %v3433
        %3577 = vmatprep.subr.mxu0 0.0
        %3578 = vmatpush1.msra.mxu0 %v3432
        %3579 = vmatprep.subr.mxu0 0.0
        %3580 = vmatpush1.msra.mxu0 %v3431
        %3581 = vmatprep.subr.mxu0 0.0
        %3582 = vmatpush1.msra.mxu0 %v3430
        %3583 = vmatprep.subr.mxu0 0.0
        %3584 = vmatpush1.msra.mxu0 %v3429
        %3585 = vmatprep.subr.mxu0 0.0
        %3586 = vmatpush2.msra.mxu0 %v3460
        %3587 = vmatprep.subr.mxu0 0.0
        %3588 = vmatpush2.msra.mxu0 %v3459
        %3589 = vmatprep.subr.mxu0 0.0
        %3590 = vmatpush2.msra.mxu0 %v3458
        %3591 = vmatprep.subr.mxu0 0.0
        %3592 = vmatpush2.msra.mxu0 %v3457
        %3593 = vmatprep.subr.mxu0 0.0
        %3594 = vmatpush2.msra.mxu0 %v3456
        %3595 = vmatprep.subr.mxu0 0.0
        %3596 = vmatpush2.msra.mxu0 %v3455
        %3597 = vmatprep.subr.mxu0 0.0
        %3598 = vmatpush2.msra.mxu0 %v3454
        %3599 = vmatprep.subr.mxu0 0.0
        %3600 = vmatpush2.msra.mxu0 %v3453
        %3601 = vmatprep.subr.mxu0 0.0
        %3602 = vmatpush2.msra.mxu0 %v3452
        %3603 = vmatprep.subr.mxu0 0.0
        %3604 = vmatpush2.msra.mxu0 %v3451
        %3605 = vmatprep.subr.mxu0 0.0
        %3606 = vmatpush2.msra.mxu0 %v3450
        %3607 = vmatprep.subr.mxu0 0.0
        %3608 = vmatpush2.msra.mxu0 %v3449
        %3609 = vmatprep.subr.mxu0 0.0
        %3610 = vmatpush2.msra.mxu0 %v3448
        %3611 = vmatprep.subr.mxu0 0.0
        %3612 = vmatpush2.msra.mxu0 %v3447
        %3613 = vmatprep.subr.mxu0 0.0
        %3614 = vmatpush2.msra.mxu0 %v3446
        %3615 = vmatprep.subr.mxu0 0.0
        %3616 = vmatpush2.msra.mxu0 %v3445
        %3617 = vmatprep.mubr.f32.mxu0 %v3384
        %3618 = vmatmul.mubr.f32.gmra.mxu0 %v3383
        %v3619 = vpop.f32.mrf.mxu0
        %v3620 = vadd.f32 %v3535, %v3619
        %v3621 = vpop.f32.mrf.mxu0
        %3622 = vmatprep.mubr.f32.mxu0 %v3388
        %3623 = vmatmul.mubr.f32.gmra.mxu0 %v3387
        %v3624 = vpop.f32.mrf.mxu0
        %v3625 = vadd.f32 %v3540, %v3624
        %v3626 = vpop.f32.mrf.mxu0
        %3627 = vmatprep.mubr.f32.mxu0 %v3392
        %3628 = vmatmul.mubr.f32.gmra.mxu0 %v3391
        %v3629 = vpop.f32.mrf.mxu0
        %v3630 = vadd.f32 %v3545, %v3629
        %v3631 = vpop.f32.mrf.mxu0
        %3632 = vmatprep.mubr.f32.mxu0 %v3396
        %3633 = vmatmul.mubr.f32.gmra.mxu0 %v3395
        %v3634 = vpop.f32.mrf.mxu0
        %v3635 = vadd.f32 %v3550, %v3634
        %v3636 = vpop.f32.mrf.mxu0
        %3637 = vdwg.mxu0
        %v3638 = vadd.f32 %v3081, %v3620
        %v3639 = vadd.f32 %v3082, %v3625
        %v3640 = vadd.f32 %v3083, %v3630
        %v3641 = vadd.f32 %v3084, %v3635
        %3642 = vmatprep.subr.mxu0 0.0
        %3643 = vmatpush1.msra.mxu0 %v2872
        %3644 = vmatprep.subr.mxu0 0.0
        %3645 = vmatpush1.msra.mxu0 %v2871
        %3646 = vmatprep.subr.mxu0 0.0
        %3647 = vmatpush1.msra.mxu0 %v2870
        %3648 = vmatprep.subr.mxu0 0.0
        %3649 = vmatpush1.msra.mxu0 %v2869
        %3650 = vmatprep.subr.mxu0 0.0
        %3651 = vmatpush1.msra.mxu0 %v2868
        %3652 = vmatprep.subr.mxu0 0.0
        %3653 = vmatpush1.msra.mxu0 %v2867
        %3654 = vmatprep.subr.mxu0 0.0
        %3655 = vmatpush1.msra.mxu0 %v2866
        %3656 = vmatprep.subr.mxu0 0.0
        %3657 = vmatpush1.msra.mxu0 %v2865
        %3658 = vmatprep.subr.mxu0 0.0
        %3659 = vmatpush1.msra.mxu0 %v2864
        %3660 = vmatprep.subr.mxu0 0.0
        %3661 = vmatpush1.msra.mxu0 %v2863
        %3662 = vmatprep.subr.mxu0 0.0
        %3663 = vmatpush1.msra.mxu0 %v2862
        %3664 = vmatprep.subr.mxu0 0.0
        %3665 = vmatpush1.msra.mxu0 %v2861
        %3666 = vmatprep.subr.mxu0 0.0
        %3667 = vmatpush1.msra.mxu0 %v2860
        %3668 = vmatprep.subr.mxu0 0.0
        %3669 = vmatpush1.msra.mxu0 %v2859
        %3670 = vmatprep.subr.mxu0 0.0
        %3671 = vmatpush1.msra.mxu0 %v2858
        %3672 = vmatprep.subr.mxu0 0.0
        %3673 = vmatpush1.msra.mxu0 %v2857
        %3674 = vmatprep.subr.mxu0 0.0
        %3675 = vmatpush2.msra.mxu0 0.0
        %3676 = vmatprep.subr.mxu0 0.0
        %3677 = vmatpush2.msra.mxu0 0.0
        %3678 = vmatprep.subr.mxu0 0.0
        %3679 = vmatpush2.msra.mxu0 0.0
        %3680 = vmatprep.subr.mxu0 0.0
        %3681 = vmatpush2.msra.mxu0 0.0
        %3682 = vmatprep.subr.mxu0 0.0
        %3683 = vmatpush2.msra.mxu0 0.0
        %3684 = vmatprep.subr.mxu0 0.0
        %3685 = vmatpush2.msra.mxu0 0.0
        %3686 = vmatprep.subr.mxu0 0.0
        %3687 = vmatpush2.msra.mxu0 0.0
        %3688 = vmatprep.subr.mxu0 0.0
        %3689 = vmatpush2.msra.mxu0 0.0
        %3690 = vmatprep.subr.mxu0 0.0
        %3691 = vmatpush2.msra.mxu0 0.0
        %3692 = vmatprep.subr.mxu0 0.0
        %3693 = vmatpush2.msra.mxu0 0.0
        %3694 = vmatprep.subr.mxu0 0.0
        %3695 = vmatpush2.msra.mxu0 0.0
        %3696 = vmatprep.subr.mxu0 0.0
        %3697 = vmatpush2.msra.mxu0 0.0
        %3698 = vmatprep.subr.mxu0 0.0
        %3699 = vmatpush2.msra.mxu0 0.0
        %3700 = vmatprep.subr.mxu0 0.0
        %3701 = vmatpush2.msra.mxu0 0.0
        %3702 = vmatprep.subr.mxu0 0.0
        %3703 = vmatpush2.msra.mxu0 0.0
        %3704 = vmatprep.subr.mxu0 0.0
        %3705 = vmatpush2.msra.mxu0 0.0
        %3706 = vmatprep.mubr.f32.mxu0 0.0
        %3707 = vmatmul.mubr.f32.gmra.mxu0 %v3638
        %v3708 = vpop.f32.mrf.mxu0
        %v3709 = vadd.f32 0.0, %v3708
        %v3710 = vpop.f32.mrf.mxu0
        %3711 = vmatprep.mubr.f32.mxu0 0.0
        %3712 = vmatmul.mubr.f32.gmra.mxu0 %v3639
        %v3713 = vpop.f32.mrf.mxu0
        %v3714 = vadd.f32 0.0, %v3713
        %v3715 = vpop.f32.mrf.mxu0
        %3716 = vmatprep.mubr.f32.mxu0 0.0
        %3717 = vmatmul.mubr.f32.gmra.mxu0 %v3640
        %v3718 = vpop.f32.mrf.mxu0
        %v3719 = vadd.f32 0.0, %v3718
        %v3720 = vpop.f32.mrf.mxu0
        %3721 = vmatprep.mubr.f32.mxu0 0.0
        %3722 = vmatmul.mubr.f32.gmra.mxu0 %v3641
        %v3723 = vpop.f32.mrf.mxu0
        %v3724 = vadd.f32 0.0, %v3723
        %v3725 = vpop.f32.mrf.mxu0
        %3726 = vdwg.mxu0
        %v3727 = vsub.f32 %v3638, %v3709
        %v3728 = vsub.f32 %v3639, %v3714
        %v3729 = vsub.f32 %v3640, %v3719
        %v3730 = vsub.f32 %v3641, %v3724
        %v3731 = vmul.f32 %v3727, %v3727
        %v3732 = vmul.f32 %v3728, %v3728
        %v3733 = vmul.f32 %v3729, %v3729
        %v3734 = vmul.f32 %v3730, %v3730
        %3735 = vmatprep.subr.mxu0 0.0
        %3736 = vmatpush1.msra.mxu0 %v2872
        %3737 = vmatprep.subr.mxu0 0.0
        %3738 = vmatpush1.msra.mxu0 %v2871
        %3739 = vmatprep.subr.mxu0 0.0
        %3740 = vmatpush1.msra.mxu0 %v2870
        %3741 = vmatprep.subr.mxu0 0.0
        %3742 = vmatpush1.msra.mxu0 %v2869
        %3743 = vmatprep.subr.mxu0 0.0
        %3744 = vmatpush1.msra.mxu0 %v2868
        %3745 = vmatprep.subr.mxu0 0.0
        %3746 = vmatpush1.msra.mxu0 %v2867
        %3747 = vmatprep.subr.mxu0 0.0
        %3748 = vmatpush1.msra.mxu0 %v2866
        %3749 = vmatprep.subr.mxu0 0.0
        %3750 = vmatpush1.msra.mxu0 %v2865
        %3751 = vmatprep.subr.mxu0 0.0
        %3752 = vmatpush1.msra.mxu0 %v2864
        %3753 = vmatprep.subr.mxu0 0.0
        %3754 = vmatpush1.msra.mxu0 %v2863
        %3755 = vmatprep.subr.mxu0 0.0
        %3756 = vmatpush1.msra.mxu0 %v2862
        %3757 = vmatprep.subr.mxu0 0.0
        %3758 = vmatpush1.msra.mxu0 %v2861
        %3759 = vmatprep.subr.mxu0 0.0
        %3760 = vmatpush1.msra.mxu0 %v2860
        %3761 = vmatprep.subr.mxu0 0.0
        %3762 = vmatpush1.msra.mxu0 %v2859
        %3763 = vmatprep.subr.mxu0 0.0
        %3764 = vmatpush1.msra.mxu0 %v2858
        %3765 = vmatprep.subr.mxu0 0.0
        %3766 = vmatpush1.msra.mxu0 %v2857
        %3767 = vmatprep.subr.mxu0 0.0
        %3768 = vmatpush2.msra.mxu0 0.0
        %3769 = vmatprep.subr.mxu0 0.0
        %3770 = vmatpush2.msra.mxu0 0.0
        %3771 = vmatprep.subr.mxu0 0.0
        %3772 = vmatpush2.msra.mxu0 0.0
        %3773 = vmatprep.subr.mxu0 0.0
        %3774 = vmatpush2.msra.mxu0 0.0
        %3775 = vmatprep.subr.mxu0 0.0
        %3776 = vmatpush2.msra.mxu0 0.0
        %3777 = vmatprep.subr.mxu0 0.0
        %3778 = vmatpush2.msra.mxu0 0.0
        %3779 = vmatprep.subr.mxu0 0.0
        %3780 = vmatpush2.msra.mxu0 0.0
        %3781 = vmatprep.subr.mxu0 0.0
        %3782 = vmatpush2.msra.mxu0 0.0
        %3783 = vmatprep.subr.mxu0 0.0
        %3784 = vmatpush2.msra.mxu0 0.0
        %3785 = vmatprep.subr.mxu0 0.0
        %3786 = vmatpush2.msra.mxu0 0.0
        %3787 = vmatprep.subr.mxu0 0.0
        %3788 = vmatpush2.msra.mxu0 0.0
        %3789 = vmatprep.subr.mxu0 0.0
        %3790 = vmatpush2.msra.mxu0 0.0
        %3791 = vmatprep.subr.mxu0 0.0
        %3792 = vmatpush2.msra.mxu0 0.0
        %3793 = vmatprep.subr.mxu0 0.0
        %3794 = vmatpush2.msra.mxu0 0.0
        %3795 = vmatprep.subr.mxu0 0.0
        %3796 = vmatpush2.msra.mxu0 0.0
        %3797 = vmatprep.subr.mxu0 0.0
        %3798 = vmatpush2.msra.mxu0 0.0
        %3799 = vmatprep.mubr.f32.mxu0 0.0
        %3800 = vmatmul.mubr.f32.gmra.mxu0 %v3731
        %v3801 = vpop.f32.mrf.mxu0
        %v3802 = vadd.f32 1e-05, %v3801
        %v3803 = vpop.f32.mrf.mxu0
        %3804 = vmatprep.mubr.f32.mxu0 0.0
        %3805 = vmatmul.mubr.f32.gmra.mxu0 %v3732
        %v3806 = vpop.f32.mrf.mxu0
        %v3807 = vadd.f32 1e-05, %v3806
        %v3808 = vpop.f32.mrf.mxu0
        %3809 = vmatprep.mubr.f32.mxu0 0.0
        %3810 = vmatmul.mubr.f32.gmra.mxu0 %v3733
        %v3811 = vpop.f32.mrf.mxu0
        %v3812 = vadd.f32 1e-05, %v3811
        %v3813 = vpop.f32.mrf.mxu0
        %3814 = vmatprep.mubr.f32.mxu0 0.0
        %3815 = vmatmul.mubr.f32.gmra.mxu0 %v3734
        %v3816 = vpop.f32.mrf.mxu0
        %v3817 = vadd.f32 1e-05, %v3816
        %v3818 = vpop.f32.mrf.mxu0
        %3819 = vdwg.mxu0
        %v3820 = vrsqrt.pop %v3802
        %v3821 = vrsqrt.pop %v3807
        %v3822 = vrsqrt.pop %v3812
        %v3823 = vrsqrt.pop %v3817
        %v3824 = vmul.f32 %v3727, %v3820
        %v3825 = vmul.f32 %v3728, %v3821
        %v3826 = vmul.f32 %v3729, %v3822
        %v3827 = vmul.f32 %v3730, %v3823
        %v3828 = vld [vmem:[#allocation10 + $0x1c] sm:$0x1]
        %v3830 = vlaneseq
        %v3831 = vshrl.u32 %v3830, 7
        %v3832 = vsub.s32 0, %v3831
        %v3833 = vrot.slane %v3828, %v3832
        %v3835 = vmul.f32 %v3824, %v3833
        %v3836 = vmul.f32 %v3825, %v3833
        %v3837 = vmul.f32 %v3826, %v3833
        %v3838 = vmul.f32 %v3827, %v3833
        %v3839 = vld [vmem:[#allocation10 + $0x1d] sm:$0x1]
        %v3841 = vlaneseq
        %v3842 = vshrl.u32 %v3841, 7
        %v3843 = vsub.s32 0, %v3842
        %v3844 = vrot.slane %v3839, %v3843
        %v3846 = vadd.f32 %v3835, %v3844
        %v3847 = vadd.f32 %v3836, %v3844
        %v3848 = vadd.f32 %v3837, %v3844
        %v3849 = vadd.f32 %v3838, %v3844
        %3850 = vst [vmem:[%s299] sm:$0xff] %v3846
        %3851 = vst [vmem:[%s299 + $0x8] sm:$0xff] %v3847
        %3852 = vst [vmem:[%s299 + $0x10] sm:$0xff] %v3848
        %3853 = vst [vmem:[%s299 + $0x18] sm:$0xff] %v3849
        %s3854 = sand.u32 %s142, 1
        %s3855 = scalar_lea.sflag [#allocation4], %s3854
        %s3856 = sand.u32 %s142, 1
        %s3857 = smul.addr %s3856, 32
        %s3858 = scalar_lea.vmem [#allocation11], %s3857
        // Predicated region
        $region61: #{tpu_custom_call.1} parent=39 // pred_check
          %p3859 = pneg %p152
        $region62: #{tpu_custom_call.1} parent=39 // pred_check_branch
          %3861 = sbr.rel (%p3859) target = $region64
        $region63: #{tpu_custom_call.1} parent=39 // pred_region
          %s3862 = smul.u32 4, %s24
          %s3864 = ssub.s32 512, 512
          %3865 = vsyncadd %s3855, %s3864
          %s3866 = smul.addr %s3862, 128
          %s3867 = scalar_lea.hbm %s5, %s3866
          %s3868 = sshll.u32 %s3858, 4
          %s3869 = int_to_ptr.vmem [resolvable:$true] %s3868
          %3874 = dma.vmem_to_hbm [thread:$0]  %s3869, 512, %s3867, %s3855, 128, 128, 8
        $region64: #{tpu_custom_call.1} parent=39 // pred_fallthru
          _
      $region40: #{tpu_custom_call.1} parent=5 // pred_fallthru
        _
      %p3875 = scmp.le.s32.totalorder 2, %s19
      // Predicated region
      $region65: #{tpu_custom_call.1} parent=5 // pred_check
        %p3876 = pneg %p3875
      $region66: #{tpu_custom_call.1} parent=5 // pred_check_branch
        %3878 = sbr.rel (%p3876) target = $region68
      $region67: #{tpu_custom_call.1} parent=5 // pred_region
        %s3879 = ssub.s32 %s19, 2
        // Predicated region
        $region69: #{tpu_custom_call.1} parent=67 // pred_check
          %p3880 = pneg %p158
        $region70: #{tpu_custom_call.1} parent=67 // pred_check_branch
          %3882 = sbr.rel (%p3880) target = $region72
        $region71: #{tpu_custom_call.1} parent=67 // pred_region
          %s3883 = sand.u32 %s143, 1
          %s3884 = scalar_lea.sflag [#allocation4], %s3883
          %s3885 = sand.u32 %s143, 1
          %s3886 = smul.addr %s3885, 32
          %s3887 = scalar_lea.vmem [#allocation11], %s3886
          %3888 = dma.done %s3884, 512
        $region72: #{tpu_custom_call.1} parent=67 // pred_fallthru
          _
      $region68: #{tpu_custom_call.1} parent=5 // pred_fallthru
        _
    $region6: #{tpu_custom_call.1} parent=1 // loop_footer
      %s23 = sadd.s32 1, %s19
    $region7: #{tpu_custom_call.1} parent=1 // loop_footer_branch
      %18 = sbr.rel target = $region3
    $region8: #{tpu_custom_call.1} parent=1 // loop_exit
      _
    %3889 = vsyncpa [#allocation3], 1
    %s3890 = scalar_lea.sflag [#allocation3], 1
    %3891 = vsyncpa %s3890, 1
    %3892 = vsyncpa [#allocation6], 1
    %3893 = vsyncpa [#allocation9], 1
    %3894 = vsyncpa [#allocation4], 1
    %s3895 = scalar_lea.sflag [#allocation4], 1
    %3896 = vsyncpa %s3895, 1

</llo_original>
